<compile_context>
chip_gen: v7x
topology: tpu7x:2x2x1
jax: 0.10.0
libtpu: 0.0.40
codegen_flags: <defaults>
</compile_context>

<pallas_src>
import functools

import jax
import jax.numpy as jnp
from jax import lax
from jax.experimental import pallas as pl
from jax.experimental.pallas import tpu as pltpu


# tap order shared by the mask builder, the weight packer and the kernel
_TAPS = [(dy, dx) for dy in (-1, 0, 1) for dx in (-1, 0, 1)]
_R = 16          # rows per tap inside the staging buffer / im2col matrix


# ------------------------------ Pallas kernel ------------------------------ #

def _upblock_kernel(x1_ref, x2_ref, wupT_ref, bup_ref, kronT_ref, mask_ref,
                    w1_ref, b1_ref, w2_ref, b2_ref,
                    o_ref, xbuf_ref, patch_ref, *, Wo, L, OFF, Chalf, R):
    # xbuf_ref : (R, L + 2*OFF)  staging buffer, image lives at lanes [OFF, OFF+L)
    # patch_ref: (9*R, L)        im2col matrix for the 3x3 convs
    # Zero the staging buffer once per invocation: margins / unused rows must be
    # finite zeros (they are read by the shifted loads and killed by the masks).
    xbuf_ref[...] = jnp.zeros_like(xbuf_ref)

    masks = mask_ref[...]                                        # (9, L)

    # ---- bilinear 2x upsample (align_corners=True) + 1x1 conv + LeakyReLU --- #
    # up[co, i] = lrelu( sum_ci w_up[ci,co] * sum_j kron(Uh,Uw)[i,j]*x1[ci,j] + b )
    mix = jnp.dot(wupT_ref[...], x1_ref[0],
                  preferred_element_type=jnp.float32)            # (Chalf, H*W)
    up = jnp.dot(mix, kronT_ref[...],
                 preferred_element_type=jnp.float32) + bup_ref[...]   # (Chalf, L)
    up = jnp.where(up >= 0, up, 0.1 * up)

    # ---- "channel concat": place both halves into the staging buffer -------- #
    # rows [0, Chalf)      : upsampled / 1x1-conv branch
    # rows [8, 8 + Chalf)  : skip connection x2
    xbuf_ref[pl.ds(0, Chalf), pl.ds(OFF, L)] = up
    xbuf_ref[pl.ds(8, Chalf), pl.ds(OFF, L)] = x2_ref[0]

    def conv3x3(w_ref, b_ref):
        # Build the im2col matrix: one (R, L) slab per tap, shifted in the flat
        # pixel index by dy*Wo + dx and masked where the neighbour is outside
        # the image (this reproduces the zero padding of Conv2d(padding=1)).
        for t, (dy, dx) in enumerate(_TAPS):
            s = dy * Wo + dx
            slab = xbuf_ref[pl.ds(0, R), pl.ds(OFF + s, L)]      # (R, L)
            patch_ref[pl.ds(t * R, R), :] = slab * masks[t:t + 1, :]
        # One GEMM per conv: (Cout, 9*R) x (9*R, L); unused weight columns are 0.
        y = jnp.dot(w_ref[...], patch_ref[...],
                    preferred_element_type=jnp.float32) + b_ref[...]  # (Cout, L)
        return jnp.where(y >= 0, y, 0.1 * y)

    h1 = conv3x3(w1_ref, b1_ref)                                 # (Cout, L)
    cout = h1.shape[0]
    xbuf_ref[pl.ds(0, cout), pl.ds(OFF, L)] = h1                 # input of conv #2
    o_ref[0] = conv3x3(w2_ref, b2_ref)                           # lane-dense store


# ------------------------------ host helpers ------------------------------- #

def _interp_matrix(n_in, n_out):
    """Row-interpolation matrix for bilinear upsample with align_corners=True."""
    if n_in == 1:
        return jnp.ones((n_out, 1), jnp.float32)
    scale = (n_in - 1) / (n_out - 1)
    src = jnp.arange(n_out, dtype=jnp.float32) * jnp.float32(scale)
    i0 = jnp.clip(jnp.floor(src).astype(jnp.int32), 0, n_in - 1)
    i1 = jnp.clip(i0 + 1, 0, n_in - 1)
    frac = src - i0.astype(jnp.float32)
    rows = jnp.arange(n_out)
    m = jnp.zeros((n_out, n_in), jnp.float32)
    m = m.at[rows, i0].add(1.0 - frac)
    m = m.at[rows, i1].add(frac)
    return m


def _tap_masks(Ho, Wo):
    """(9, Ho*Wo) 0/1 masks: 1 where the tap's neighbour pixel is in-bounds."""
    yy = jnp.arange(Ho)[:, None]
    xx = jnp.arange(Wo)[None, :]
    rows = []
    for dy, dx in _TAPS:
        ok = ((yy + dy >= 0) & (yy + dy < Ho) &
              (xx + dx >= 0) & (xx + dx < Wo))
        rows.append(ok.reshape(-1))
    return jnp.stack(rows).astype(jnp.float32)


def _pack_conv_weight(w_hwio, row_map, R):
    """(3,3,Cin,Cout) HWIO -> (Cout, 9*R) matching the staging-buffer rows."""
    kh, kw, cin, cout = w_hwio.shape
    wt = jnp.transpose(w_hwio, (3, 0, 1, 2)).reshape(cout, kh * kw, cin)
    packed = jnp.zeros((cout, kh * kw, R), jnp.float32)
    packed = packed.at[:, :, jnp.asarray(row_map)].set(wt)
    return packed.reshape(cout, kh * kw * R)


# -------------------------------- upblock ----------------------------------- #

def init_params(key, in_ch, out_ch):
    ks = jax.random.split(key, 6)
    half = in_ch // 2
    s = 0.1
    return {
        "w_up": s * jax.random.normal(ks[0], (in_ch, half), jnp.float32),   # 1x1 conv
        "b_up": s * jax.random.normal(ks[1], (half,), jnp.float32),
        "w_c1": s * jax.random.normal(ks[2], (3, 3, in_ch, out_ch), jnp.float32),
        "b_c1": s * jax.random.normal(ks[3], (out_ch,), jnp.float32),
        "w_c2": s * jax.random.normal(ks[4], (3, 3, out_ch, out_ch), jnp.float32),
        "b_c2": s * jax.random.normal(ks[5], (out_ch,), jnp.float32),
    }


def upblock_forward(x1_nchw, x2_nchw, params):
    """upblock.forward(x1, x2): NCHW in / NCHW out, single fused Pallas kernel."""
    N, Cin, H, W = x1_nchw.shape
    Chalf = Cin // 2
    Ho, Wo = 2 * H, 2 * W
    L = Ho * Wo
    Cout = params["w_c1"].shape[-1]
    R = _R
    assert Chalf <= 8 and Cout <= 8, "staging-row layout assumes <=8 channels/group"

    # free metadata reshapes (NCHW is already channel-major / pixel-minor)
    x1f = x1_nchw.reshape(N, Cin, H * W)
    x2f = x2_nchw.reshape(N, Chalf, L)

    # per-call constants (tiny host-side prep)
    Uh = _interp_matrix(H, Ho)                       # (Ho, H)
    Uw = _interp_matrix(W, Wo)                       # (Wo, W)
    kronT = jnp.kron(Uh, Uw).T                       # (H*W, L)
    masks = _tap_masks(Ho, Wo)                       # (9, L)

    wupT = params["w_up"].T                          # (Chalf, Cin)
    bup = params["b_up"].reshape(Chalf, 1)
    row_map1 = list(range(Chalf)) + [8 + i for i in range(Chalf)]   # concat layout
    row_map2 = list(range(Cout))
    w1m = _pack_conv_weight(params["w_c1"], row_map1, R)            # (Cout, 9*R)
    b1 = params["b_c1"].reshape(Cout, 1)
    w2m = _pack_conv_weight(params["w_c2"], row_map2, R)            # (Cout, 9*R)
    b2 = params["b_c2"].reshape(Cout, 1)

    OFF = ((Wo + 1 + 127) // 128) * 128              # lane-aligned left margin
    xbuf_width = L + 2 * OFF

    kernel = functools.partial(_upblock_kernel, Wo=Wo, L=L, OFF=OFF,
                               Chalf=Chalf, R=R)

    out = pl.pallas_call(
        kernel,
        out_shape=jax.ShapeDtypeStruct((N, Cout, L), jnp.float32),
        grid=(N,),
        in_specs=[
            pl.BlockSpec((1, Cin, H * W), lambda n: (n, 0, 0)),
            pl.BlockSpec((1, Chalf, L), lambda n: (n, 0, 0)),
            pl.BlockSpec((Chalf, Cin), lambda n: (0, 0)),
            pl.BlockSpec((Chalf, 1), lambda n: (0, 0)),
            pl.BlockSpec((H * W, L), lambda n: (0, 0)),
            pl.BlockSpec((9, L), lambda n: (0, 0)),
            pl.BlockSpec((Cout, 9 * R), lambda n: (0, 0)),
            pl.BlockSpec((Cout, 1), lambda n: (0, 0)),
            pl.BlockSpec((Cout, 9 * R), lambda n: (0, 0)),
            pl.BlockSpec((Cout, 1), lambda n: (0, 0)),
        ],
        out_specs=pl.BlockSpec((1, Cout, L), lambda n: (n, 0, 0)),
        scratch_shapes=[
            pltpu.VMEM((R, xbuf_width), jnp.float32),     # shifted-read staging
            pltpu.VMEM((9 * R, L), jnp.float32),          # im2col matrix
        ],
        compiler_params=pltpu.CompilerParams(
            dimension_semantics=("parallel",)),
    )(x1f, x2f, wupT, bup, kronT, masks, w1m, b1, w2m, b2)

    return out.reshape(N, Cout, Ho, Wo)                   # free reshape -> NCHW


# --------------------------- pure-JAX reference ----------------------------- #

def _ref_forward(x1_nchw, x2_nchw, params):
    hi = lax.Precision.HIGHEST
    x1 = jnp.transpose(x1_nchw, (0, 2, 3, 1))
    x2 = jnp.transpose(x2_nchw, (0, 2, 3, 1))
    N, H, W, C = x1.shape
    Uh = _interp_matrix(H, 2 * H)
    Uw = _interp_matrix(W, 2 * W)
    u = jnp.einsum("ph,nhwc->npwc", Uh, x1, precision=hi)
    u = jnp.einsum("qw,npwc->npqc", Uw, u, precision=hi)
    y = jnp.einsum("npqc,cd->npqd", u, params["w_up"], precision=hi) + params["b_up"]
    y = jnp.where(y >= 0, y, 0.1 * y)
    x = jnp.concatenate([y, x2], axis=-1)

    def conv(x, w, b):
        z = lax.conv_general_dilated(
            x, w, (1, 1), [(1, 1), (1, 1)],
            dimension_numbers=("NHWC", "HWIO", "NHWC"), precision=hi) + b
        return jnp.where(z >= 0, z, 0.1 * z)

    x = conv(x, params["w_c1"], params["b_c1"])
    x = conv(x, params["w_c2"], params["b_c2"])
    return jnp.transpose(x, (0, 3, 1, 2))


# ---------------------------------- main ------------------------------------ #

if __name__ == "__main__":
    key = jax.random.PRNGKey(0)
    k_x1, k_x2, k_p = jax.random.split(key, 3)

    N, in_ch, out_ch, H, W = 2, 4, 4, 16, 16
    x1 = jax.random.normal(k_x1, (N, in_ch, H, W), jnp.float32)               # low-res
    x2 = jax.random.normal(k_x2, (N, in_ch // 2, 2 * H, 2 * W), jnp.float32)  # skip
    params = init_params(k_p, in_ch, out_ch)

    out = jax.block_until_ready(upblock_forward(x1, x2, params))
    assert out.shape == (N, out_ch, 2 * H, 2 * W), out.shape

    ref = jax.block_until_ready(_ref_forward(x1, x2, params))
    err = float(jnp.max(jnp.abs(out - ref)))
    assert err < 2e-3, f"max abs err {err}"

    print("KERNEL_OK")
</pallas_src>

<mosaic_0001>
module attributes {stable_mosaic.version = 11 : i64} {
  func.func @_upblock_kernel(%arg0: i32, %arg1: memref<1x4x256xf32, #tpu.memory_space<vmem>>, %arg2: memref<1x2x1024xf32, #tpu.memory_space<vmem>>, %arg3: memref<2x4xf32, #tpu.memory_space<vmem>>, %arg4: memref<2x1xf32, #tpu.memory_space<vmem>>, %arg5: memref<256x1024xf32, #tpu.memory_space<vmem>>, %arg6: memref<9x1024xf32, #tpu.memory_space<vmem>>, %arg7: memref<4x144xf32, #tpu.memory_space<vmem>>, %arg8: memref<4x1xf32, #tpu.memory_space<vmem>>, %arg9: memref<4x144xf32, #tpu.memory_space<vmem>>, %arg10: memref<4x1xf32, #tpu.memory_space<vmem>>, %arg11: memref<1x4x1024xf32, #tpu.memory_space<vmem>>, %arg12: memref<16x1280xf32, #tpu.memory_space<vmem>>, %arg13: memref<144x1024xf32, #tpu.memory_space<vmem>>) attributes {dimension_semantics = [#tpu.dimension_semantics<parallel>], iteration_bounds = array<i64: 2>, scalar_prefetch = 0 : i64, scratch_operands = 2 : i64, tpu.core_type = #tpu.core_type<tc>, window_params = [{transform_indices = @transform_0, window_bounds = array<i64: 1, 4, 256>}, {transform_indices = @transform_1, window_bounds = array<i64: 1, 2, 1024>}, {pipeline_mode = #tpu.pipeline_mode<synchronous>, transform_indices = @transform_2, window_bounds = array<i64: 2, 4>}, {pipeline_mode = #tpu.pipeline_mode<synchronous>, transform_indices = @transform_3, window_bounds = array<i64: 2, 1>}, {pipeline_mode = #tpu.pipeline_mode<synchronous>, transform_indices = @transform_4, window_bounds = array<i64: 256, 1024>}, {pipeline_mode = #tpu.pipeline_mode<synchronous>, transform_indices = @transform_5, window_bounds = array<i64: 9, 1024>}, {pipeline_mode = #tpu.pipeline_mode<synchronous>, transform_indices = @transform_6, window_bounds = array<i64: 4, 144>}, {pipeline_mode = #tpu.pipeline_mode<synchronous>, transform_indices = @transform_7, window_bounds = array<i64: 4, 1>}, {pipeline_mode = #tpu.pipeline_mode<synchronous>, transform_indices = @transform_8, window_bounds = array<i64: 4, 144>}, {pipeline_mode = #tpu.pipeline_mode<synchronous>, transform_indices = @transform_9, window_bounds = array<i64: 4, 1>}, {transform_indices = @transform_10, window_bounds = array<i64: 1, 4, 1024>}]} {
    %cst = arith.constant 0.000000e+00 : f32
    %0 = vector.broadcast %cst : f32 to vector<16x1280xf32>
    %c0 = arith.constant 0 : index
    %c0_0 = arith.constant 0 : index
    %1 = vector.load %arg12[%c0, %c0_0] : memref<16x1280xf32, #tpu.memory_space<vmem>>, vector<16x1280xf32>
    tpu.vector_store %arg12[%c0, %c0_0], %0 {strides = array<i32>} : memref<16x1280xf32, #tpu.memory_space<vmem>>, vector<16x1280xf32>,
    %c0_1 = arith.constant 0 : index
    %c0_2 = arith.constant 0 : index
    %2 = vector.load %arg6[%c0_1, %c0_2] : memref<9x1024xf32, #tpu.memory_space<vmem>>, vector<9x1024xf32>
    %c0_3 = arith.constant 0 : index
    %c0_4 = arith.constant 0 : index
    %3 = vector.load %arg3[%c0_3, %c0_4] : memref<2x4xf32, #tpu.memory_space<vmem>>, vector<2x4xf32>
    %c0_5 = arith.constant 0 : index
    %c0_6 = arith.constant 0 : index
    %c0_7 = arith.constant 0 : index
    %4 = vector.load %arg1[%c0_5, %c0_6, %c0_7] : memref<1x4x256xf32, #tpu.memory_space<vmem>>, vector<1x4x256xf32>
    %5 = vector.shape_cast %4 : vector<1x4x256xf32> to vector<4x256xf32>
    %cst_8 = arith.constant dense<0.000000e+00> : vector<2x256xf32>
    %6 = tpu.matmul %3, %5, %cst_8 {dimension_numbers = #tpu.dot_dimension_numbers<[1], [0], [0], [1], [0, 0, 1, 1], [], []>} : vector<2x4xf32>, vector<4x256xf32>, vector<2x256xf32> -> vector<2x256xf32>
    %c0_9 = arith.constant 0 : index
    %c0_10 = arith.constant 0 : index
    %7 = vector.load %arg5[%c0_9, %c0_10] : memref<256x1024xf32, #tpu.memory_space<vmem>>, vector<256x1024xf32>
    %cst_11 = arith.constant dense<0.000000e+00> : vector<2x1024xf32>
    %8 = tpu.matmul %6, %7, %cst_11 {dimension_numbers = #tpu.dot_dimension_numbers<[1], [0], [0], [1], [0, 0, 1, 1], [], []>} : vector<2x256xf32>, vector<256x1024xf32>, vector<2x1024xf32> -> vector<2x1024xf32>
    %c0_12 = arith.constant 0 : index
    %c0_13 = arith.constant 0 : index
    %9 = vector.load %arg4[%c0_12, %c0_13] : memref<2x1xf32, #tpu.memory_space<vmem>>, vector<2x1xf32>
    %10 = vector.broadcast %9 : vector<2x1xf32> to vector<2x1024xf32>
    %11 = arith.addf %8, %10 : vector<2x1024xf32>
    %cst_14 = arith.constant 0.000000e+00 : f32
    %12 = vector.broadcast %cst_14 : f32 to vector<2x1024xf32>
    %13 = arith.cmpf oge, %11, %12 : vector<2x1024xf32>
    %cst_15 = arith.constant 1.000000e-01 : f32
    %14 = vector.broadcast %cst_15 : f32 to vector<2x1024xf32>
    %15 = arith.mulf %14, %11 : vector<2x1024xf32>
    %16 = arith.select %13, %11, %15 : vector<2x1024xi1>, vector<2x1024xf32>
    %c0_16 = arith.constant 0 : index
    %c128 = arith.constant 128 : index
    %17 = vector.load %arg12[%c0_16, %c128] : memref<16x1280xf32, #tpu.memory_space<vmem>>, vector<2x1024xf32>
    tpu.vector_store %arg12[%c0_16, %c128], %16 {strides = array<i32>} : memref<16x1280xf32, #tpu.memory_space<vmem>>, vector<2x1024xf32>,
    %c0_17 = arith.constant 0 : index
    %c0_18 = arith.constant 0 : index
    %c0_19 = arith.constant 0 : index
    %18 = vector.load %arg2[%c0_17, %c0_18, %c0_19] : memref<1x2x1024xf32, #tpu.memory_space<vmem>>, vector<1x2x1024xf32>
    %19 = vector.shape_cast %18 : vector<1x2x1024xf32> to vector<2x1024xf32>
    %c8 = arith.constant 8 : index
    %c128_20 = arith.constant 128 : index
    %20 = vector.load %arg12[%c8, %c128_20] : memref<16x1280xf32, #tpu.memory_space<vmem>>, vector<2x1024xf32>
    tpu.vector_store %arg12[%c8, %c128_20], %19 {strides = array<i32>} : memref<16x1280xf32, #tpu.memory_space<vmem>>, vector<2x1024xf32>,
    %c0_21 = arith.constant 0 : index
    %c95 = arith.constant 95 : index
    %21 = vector.load %arg12[%c0_21, %c95] : memref<16x1280xf32, #tpu.memory_space<vmem>>, vector<16x1024xf32>
    %22 = vector.extract_strided_slice %2 {offsets = [0, 0], sizes = [1, 1024], strides = [1, 1]} : vector<9x1024xf32> to vector<1x1024xf32>
    %23 = vector.broadcast %22 : vector<1x1024xf32> to vector<16x1024xf32>
    %24 = arith.mulf %21, %23 : vector<16x1024xf32>
    %c0_22 = arith.constant 0 : index
    %c0_23 = arith.constant 0 : index
    %25 = vector.load %arg13[%c0_22, %c0_23] : memref<144x1024xf32, #tpu.memory_space<vmem>>, vector<16x1024xf32>
    tpu.vector_store %arg13[%c0_22, %c0_23], %24 {strides = array<i32>} : memref<144x1024xf32, #tpu.memory_space<vmem>>, vector<16x1024xf32>,
    %c0_24 = arith.constant 0 : index
    %c96 = arith.constant 96 : index
    %26 = vector.load %arg12[%c0_24, %c96] : memref<16x1280xf32, #tpu.memory_space<vmem>>, vector<16x1024xf32>
    %27 = vector.extract_strided_slice %2 {offsets = [1, 0], sizes = [1, 1024], strides = [1, 1]} : vector<9x1024xf32> to vector<1x1024xf32>
    %28 = vector.broadcast %27 : vector<1x1024xf32> to vector<16x1024xf32>
    %29 = arith.mulf %26, %28 : vector<16x1024xf32>
    %c16 = arith.constant 16 : index
    %c0_25 = arith.constant 0 : index
    %30 = vector.load %arg13[%c16, %c0_25] : memref<144x1024xf32, #tpu.memory_space<vmem>>, vector<16x1024xf32>
    tpu.vector_store %arg13[%c16, %c0_25], %29 {strides = array<i32>} : memref<144x1024xf32, #tpu.memory_space<vmem>>, vector<16x1024xf32>,
    %c0_26 = arith.constant 0 : index
    %c97 = arith.constant 97 : index
    %31 = vector.load %arg12[%c0_26, %c97] : memref<16x1280xf32, #tpu.memory_space<vmem>>, vector<16x1024xf32>
    %32 = vector.extract_strided_slice %2 {offsets = [2, 0], sizes = [1, 1024], strides = [1, 1]} : vector<9x1024xf32> to vector<1x1024xf32>
    %33 = vector.broadcast %32 : vector<1x1024xf32> to vector<16x1024xf32>
    %34 = arith.mulf %31, %33 : vector<16x1024xf32>
    %c32 = arith.constant 32 : index
    %c0_27 = arith.constant 0 : index
    %35 = vector.load %arg13[%c32, %c0_27] : memref<144x1024xf32, #tpu.memory_space<vmem>>, vector<16x1024xf32>
    tpu.vector_store %arg13[%c32, %c0_27], %34 {strides = array<i32>} : memref<144x1024xf32, #tpu.memory_space<vmem>>, vector<16x1024xf32>,
    %c0_28 = arith.constant 0 : index
    %c127 = arith.constant 127 : index
    %36 = vector.load %arg12[%c0_28, %c127] : memref<16x1280xf32, #tpu.memory_space<vmem>>, vector<16x1024xf32>
    %37 = vector.extract_strided_slice %2 {offsets = [3, 0], sizes = [1, 1024], strides = [1, 1]} : vector<9x1024xf32> to vector<1x1024xf32>
    %38 = vector.broadcast %37 : vector<1x1024xf32> to vector<16x1024xf32>
    %39 = arith.mulf %36, %38 : vector<16x1024xf32>
    %c48 = arith.constant 48 : index
    %c0_29 = arith.constant 0 : index
    %40 = vector.load %arg13[%c48, %c0_29] : memref<144x1024xf32, #tpu.memory_space<vmem>>, vector<16x1024xf32>
    tpu.vector_store %arg13[%c48, %c0_29], %39 {strides = array<i32>} : memref<144x1024xf32, #tpu.memory_space<vmem>>, vector<16x1024xf32>,
    %c0_30 = arith.constant 0 : index
    %c128_31 = arith.constant 128 : index
    %41 = vector.load %arg12[%c0_30, %c128_31] : memref<16x1280xf32, #tpu.memory_space<vmem>>, vector<16x1024xf32>
    %42 = vector.extract_strided_slice %2 {offsets = [4, 0], sizes = [1, 1024], strides = [1, 1]} : vector<9x1024xf32> to vector<1x1024xf32>
    %43 = vector.broadcast %42 : vector<1x1024xf32> to vector<16x1024xf32>
    %44 = arith.mulf %41, %43 : vector<16x1024xf32>
    %c64 = arith.constant 64 : index
    %c0_32 = arith.constant 0 : index
    %45 = vector.load %arg13[%c64, %c0_32] : memref<144x1024xf32, #tpu.memory_space<vmem>>, vector<16x1024xf32>
    tpu.vector_store %arg13[%c64, %c0_32], %44 {strides = array<i32>} : memref<144x1024xf32, #tpu.memory_space<vmem>>, vector<16x1024xf32>,
    %c0_33 = arith.constant 0 : index
    %c129 = arith.constant 129 : index
    %46 = vector.load %arg12[%c0_33, %c129] : memref<16x1280xf32, #tpu.memory_space<vmem>>, vector<16x1024xf32>
    %47 = vector.extract_strided_slice %2 {offsets = [5, 0], sizes = [1, 1024], strides = [1, 1]} : vector<9x1024xf32> to vector<1x1024xf32>
    %48 = vector.broadcast %47 : vector<1x1024xf32> to vector<16x1024xf32>
    %49 = arith.mulf %46, %48 : vector<16x1024xf32>
    %c80 = arith.constant 80 : index
    %c0_34 = arith.constant 0 : index
    %50 = vector.load %arg13[%c80, %c0_34] : memref<144x1024xf32, #tpu.memory_space<vmem>>, vector<16x1024xf32>
    tpu.vector_store %arg13[%c80, %c0_34], %49 {strides = array<i32>} : memref<144x1024xf32, #tpu.memory_space<vmem>>, vector<16x1024xf32>,
    %c0_35 = arith.constant 0 : index
    %c159 = arith.constant 159 : index
    %51 = vector.load %arg12[%c0_35, %c159] : memref<16x1280xf32, #tpu.memory_space<vmem>>, vector<16x1024xf32>
    %52 = vector.extract_strided_slice %2 {offsets = [6, 0], sizes = [1, 1024], strides = [1, 1]} : vector<9x1024xf32> to vector<1x1024xf32>
    %53 = vector.broadcast %52 : vector<1x1024xf32> to vector<16x1024xf32>
    %54 = arith.mulf %51, %53 : vector<16x1024xf32>
    %c96_36 = arith.constant 96 : index
    %c0_37 = arith.constant 0 : index
    %55 = vector.load %arg13[%c96_36, %c0_37] : memref<144x1024xf32, #tpu.memory_space<vmem>>, vector<16x1024xf32>
    tpu.vector_store %arg13[%c96_36, %c0_37], %54 {strides = array<i32>} : memref<144x1024xf32, #tpu.memory_space<vmem>>, vector<16x1024xf32>,
    %c0_38 = arith.constant 0 : index
    %c160 = arith.constant 160 : index
    %56 = vector.load %arg12[%c0_38, %c160] : memref<16x1280xf32, #tpu.memory_space<vmem>>, vector<16x1024xf32>
    %57 = vector.extract_strided_slice %2 {offsets = [7, 0], sizes = [1, 1024], strides = [1, 1]} : vector<9x1024xf32> to vector<1x1024xf32>
    %58 = vector.broadcast %57 : vector<1x1024xf32> to vector<16x1024xf32>
    %59 = arith.mulf %56, %58 : vector<16x1024xf32>
    %c112 = arith.constant 112 : index
    %c0_39 = arith.constant 0 : index
    %60 = vector.load %arg13[%c112, %c0_39] : memref<144x1024xf32, #tpu.memory_space<vmem>>, vector<16x1024xf32>
    tpu.vector_store %arg13[%c112, %c0_39], %59 {strides = array<i32>} : memref<144x1024xf32, #tpu.memory_space<vmem>>, vector<16x1024xf32>,
    %c0_40 = arith.constant 0 : index
    %c161 = arith.constant 161 : index
    %61 = vector.load %arg12[%c0_40, %c161] : memref<16x1280xf32, #tpu.memory_space<vmem>>, vector<16x1024xf32>
    %62 = vector.extract_strided_slice %2 {offsets = [8, 0], sizes = [1, 1024], strides = [1, 1]} : vector<9x1024xf32> to vector<1x1024xf32>
    %63 = vector.broadcast %62 : vector<1x1024xf32> to vector<16x1024xf32>
    %64 = arith.mulf %61, %63 : vector<16x1024xf32>
    %c128_41 = arith.constant 128 : index
    %c0_42 = arith.constant 0 : index
    %65 = vector.load %arg13[%c128_41, %c0_42] : memref<144x1024xf32, #tpu.memory_space<vmem>>, vector<16x1024xf32>
    tpu.vector_store %arg13[%c128_41, %c0_42], %64 {strides = array<i32>} : memref<144x1024xf32, #tpu.memory_space<vmem>>, vector<16x1024xf32>,
    %c0_43 = arith.constant 0 : index
    %c0_44 = arith.constant 0 : index
    %66 = vector.load %arg7[%c0_43, %c0_44] : memref<4x144xf32, #tpu.memory_space<vmem>>, vector<4x144xf32>
    %c0_45 = arith.constant 0 : index
    %c0_46 = arith.constant 0 : index
    %67 = vector.load %arg13[%c0_45, %c0_46] : memref<144x1024xf32, #tpu.memory_space<vmem>>, vector<144x1024xf32>
    %cst_47 = arith.constant dense<0.000000e+00> : vector<4x1024xf32>
    %68 = tpu.matmul %66, %67, %cst_47 {dimension_numbers = #tpu.dot_dimension_numbers<[1], [0], [0], [1], [0, 0, 1, 1], [], []>} : vector<4x144xf32>, vector<144x1024xf32>, vector<4x1024xf32> -> vector<4x1024xf32>
    %c0_48 = arith.constant 0 : index
    %c0_49 = arith.constant 0 : index
    %69 = vector.load %arg8[%c0_48, %c0_49] : memref<4x1xf32, #tpu.memory_space<vmem>>, vector<4x1xf32>
    %70 = vector.broadcast %69 : vector<4x1xf32> to vector<4x1024xf32>
    %71 = arith.addf %68, %70 : vector<4x1024xf32>
    %cst_50 = arith.constant 0.000000e+00 : f32
    %72 = vector.broadcast %cst_50 : f32 to vector<4x1024xf32>
    %73 = arith.cmpf oge, %71, %72 : vector<4x1024xf32>
    %cst_51 = arith.constant 1.000000e-01 : f32
    %74 = vector.broadcast %cst_51 : f32 to vector<4x1024xf32>
    %75 = arith.mulf %74, %71 : vector<4x1024xf32>
    %76 = arith.select %73, %71, %75 : vector<4x1024xi1>, vector<4x1024xf32>
    %c0_52 = arith.constant 0 : index
    %c128_53 = arith.constant 128 : index
    %77 = vector.load %arg12[%c0_52, %c128_53] : memref<16x1280xf32, #tpu.memory_space<vmem>>, vector<4x1024xf32>
    tpu.vector_store %arg12[%c0_52, %c128_53], %76 {strides = array<i32>} : memref<16x1280xf32, #tpu.memory_space<vmem>>, vector<4x1024xf32>,
    %c0_54 = arith.constant 0 : index
    %c95_55 = arith.constant 95 : index
    %78 = vector.load %arg12[%c0_54, %c95_55] : memref<16x1280xf32, #tpu.memory_space<vmem>>, vector<16x1024xf32>
    %79 = vector.extract_strided_slice %2 {offsets = [0, 0], sizes = [1, 1024], strides = [1, 1]} : vector<9x1024xf32> to vector<1x1024xf32>
    %80 = vector.broadcast %79 : vector<1x1024xf32> to vector<16x1024xf32>
    %81 = arith.mulf %78, %80 : vector<16x1024xf32>
    %c0_56 = arith.constant 0 : index
    %c0_57 = arith.constant 0 : index
    %82 = vector.load %arg13[%c0_56, %c0_57] : memref<144x1024xf32, #tpu.memory_space<vmem>>, vector<16x1024xf32>
    tpu.vector_store %arg13[%c0_56, %c0_57], %81 {strides = array<i32>} : memref<144x1024xf32, #tpu.memory_space<vmem>>, vector<16x1024xf32>,
    %c0_58 = arith.constant 0 : index
    %c96_59 = arith.constant 96 : index
    %83 = vector.load %arg12[%c0_58, %c96_59] : memref<16x1280xf32, #tpu.memory_space<vmem>>, vector<16x1024xf32>
    %84 = vector.extract_strided_slice %2 {offsets = [1, 0], sizes = [1, 1024], strides = [1, 1]} : vector<9x1024xf32> to vector<1x1024xf32>
    %85 = vector.broadcast %84 : vector<1x1024xf32> to vector<16x1024xf32>
    %86 = arith.mulf %83, %85 : vector<16x1024xf32>
    %c16_60 = arith.constant 16 : index
    %c0_61 = arith.constant 0 : index
    %87 = vector.load %arg13[%c16_60, %c0_61] : memref<144x1024xf32, #tpu.memory_space<vmem>>, vector<16x1024xf32>
    tpu.vector_store %arg13[%c16_60, %c0_61], %86 {strides = array<i32>} : memref<144x1024xf32, #tpu.memory_space<vmem>>, vector<16x1024xf32>,
    %c0_62 = arith.constant 0 : index
    %c97_63 = arith.constant 97 : index
    %88 = vector.load %arg12[%c0_62, %c97_63] : memref<16x1280xf32, #tpu.memory_space<vmem>>, vector<16x1024xf32>
    %89 = vector.extract_strided_slice %2 {offsets = [2, 0], sizes = [1, 1024], strides = [1, 1]} : vector<9x1024xf32> to vector<1x1024xf32>
    %90 = vector.broadcast %89 : vector<1x1024xf32> to vector<16x1024xf32>
    %91 = arith.mulf %88, %90 : vector<16x1024xf32>
    %c32_64 = arith.constant 32 : index
    %c0_65 = arith.constant 0 : index
    %92 = vector.load %arg13[%c32_64, %c0_65] : memref<144x1024xf32, #tpu.memory_space<vmem>>, vector<16x1024xf32>
    tpu.vector_store %arg13[%c32_64, %c0_65], %91 {strides = array<i32>} : memref<144x1024xf32, #tpu.memory_space<vmem>>, vector<16x1024xf32>,
    %c0_66 = arith.constant 0 : index
    %c127_67 = arith.constant 127 : index
    %93 = vector.load %arg12[%c0_66, %c127_67] : memref<16x1280xf32, #tpu.memory_space<vmem>>, vector<16x1024xf32>
    %94 = vector.extract_strided_slice %2 {offsets = [3, 0], sizes = [1, 1024], strides = [1, 1]} : vector<9x1024xf32> to vector<1x1024xf32>
    %95 = vector.broadcast %94 : vector<1x1024xf32> to vector<16x1024xf32>
    %96 = arith.mulf %93, %95 : vector<16x1024xf32>
    %c48_68 = arith.constant 48 : index
    %c0_69 = arith.constant 0 : index
    %97 = vector.load %arg13[%c48_68, %c0_69] : memref<144x1024xf32, #tpu.memory_space<vmem>>, vector<16x1024xf32>
    tpu.vector_store %arg13[%c48_68, %c0_69], %96 {strides = array<i32>} : memref<144x1024xf32, #tpu.memory_space<vmem>>, vector<16x1024xf32>,
    %c0_70 = arith.constant 0 : index
    %c128_71 = arith.constant 128 : index
    %98 = vector.load %arg12[%c0_70, %c128_71] : memref<16x1280xf32, #tpu.memory_space<vmem>>, vector<16x1024xf32>
    %99 = vector.extract_strided_slice %2 {offsets = [4, 0], sizes = [1, 1024], strides = [1, 1]} : vector<9x1024xf32> to vector<1x1024xf32>
    %100 = vector.broadcast %99 : vector<1x1024xf32> to vector<16x1024xf32>
    %101 = arith.mulf %98, %100 : vector<16x1024xf32>
    %c64_72 = arith.constant 64 : index
    %c0_73 = arith.constant 0 : index
    %102 = vector.load %arg13[%c64_72, %c0_73] : memref<144x1024xf32, #tpu.memory_space<vmem>>, vector<16x1024xf32>
    tpu.vector_store %arg13[%c64_72, %c0_73], %101 {strides = array<i32>} : memref<144x1024xf32, #tpu.memory_space<vmem>>, vector<16x1024xf32>,
    %c0_74 = arith.constant 0 : index
    %c129_75 = arith.constant 129 : index
    %103 = vector.load %arg12[%c0_74, %c129_75] : memref<16x1280xf32, #tpu.memory_space<vmem>>, vector<16x1024xf32>
    %104 = vector.extract_strided_slice %2 {offsets = [5, 0], sizes = [1, 1024], strides = [1, 1]} : vector<9x1024xf32> to vector<1x1024xf32>
    %105 = vector.broadcast %104 : vector<1x1024xf32> to vector<16x1024xf32>
    %106 = arith.mulf %103, %105 : vector<16x1024xf32>
    %c80_76 = arith.constant 80 : index
    %c0_77 = arith.constant 0 : index
    %107 = vector.load %arg13[%c80_76, %c0_77] : memref<144x1024xf32, #tpu.memory_space<vmem>>, vector<16x1024xf32>
    tpu.vector_store %arg13[%c80_76, %c0_77], %106 {strides = array<i32>} : memref<144x1024xf32, #tpu.memory_space<vmem>>, vector<16x1024xf32>,
    %c0_78 = arith.constant 0 : index
    %c159_79 = arith.constant 159 : index
    %108 = vector.load %arg12[%c0_78, %c159_79] : memref<16x1280xf32, #tpu.memory_space<vmem>>, vector<16x1024xf32>
    %109 = vector.extract_strided_slice %2 {offsets = [6, 0], sizes = [1, 1024], strides = [1, 1]} : vector<9x1024xf32> to vector<1x1024xf32>
    %110 = vector.broadcast %109 : vector<1x1024xf32> to vector<16x1024xf32>
    %111 = arith.mulf %108, %110 : vector<16x1024xf32>
    %c96_80 = arith.constant 96 : index
    %c0_81 = arith.constant 0 : index
    %112 = vector.load %arg13[%c96_80, %c0_81] : memref<144x1024xf32, #tpu.memory_space<vmem>>, vector<16x1024xf32>
    tpu.vector_store %arg13[%c96_80, %c0_81], %111 {strides = array<i32>} : memref<144x1024xf32, #tpu.memory_space<vmem>>, vector<16x1024xf32>,
    %c0_82 = arith.constant 0 : index
    %c160_83 = arith.constant 160 : index
    %113 = vector.load %arg12[%c0_82, %c160_83] : memref<16x1280xf32, #tpu.memory_space<vmem>>, vector<16x1024xf32>
    %114 = vector.extract_strided_slice %2 {offsets = [7, 0], sizes = [1, 1024], strides = [1, 1]} : vector<9x1024xf32> to vector<1x1024xf32>
    %115 = vector.broadcast %114 : vector<1x1024xf32> to vector<16x1024xf32>
    %116 = arith.mulf %113, %115 : vector<16x1024xf32>
    %c112_84 = arith.constant 112 : index
    %c0_85 = arith.constant 0 : index
    %117 = vector.load %arg13[%c112_84, %c0_85] : memref<144x1024xf32, #tpu.memory_space<vmem>>, vector<16x1024xf32>
    tpu.vector_store %arg13[%c112_84, %c0_85], %116 {strides = array<i32>} : memref<144x1024xf32, #tpu.memory_space<vmem>>, vector<16x1024xf32>,
    %c0_86 = arith.constant 0 : index
    %c161_87 = arith.constant 161 : index
    %118 = vector.load %arg12[%c0_86, %c161_87] : memref<16x1280xf32, #tpu.memory_space<vmem>>, vector<16x1024xf32>
    %119 = vector.extract_strided_slice %2 {offsets = [8, 0], sizes = [1, 1024], strides = [1, 1]} : vector<9x1024xf32> to vector<1x1024xf32>
    %120 = vector.broadcast %119 : vector<1x1024xf32> to vector<16x1024xf32>
    %121 = arith.mulf %118, %120 : vector<16x1024xf32>
    %c128_88 = arith.constant 128 : index
    %c0_89 = arith.constant 0 : index
    %122 = vector.load %arg13[%c128_88, %c0_89] : memref<144x1024xf32, #tpu.memory_space<vmem>>, vector<16x1024xf32>
    tpu.vector_store %arg13[%c128_88, %c0_89], %121 {strides = array<i32>} : memref<144x1024xf32, #tpu.memory_space<vmem>>, vector<16x1024xf32>,
    %c0_90 = arith.constant 0 : index
    %c0_91 = arith.constant 0 : index
    %123 = vector.load %arg9[%c0_90, %c0_91] : memref<4x144xf32, #tpu.memory_space<vmem>>, vector<4x144xf32>
    %c0_92 = arith.constant 0 : index
    %c0_93 = arith.constant 0 : index
    %124 = vector.load %arg13[%c0_92, %c0_93] : memref<144x1024xf32, #tpu.memory_space<vmem>>, vector<144x1024xf32>
    %cst_94 = arith.constant dense<0.000000e+00> : vector<4x1024xf32>
    %125 = tpu.matmul %123, %124, %cst_94 {dimension_numbers = #tpu.dot_dimension_numbers<[1], [0], [0], [1], [0, 0, 1, 1], [], []>} : vector<4x144xf32>, vector<144x1024xf32>, vector<4x1024xf32> -> vector<4x1024xf32>
    %c0_95 = arith.constant 0 : index
    %c0_96 = arith.constant 0 : index
    %126 = vector.load %arg10[%c0_95, %c0_96] : memref<4x1xf32, #tpu.memory_space<vmem>>, vector<4x1xf32>
    %127 = vector.broadcast %126 : vector<4x1xf32> to vector<4x1024xf32>
    %128 = arith.addf %125, %127 : vector<4x1024xf32>
    %cst_97 = arith.constant 0.000000e+00 : f32
    %129 = vector.broadcast %cst_97 : f32 to vector<4x1024xf32>
    %130 = arith.cmpf oge, %128, %129 : vector<4x1024xf32>
    %cst_98 = arith.constant 1.000000e-01 : f32
    %131 = vector.broadcast %cst_98 : f32 to vector<4x1024xf32>
    %132 = arith.mulf %131, %128 : vector<4x1024xf32>
    %133 = arith.select %130, %128, %132 : vector<4x1024xi1>, vector<4x1024xf32>
    %c0_99 = arith.constant 0 : index
    %c0_100 = arith.constant 0 : index
    %c0_101 = arith.constant 0 : index
    %134 = vector.load %arg11[%c0_99, %c0_100, %c0_101] : memref<1x4x1024xf32, #tpu.memory_space<vmem>>, vector<1x4x1024xf32>
    %135 = vector.shape_cast %134 : vector<1x4x1024xf32> to vector<4x1024xf32>
    %136 = vector.shape_cast %133 : vector<4x1024xf32> to vector<1x4x1024xf32>
    tpu.vector_store %arg11[%c0_99, %c0_100, %c0_101], %136 {strides = array<i32>} : memref<1x4x1024xf32, #tpu.memory_space<vmem>>, vector<1x4x1024xf32>,
    return
  }
  func.func @transform_0(%arg0: i32) -> (i32, i32, i32) {
    %c0_i32 = arith.constant 0 : i32
    %c0_i32_0 = arith.constant 0 : i32
    %c0_i32_1 = arith.constant 0 : i32
    return %arg0, %c0_i32, %c0_i32_0 : i32, i32, i32
  }
  func.func @transform_1(%arg0: i32) -> (i32, i32, i32) {
    %c0_i32 = arith.constant 0 : i32
    %c0_i32_0 = arith.constant 0 : i32
    %c0_i32_1 = arith.constant 0 : i32
    return %arg0, %c0_i32, %c0_i32_0 : i32, i32, i32
  }
  func.func @transform_2(%arg0: i32) -> (i32, i32) {
    %c0_i32 = arith.constant 0 : i32
    %c0_i32_0 = arith.constant 0 : i32
    %c0_i32_1 = arith.constant 0 : i32
    return %c0_i32, %c0_i32_0 : i32, i32
  }
  func.func @transform_3(%arg0: i32) -> (i32, i32) {
    %c0_i32 = arith.constant 0 : i32
    %c0_i32_0 = arith.constant 0 : i32
    %c0_i32_1 = arith.constant 0 : i32
    return %c0_i32, %c0_i32_0 : i32, i32
  }
  func.func @transform_4(%arg0: i32) -> (i32, i32) {
    %c0_i32 = arith.constant 0 : i32
    %c0_i32_0 = arith.constant 0 : i32
    %c0_i32_1 = arith.constant 0 : i32
    return %c0_i32, %c0_i32_0 : i32, i32
  }
  func.func @transform_5(%arg0: i32) -> (i32, i32) {
    %c0_i32 = arith.constant 0 : i32
    %c0_i32_0 = arith.constant 0 : i32
    %c0_i32_1 = arith.constant 0 : i32
    return %c0_i32, %c0_i32_0 : i32, i32
  }
  func.func @transform_6(%arg0: i32) -> (i32, i32) {
    %c0_i32 = arith.constant 0 : i32
    %c0_i32_0 = arith.constant 0 : i32
    %c0_i32_1 = arith.constant 0 : i32
    return %c0_i32, %c0_i32_0 : i32, i32
  }
  func.func @transform_7(%arg0: i32) -> (i32, i32) {
    %c0_i32 = arith.constant 0 : i32
    %c0_i32_0 = arith.constant 0 : i32
    %c0_i32_1 = arith.constant 0 : i32
    return %c0_i32, %c0_i32_0 : i32, i32
  }
  func.func @transform_8(%arg0: i32) -> (i32, i32) {
    %c0_i32 = arith.constant 0 : i32
    %c0_i32_0 = arith.constant 0 : i32
    %c0_i32_1 = arith.constant 0 : i32
    return %c0_i32, %c0_i32_0 : i32, i32
  }
  func.func @transform_9(%arg0: i32) -> (i32, i32) {
    %c0_i32 = arith.constant 0 : i32
    %c0_i32_0 = arith.constant 0 : i32
    %c0_i32_1 = arith.constant 0 : i32
    return %c0_i32, %c0_i32_0 : i32, i32
  }
  func.func @transform_10(%arg0: i32) -> (i32, i32, i32) {
    %c0_i32 = arith.constant 0 : i32
    %c0_i32_0 = arith.constant 0 : i32
    %c0_i32_1 = arith.constant 0 : i32
    return %arg0, %c0_i32, %c0_i32_0 : i32, i32, i32
  }
}

</mosaic_0001>

<llo_original>
// kernel: tpu_custom_call.1
$region0: #{tpu_custom_call.1}
  #allocation0 [shape = 'u32[]', space=smem, size = 0x4, offset = 0x4, fixed_abs, tag = 'smem constant byte address 0x4 - core index']
  #allocation1 [shape = 'u32[144,128]{1,0:T(1,128)}', space=vmem, size = 0x12000, scoped, tag = 'internal scratch']
  #allocation2 [shape = 'f32[16,1280]{1,0:T(8,128)}', space=vmem, size = 0x14000, scoped, tag = 'scratch operand']
  #allocation3 [shape = 'f32[144,1024]{1,0:T(8,128)}', space=vmem, size = 0x90000, scoped, tag = 'scratch operand']
  %s0 = inlined_call_operand.hbm [shape: f32[2,4,256], index: 0, kind: input, shape index: {}]
  %s1 = inlined_call_operand.hbm [shape: f32[2,2,1024], index: 1, kind: input, shape index: {}]
  %s2 = inlined_call_operand.vmem [shape: f32[2,4], index: 2, kind: input, shape index: {}]
  %s3 = inlined_call_operand.vmem [shape: f32[2,1], index: 3, kind: input, shape index: {}]
  %s4 = inlined_call_operand.hbm [shape: f32[256,1024], index: 4, kind: input, shape index: {}]
  %s5 = inlined_call_operand.hbm [shape: f32[9,1024], index: 5, kind: input, shape index: {}]
  %s6 = inlined_call_operand.vmem [shape: f32[4,144], index: 6, kind: input, shape index: {}]
  %s7 = inlined_call_operand.vmem [shape: f32[4,1], index: 7, kind: input, shape index: {}]
  %s8 = inlined_call_operand.vmem [shape: f32[4,144], index: 8, kind: input, shape index: {}]
  %s9 = inlined_call_operand.vmem [shape: f32[4,1], index: 9, kind: input, shape index: {}]
  %s10 = inlined_call_operand.hbm [shape: f32[2,4,1024], index: 10, kind: output, shape index: {}]
  %s11 = sld [smem:[#allocation0]]
  $region89: #{tpu_custom_call.1} parent=0
    _
  %s13 = ssub.s32 1, %s11
  %s14 = scalar_select 0, %s13, %s11
  $region1: #{tpu_custom_call.1} parent=0
    #allocation4 [shape = 'u8[8192]{0}', space=vmem, size = 0x2000, scoped, tag = 'input window, operand 0']
    #allocation5 [shape = 's32[2]{0}', space=sflag, size = 0x8, scoped, tag = 'scoped memory for tpu_custom_call.1']
    #allocation6 [shape = 's32[2]{0}', space=sflag, size = 0x8, scoped, tag = 'scoped memory for tpu_custom_call.1']
    #allocation7 [shape = 'u8[16384]{0}', space=vmem, size = 0x4000, scoped, tag = 'input window, operand 1']
    #allocation8 [shape = 's32[2]{0}', space=sflag, size = 0x8, scoped, tag = 'scoped memory for tpu_custom_call.1']
    #allocation9 [shape = 'u8[1048576]{0}', space=vmem, size = 0x100000, scoped, tag = 'input window, operand 4, single buffered']
    #allocation10 [shape = 'u8[65536]{0}', space=vmem, size = 0x10000, scoped, tag = 'input window, operand 5, single buffered']
    #allocation11 [shape = 's32[1]{0}', space=sflag, size = 0x4, scoped, tag = 'scoped memory for tpu_custom_call.1']
    #allocation12 [shape = 'u8[32768]{0}', space=vmem, size = 0x8000, scoped, tag = 'output window, operand 0']
    %15 = vsyncpa [#allocation5], 0
    %s16 = scalar_lea.sflag [#allocation5], 1
    %17 = vsyncpa %s16, 0
    %18 = vsyncpa [#allocation8], 0
    %s19 = scalar_lea.sflag [#allocation8], 1
    %20 = vsyncpa %s19, 0
    %21 = vsyncpa [#allocation11], 0
    %22 = vsyncpa [#allocation6], 0
    %s23 = scalar_lea.sflag [#allocation6], 1
    %24 = vsyncpa %s23, 0
    loop: start=0, step=1, limit=4
    $region2: #{tpu_custom_call.1} parent=1 // loop_pre_header
      _
    $region3: #{tpu_custom_call.1} parent=1 // loop_header
      %s26 = sphi 0, %s30
      %p27 = scmp.ge.s32.totalorder %s26, 4
      %s36 = sphi 0, %s38
      %s39 = sphi 0, %s36
      %s40 = sphi 0, %s39
      %s56 = sphi 0, %s40
      %s62 = sphi 0, %s64
      %s65 = sphi 0, %s62
      %s66 = sphi 0, %s65
      %s82 = sphi 0, %s66
      %s86 = sphi 0, %s86
      %s88 = sphi 0, %s86
      %s89 = sphi 0, %s88
      %s103 = sphi 0, %s89
      %s107 = sphi 0, %s107
      %s109 = sphi 0, %s107
      %s110 = sphi 0, %s109
      %s124 = sphi 0, %s110
      %s128 = sphi 0, %s128
      %s130 = sphi 0, %s128
      %s131 = sphi 0, %s130
      %s145 = sphi 0, %s131
      %s149 = sphi 0, %s149
      %s151 = sphi 0, %s149
      %s152 = sphi 0, %s151
      %s166 = sphi 0, %s152
      %s170 = sphi 0, %s170
      %s172 = sphi 0, %s170
      %s173 = sphi 0, %s172
      %s187 = sphi 0, %s173
      %s191 = sphi 0, %s191
      %s193 = sphi 0, %s191
      %s194 = sphi 0, %s193
      %s208 = sphi 0, %s194
      %s212 = sphi 0, %s212
      %s214 = sphi 0, %s212
      %s215 = sphi 0, %s214
      %s229 = sphi 0, %s215
      %s233 = sphi 0, %s233
      %s235 = sphi 0, %s233
      %s236 = sphi 0, %s235
      %s250 = sphi 0, %s236
      %s256 = sphi 0, %s258
      %s259 = sphi 0, %s256
      %s260 = sphi 0, %s259
      %s276 = sphi 0, %s260
    $region4: #{tpu_custom_call.1} parent=1 // loop_header_branch
      %29 = sbr.rel (%p27) target = $region8
    $region5: #{tpu_custom_call.1} parent=1 // loop_body
      %s31 = ssub.s32 %s26, 1
      %s32 = ssub.s32 %s26, 2
      %s33 = sadd.s32 %s26, 1
      %s34 = ssub.s32 %s26, %s33
      %p35 = scmp.eq.s32.totalorder %s34, 0
      %s37 = sadd.s32 %s36, 1
      %s38 = scalar_select %p35, %s36, %s37
      %p41 = pneg %p35
      %p42 = scmp.eq.s32.totalorder %s26, 1
      %p43 = por %p41, %p42
      %p44 = scmp.ne.s32.totalorder %s36, %s39
      %p45 = scmp.eq.s32.totalorder %s26, 0
      %p46 = por %p44, %p45
      %p47 = scmp.ne.s32.totalorder %s36, %s39
      %p48 = scmp.eq.s32.totalorder %s31, 1
      %p49 = por %p47, %p48
      %p50 = scmp.ne.s32.totalorder %s39, %s40
      %p51 = scmp.eq.s32.totalorder %s31, 0
      %p52 = por %p50, %p51
      %p53 = scmp.ne.s32.totalorder %s39, %s40
      %p54 = scmp.eq.s32.totalorder %s32, 1
      %p55 = por %p53, %p54
      %p57 = scmp.ne.s32.totalorder %s40, %s56
      %p58 = scmp.eq.s32.totalorder %s32, 0
      %p59 = por %p57, %p58
      %s60 = ssub.s32 %s26, %s33
      %p61 = scmp.eq.s32.totalorder %s60, 0
      %s63 = sadd.s32 %s62, 1
      %s64 = scalar_select %p61, %s62, %s63
      %p67 = pneg %p61
      %p68 = scmp.eq.s32.totalorder %s26, 1
      %p69 = por %p67, %p68
      %p70 = scmp.ne.s32.totalorder %s62, %s65
      %p71 = scmp.eq.s32.totalorder %s26, 0
      %p72 = por %p70, %p71
      %p73 = scmp.ne.s32.totalorder %s62, %s65
      %p74 = scmp.eq.s32.totalorder %s31, 1
      %p75 = por %p73, %p74
      %p76 = scmp.ne.s32.totalorder %s65, %s66
      %p77 = scmp.eq.s32.totalorder %s31, 0
      %p78 = por %p76, %p77
      %p79 = scmp.ne.s32.totalorder %s65, %s66
      %p80 = scmp.eq.s32.totalorder %s32, 1
      %p81 = por %p79, %p80
      %p83 = scmp.ne.s32.totalorder %s66, %s82
      %p84 = scmp.eq.s32.totalorder %s32, 0
      %p85 = por %p83, %p84
      %s87 = sadd.s32 %s86, 1
      %p90 = scmp.eq.s32.totalorder %s26, 1
      %p91 = scmp.ne.s32.totalorder %s86, %s88
      %p92 = scmp.eq.s32.totalorder %s26, 0
      %p93 = por %p91, %p92
      %p94 = scmp.ne.s32.totalorder %s86, %s88
      %p95 = scmp.eq.s32.totalorder %s31, 1
      %p96 = por %p94, %p95
      %p97 = scmp.ne.s32.totalorder %s88, %s89
      %p98 = scmp.eq.s32.totalorder %s31, 0
      %p99 = por %p97, %p98
      %p100 = scmp.ne.s32.totalorder %s88, %s89
      %p101 = scmp.eq.s32.totalorder %s32, 1
      %p102 = por %p100, %p101
      %p104 = scmp.ne.s32.totalorder %s89, %s103
      %p105 = scmp.eq.s32.totalorder %s32, 0
      %p106 = por %p104, %p105
      %s108 = sadd.s32 %s107, 1
      %p111 = scmp.eq.s32.totalorder %s26, 1
      %p112 = scmp.ne.s32.totalorder %s107, %s109
      %p113 = scmp.eq.s32.totalorder %s26, 0
      %p114 = por %p112, %p113
      %p115 = scmp.ne.s32.totalorder %s107, %s109
      %p116 = scmp.eq.s32.totalorder %s31, 1
      %p117 = por %p115, %p116
      %p118 = scmp.ne.s32.totalorder %s109, %s110
      %p119 = scmp.eq.s32.totalorder %s31, 0
      %p120 = por %p118, %p119
      %p121 = scmp.ne.s32.totalorder %s109, %s110
      %p122 = scmp.eq.s32.totalorder %s32, 1
      %p123 = por %p121, %p122
      %p125 = scmp.ne.s32.totalorder %s110, %s124
      %p126 = scmp.eq.s32.totalorder %s32, 0
      %p127 = por %p125, %p126
      %s129 = sadd.s32 %s128, 1
      %p132 = scmp.eq.s32.totalorder %s26, 1
      %p133 = scmp.ne.s32.totalorder %s128, %s130
      %p134 = scmp.eq.s32.totalorder %s26, 0
      %p135 = por %p133, %p134
      %p136 = scmp.ne.s32.totalorder %s128, %s130
      %p137 = scmp.eq.s32.totalorder %s31, 1
      %p138 = por %p136, %p137
      %p139 = scmp.ne.s32.totalorder %s130, %s131
      %p140 = scmp.eq.s32.totalorder %s31, 0
      %p141 = por %p139, %p140
      %p142 = scmp.ne.s32.totalorder %s130, %s131
      %p143 = scmp.eq.s32.totalorder %s32, 1
      %p144 = por %p142, %p143
      %p146 = scmp.ne.s32.totalorder %s131, %s145
      %p147 = scmp.eq.s32.totalorder %s32, 0
      %p148 = por %p146, %p147
      %s150 = sadd.s32 %s149, 1
      %p153 = scmp.eq.s32.totalorder %s26, 1
      %p154 = scmp.ne.s32.totalorder %s149, %s151
      %p155 = scmp.eq.s32.totalorder %s26, 0
      %p156 = por %p154, %p155
      %p157 = scmp.ne.s32.totalorder %s149, %s151
      %p158 = scmp.eq.s32.totalorder %s31, 1
      %p159 = por %p157, %p158
      %p160 = scmp.ne.s32.totalorder %s151, %s152
      %p161 = scmp.eq.s32.totalorder %s31, 0
      %p162 = por %p160, %p161
      %p163 = scmp.ne.s32.totalorder %s151, %s152
      %p164 = scmp.eq.s32.totalorder %s32, 1
      %p165 = por %p163, %p164
      %p167 = scmp.ne.s32.totalorder %s152, %s166
      %p168 = scmp.eq.s32.totalorder %s32, 0
      %p169 = por %p167, %p168
      %s171 = sadd.s32 %s170, 1
      %p174 = scmp.eq.s32.totalorder %s26, 1
      %p175 = scmp.ne.s32.totalorder %s170, %s172
      %p176 = scmp.eq.s32.totalorder %s26, 0
      %p177 = por %p175, %p176
      %p178 = scmp.ne.s32.totalorder %s170, %s172
      %p179 = scmp.eq.s32.totalorder %s31, 1
      %p180 = por %p178, %p179
      %p181 = scmp.ne.s32.totalorder %s172, %s173
      %p182 = scmp.eq.s32.totalorder %s31, 0
      %p183 = por %p181, %p182
      %p184 = scmp.ne.s32.totalorder %s172, %s173
      %p185 = scmp.eq.s32.totalorder %s32, 1
      %p186 = por %p184, %p185
      %p188 = scmp.ne.s32.totalorder %s173, %s187
      %p189 = scmp.eq.s32.totalorder %s32, 0
      %p190 = por %p188, %p189
      %s192 = sadd.s32 %s191, 1
      %p195 = scmp.eq.s32.totalorder %s26, 1
      %p196 = scmp.ne.s32.totalorder %s191, %s193
      %p197 = scmp.eq.s32.totalorder %s26, 0
      %p198 = por %p196, %p197
      %p199 = scmp.ne.s32.totalorder %s191, %s193
      %p200 = scmp.eq.s32.totalorder %s31, 1
      %p201 = por %p199, %p200
      %p202 = scmp.ne.s32.totalorder %s193, %s194
      %p203 = scmp.eq.s32.totalorder %s31, 0
      %p204 = por %p202, %p203
      %p205 = scmp.ne.s32.totalorder %s193, %s194
      %p206 = scmp.eq.s32.totalorder %s32, 1
      %p207 = por %p205, %p206
      %p209 = scmp.ne.s32.totalorder %s194, %s208
      %p210 = scmp.eq.s32.totalorder %s32, 0
      %p211 = por %p209, %p210
      %s213 = sadd.s32 %s212, 1
      %p216 = scmp.eq.s32.totalorder %s26, 1
      %p217 = scmp.ne.s32.totalorder %s212, %s214
      %p218 = scmp.eq.s32.totalorder %s26, 0
      %p219 = por %p217, %p218
      %p220 = scmp.ne.s32.totalorder %s212, %s214
      %p221 = scmp.eq.s32.totalorder %s31, 1
      %p222 = por %p220, %p221
      %p223 = scmp.ne.s32.totalorder %s214, %s215
      %p224 = scmp.eq.s32.totalorder %s31, 0
      %p225 = por %p223, %p224
      %p226 = scmp.ne.s32.totalorder %s214, %s215
      %p227 = scmp.eq.s32.totalorder %s32, 1
      %p228 = por %p226, %p227
      %p230 = scmp.ne.s32.totalorder %s215, %s229
      %p231 = scmp.eq.s32.totalorder %s32, 0
      %p232 = por %p230, %p231
      %s234 = sadd.s32 %s233, 1
      %p237 = scmp.eq.s32.totalorder %s26, 1
      %p238 = scmp.ne.s32.totalorder %s233, %s235
      %p239 = scmp.eq.s32.totalorder %s26, 0
      %p240 = por %p238, %p239
      %p241 = scmp.ne.s32.totalorder %s233, %s235
      %p242 = scmp.eq.s32.totalorder %s31, 1
      %p243 = por %p241, %p242
      %p244 = scmp.ne.s32.totalorder %s235, %s236
      %p245 = scmp.eq.s32.totalorder %s31, 0
      %p246 = por %p244, %p245
      %p247 = scmp.ne.s32.totalorder %s235, %s236
      %p248 = scmp.eq.s32.totalorder %s32, 1
      %p249 = por %p247, %p248
      %p251 = scmp.ne.s32.totalorder %s236, %s250
      %p252 = scmp.eq.s32.totalorder %s32, 0
      %p253 = por %p251, %p252
      %s254 = ssub.s32 %s26, %s33
      %p255 = scmp.eq.s32.totalorder %s254, 0
      %s257 = sadd.s32 %s256, 1
      %s258 = scalar_select %p255, %s256, %s257
      %p261 = pneg %p255
      %p262 = scmp.eq.s32.totalorder %s26, 1
      %p263 = por %p261, %p262
      %p264 = scmp.ne.s32.totalorder %s256, %s259
      %p265 = scmp.eq.s32.totalorder %s26, 0
      %p266 = por %p264, %p265
      %p267 = scmp.ne.s32.totalorder %s256, %s259
      %p268 = scmp.eq.s32.totalorder %s31, 1
      %p269 = por %p267, %p268
      %p270 = scmp.ne.s32.totalorder %s259, %s260
      %p271 = scmp.eq.s32.totalorder %s31, 0
      %p272 = por %p270, %p271
      %p273 = scmp.ne.s32.totalorder %s259, %s260
      %p274 = scmp.eq.s32.totalorder %s32, 1
      %p275 = por %p273, %p274
      %p277 = scmp.ne.s32.totalorder %s260, %s276
      %p278 = scmp.eq.s32.totalorder %s32, 0
      %p279 = por %p277, %p278
      %p280 = scmp.le.s32.totalorder 1, %s26
      %p281 = scmp.lt.s32.totalorder %s26, 3
      %p282 = pnand %p280, %p281
      %p283 = pneg %p282
      // Predicated region
      $region9: #{tpu_custom_call.1} parent=5 // pred_check
        _
      $region10: #{tpu_custom_call.1} parent=5 // pred_check_branch
        %285 = sbr.rel (%p282) target = $region12
      $region11: #{tpu_custom_call.1} parent=5 // pred_region
        %s286 = ssub.s32 %s26, 1
        // Predicated region
        $region13: #{tpu_custom_call.1} parent=11 // pred_check
          %p287 = pneg %p99
        $region14: #{tpu_custom_call.1} parent=11 // pred_check_branch
          %289 = sbr.rel (%p287) target = $region16
        $region15: #{tpu_custom_call.1} parent=11 // pred_region
          _
        $region16: #{tpu_custom_call.1} parent=11 // pred_fallthru
          _
        // Predicated region
        $region17: #{tpu_custom_call.1} parent=11 // pred_check
          %p290 = pneg %p120
        $region18: #{tpu_custom_call.1} parent=11 // pred_check_branch
          %292 = sbr.rel (%p290) target = $region20
        $region19: #{tpu_custom_call.1} parent=11 // pred_region
          _
        $region20: #{tpu_custom_call.1} parent=11 // pred_fallthru
          _
        // Predicated region
        $region21: #{tpu_custom_call.1} parent=11 // pred_check
          %p293 = pneg %p141
        $region22: #{tpu_custom_call.1} parent=11 // pred_check_branch
          %295 = sbr.rel (%p293) target = $region24
        $region23: #{tpu_custom_call.1} parent=11 // pred_region
          %s297 = ssub.s32 32768, 32768
          %298 = vsyncadd [#allocation8], %s297
          %s299 = sshll.u32 [#allocation9], 4
          %s300 = int_to_ptr.vmem [resolvable:$true] %s299
          %305 = dma.hbm_to_vmem [thread:$0]  %s4, 32768, %s300, [#allocation8], 1024, 1024, 64
        $region24: #{tpu_custom_call.1} parent=11 // pred_fallthru
          _
        // Predicated region
        $region25: #{tpu_custom_call.1} parent=11 // pred_check
          %p306 = pneg %p162
        $region26: #{tpu_custom_call.1} parent=11 // pred_check_branch
          %308 = sbr.rel (%p306) target = $region28
        $region27: #{tpu_custom_call.1} parent=11 // pred_region
          %s310 = ssub.s32 2048, 2048
          %311 = vsyncadd [#allocation11], %s310
          %s312 = sshll.u32 [#allocation10], 4
          %s313 = int_to_ptr.vmem [resolvable:$true] %s312
          %318 = dma.hbm_to_vmem [thread:$0]  %s5, 2048, %s313, [#allocation11], 1024, 1024, 64
        $region28: #{tpu_custom_call.1} parent=11 // pred_fallthru
          _
        // Predicated region
        $region29: #{tpu_custom_call.1} parent=11 // pred_check
          %p319 = pneg %p183
        $region30: #{tpu_custom_call.1} parent=11 // pred_check_branch
          %321 = sbr.rel (%p319) target = $region32
        $region31: #{tpu_custom_call.1} parent=11 // pred_region
          _
        $region32: #{tpu_custom_call.1} parent=11 // pred_fallthru
          _
        // Predicated region
        $region33: #{tpu_custom_call.1} parent=11 // pred_check
          %p322 = pneg %p204
        $region34: #{tpu_custom_call.1} parent=11 // pred_check_branch
          %324 = sbr.rel (%p322) target = $region36
        $region35: #{tpu_custom_call.1} parent=11 // pred_region
          _
        $region36: #{tpu_custom_call.1} parent=11 // pred_fallthru
          _
        // Predicated region
        $region37: #{tpu_custom_call.1} parent=11 // pred_check
          %p325 = pneg %p225
        $region38: #{tpu_custom_call.1} parent=11 // pred_check_branch
          %327 = sbr.rel (%p325) target = $region40
        $region39: #{tpu_custom_call.1} parent=11 // pred_region
          _
        $region40: #{tpu_custom_call.1} parent=11 // pred_fallthru
          _
        // Predicated region
        $region41: #{tpu_custom_call.1} parent=11 // pred_check
          %p328 = pneg %p246
        $region42: #{tpu_custom_call.1} parent=11 // pred_check_branch
          %330 = sbr.rel (%p328) target = $region44
        $region43: #{tpu_custom_call.1} parent=11 // pred_region
          _
        $region44: #{tpu_custom_call.1} parent=11 // pred_fallthru
          _
      $region12: #{tpu_custom_call.1} parent=5 // pred_fallthru
        _
      %p331 = scmp.lt.s32.totalorder %s26, 2
      // Predicated region
      $region45: #{tpu_custom_call.1} parent=5 // pred_check
        %p332 = pneg %p331
      $region46: #{tpu_custom_call.1} parent=5 // pred_check_branch
        %334 = sbr.rel (%p332) target = $region48
      $region47: #{tpu_custom_call.1} parent=5 // pred_region
        // Predicated region
        $region49: #{tpu_custom_call.1} parent=47 // pred_check
          %p335 = pneg %p46
        $region50: #{tpu_custom_call.1} parent=47 // pred_check_branch
          %337 = sbr.rel (%p335) target = $region52
        $region51: #{tpu_custom_call.1} parent=47 // pred_region
          %s338 = sand.u32 %s36, 1
          %s339 = scalar_lea.sflag [#allocation5], %s338
          %s340 = sand.u32 %s36, 1
          %s341 = smul.addr %s340, 8
          %s342 = scalar_lea.vmem [#allocation4], %s341
          %s344 = ssub.s32 128, 128
          %345 = vsyncadd %s339, %s344
          %s346 = smul.addr %s26, 2
          %s347 = smul.addr %s346, 64
          %s348 = scalar_lea.hbm %s0, %s347
          %s350 = sshll.u32 %s342, 4
          %s351 = int_to_ptr.vmem [resolvable:$true] %s350
          %353 = dma.hbm_to_vmem [thread:$0]  %s348, 128, %s351, %s339
        $region52: #{tpu_custom_call.1} parent=47 // pred_fallthru
          _
        // Predicated region
        $region53: #{tpu_custom_call.1} parent=47 // pred_check
          %p354 = pneg %p72
        $region54: #{tpu_custom_call.1} parent=47 // pred_check_branch
          %356 = sbr.rel (%p354) target = $region56
        $region55: #{tpu_custom_call.1} parent=47 // pred_region
          %s357 = sand.u32 %s26, 1
          %s358 = scalar_lea.sflag [#allocation8], %s357
          %s359 = sand.u32 %s62, 1
          %s360 = smul.addr %s359, 16
          %s361 = scalar_lea.vmem [#allocation7], %s360
          %s363 = ssub.s32 256, 256
          %364 = vsyncadd %s358, %s363
          %s365 = smul.addr %s26, 8
          %s366 = smul.addr %s365, 32
          %s367 = scalar_lea.hbm %s1, %s366
          %s369 = sshll.u32 %s361, 4
          %s370 = int_to_ptr.vmem [resolvable:$true] %s369
          %372 = dma.hbm_to_vmem [thread:$0]  %s367, 256, %s370, %s358
        $region56: #{tpu_custom_call.1} parent=47 // pred_fallthru
          _
      $region48: #{tpu_custom_call.1} parent=5 // pred_fallthru
        _
      %p373 = scmp.le.s32.totalorder 1, %s26
      %p374 = scmp.lt.s32.totalorder %s26, 3
      %p375 = pnand %p373, %p374
      %p376 = pneg %p375
      // Predicated region
      $region57: #{tpu_custom_call.1} parent=5 // pred_check
        _
      $region58: #{tpu_custom_call.1} parent=5 // pred_check_branch
        %378 = sbr.rel (%p375) target = $region60
      $region59: #{tpu_custom_call.1} parent=5 // pred_region
        %s379 = ssub.s32 %s26, 1
        %s380 = sand.u32 %s39, 1
        %s381 = scalar_lea.sflag [#allocation5], %s380
        %s382 = sand.u32 %s39, 1
        %s383 = smul.addr %s382, 8
        %s384 = scalar_lea.vmem [#allocation4], %s383
        // Predicated region
        $region61: #{tpu_custom_call.1} parent=59 // pred_check
          %p385 = pneg %p52
        $region62: #{tpu_custom_call.1} parent=59 // pred_check_branch
          %387 = sbr.rel (%p385) target = $region64
        $region63: #{tpu_custom_call.1} parent=59 // pred_region
          %388 = dma.done %s381, 128
        $region64: #{tpu_custom_call.1} parent=59 // pred_fallthru
          _
        %s389 = sand.u32 %s31, 1
        %s390 = scalar_lea.sflag [#allocation8], %s389
        %s391 = sand.u32 %s65, 1
        %s392 = smul.addr %s391, 16
        %s393 = scalar_lea.vmem [#allocation7], %s392
        // Predicated region
        $region65: #{tpu_custom_call.1} parent=59 // pred_check
          %p394 = pneg %p78
        $region66: #{tpu_custom_call.1} parent=59 // pred_check_branch
          %396 = sbr.rel (%p394) target = $region68
        $region67: #{tpu_custom_call.1} parent=59 // pred_region
          %397 = dma.done %s390, 256
        $region68: #{tpu_custom_call.1} parent=59 // pred_fallthru
          _
        // Predicated region
        $region69: #{tpu_custom_call.1} parent=59 // pred_check
          %p398 = pneg %p141
        $region70: #{tpu_custom_call.1} parent=59 // pred_check_branch
          %400 = sbr.rel (%p398) target = $region72
        $region71: #{tpu_custom_call.1} parent=59 // pred_region
          %401 = dma.done [#allocation8], 32768
        $region72: #{tpu_custom_call.1} parent=59 // pred_fallthru
          _
        // Predicated region
        $region73: #{tpu_custom_call.1} parent=59 // pred_check
          %p402 = pneg %p162
        $region74: #{tpu_custom_call.1} parent=59 // pred_check_branch
          %404 = sbr.rel (%p402) target = $region76
        $region75: #{tpu_custom_call.1} parent=59 // pred_region
          %405 = dma.done [#allocation11], 2048
        $region76: #{tpu_custom_call.1} parent=59 // pred_fallthru
          _
        %s406 = sand.u32 %s39, 1
        %s407 = scalar_lea.sflag [#allocation5], %s406
        %s408 = sand.u32 %s39, 1
        %s409 = smul.addr %s408, 8
        %s410 = scalar_lea.vmem [#allocation4], %s409
        %p411 = pneg %p52
        %p412 = pneg %p49
        %s413 = sand.u32 %s31, 1
        %s414 = scalar_lea.sflag [#allocation8], %s413
        %s415 = sand.u32 %s65, 1
        %s416 = smul.addr %s415, 16
        %s417 = scalar_lea.vmem [#allocation7], %s416
        %p418 = pneg %p78
        %p419 = pneg %p75
        %p420 = pneg %p99
        %p421 = pneg %p96
        %p422 = pneg %p120
        %p423 = pneg %p117
        %p424 = pneg %p141
        %p425 = pneg %p138
        %p426 = pneg %p162
        %p427 = pneg %p159
        %p428 = pneg %p183
        %p429 = pneg %p180
        %p430 = pneg %p204
        %p431 = pneg %p201
        %p432 = pneg %p225
        %p433 = pneg %p222
        %p434 = pneg %p246
        %p435 = pneg %p243
        %p436 = pneg %p272
        %p437 = pneg %p269
        %s438 = sand.u32 %s259, 1
        %s439 = scalar_lea.sflag [#allocation6], %s438
        %s440 = sand.u32 %s259, 1
        %s441 = smul.addr %s440, 32
        %s442 = scalar_lea.vmem [#allocation12], %s441
        %443 = vst [vmem:[#allocation2] sm:$0xff] 0.0
        %444 = vst [vmem:[#allocation2 + $0x8] sm:$0xff] 0.0
        %445 = vst [vmem:[#allocation2 + $0x10] sm:$0xff] 0.0
        %446 = vst [vmem:[#allocation2 + $0x18] sm:$0xff] 0.0
        %447 = vst [vmem:[#allocation2 + $0x20] sm:$0xff] 0.0
        %448 = vst [vmem:[#allocation2 + $0x28] sm:$0xff] 0.0
        %449 = vst [vmem:[#allocation2 + $0x30] sm:$0xff] 0.0
        %450 = vst [vmem:[#allocation2 + $0x38] sm:$0xff] 0.0
        %451 = vst [vmem:[#allocation2 + $0x40] sm:$0xff] 0.0
        %452 = vst [vmem:[#allocation2 + $0x48] sm:$0xff] 0.0
        %453 = vst [vmem:[#allocation2 + $0x50] sm:$0xff] 0.0
        %454 = vst [vmem:[#allocation2 + $0x58] sm:$0xff] 0.0
        %455 = vst [vmem:[#allocation2 + $0x60] sm:$0xff] 0.0
        %456 = vst [vmem:[#allocation2 + $0x68] sm:$0xff] 0.0
        %457 = vst [vmem:[#allocation2 + $0x70] sm:$0xff] 0.0
        %458 = vst [vmem:[#allocation2 + $0x78] sm:$0xff] 0.0
        %459 = vst [vmem:[#allocation2 + $0x80] sm:$0xff] 0.0
        %460 = vst [vmem:[#allocation2 + $0x88] sm:$0xff] 0.0
        %461 = vst [vmem:[#allocation2 + $0x90] sm:$0xff] 0.0
        %462 = vst [vmem:[#allocation2 + $0x98] sm:$0xff] 0.0
        %v463 = vld [vmem:[#allocation10] sm:$0xff]
        %v464 = vld [vmem:[#allocation10 + $0x8] sm:$0xff]
        %v465 = vld [vmem:[#allocation10 + $0x10] sm:$0xff]
        %v466 = vld [vmem:[#allocation10 + $0x18] sm:$0xff]
        %v467 = vld [vmem:[#allocation10 + $0x20] sm:$0xff]
        %v468 = vld [vmem:[#allocation10 + $0x28] sm:$0xff]
        %v469 = vld [vmem:[#allocation10 + $0x30] sm:$0xff]
        %v470 = vld [vmem:[#allocation10 + $0x38] sm:$0xff]
        %v471 = vld [vmem:[#allocation10 + $0x40] sm:$0x1]
        %v472 = vld [vmem:[#allocation10 + $0x48] sm:$0x1]
        %v473 = vld [vmem:[#allocation10 + $0x50] sm:$0x1]
        %v474 = vld [vmem:[#allocation10 + $0x58] sm:$0x1]
        %v475 = vld [vmem:[#allocation10 + $0x60] sm:$0x1]
        %v476 = vld [vmem:[#allocation10 + $0x68] sm:$0x1]
        %v477 = vld [vmem:[#allocation10 + $0x70] sm:$0x1]
        %v478 = vld [vmem:[#allocation10 + $0x78] sm:$0x1]
        %v479 = vld [vmem:[%s2] sm:$0x3]
        %v480 = vld [vmem:[%s384] sm:$0xff]
        %v482 = vcombine.high %v480, %v480
        %vm483 = vcmask 31744
        %v485 = vsel %vm483, %v479, 0
        %vm487 = vcmask 1043456
        %v488 = vsel %vm487, %v480, 0
        %v490 = vsel %vm487, %v482, 0
        %492 = vmatprep.subr.mxu0 %v490
        %493 = vmatpush1.msra.mxu0 %v488
        %494 = vmatprep.subr.mxu0 0.0
        %495 = vmatpush1.msra.mxu0 0.0
        %496 = vmatprep.subr.mxu0 0.0
        %497 = vmatpush1.msra.mxu0 0.0
        %498 = vmatprep.subr.mxu0 0.0
        %499 = vmatpush1.msra.mxu0 0.0
        %500 = vmatprep.subr.mxu0 0.0
        %501 = vmatpush1.msra.mxu0 0.0
        %502 = vmatprep.subr.mxu0 0.0
        %503 = vmatpush1.msra.mxu0 0.0
        %504 = vmatprep.subr.mxu0 0.0
        %505 = vmatpush1.msra.mxu0 0.0
        %506 = vmatprep.subr.mxu0 0.0
        %507 = vmatpush1.msra.mxu0 0.0
        %508 = vmatprep.subr.mxu0 0.0
        %509 = vmatpush1.msra.mxu0 0.0
        %510 = vmatprep.subr.mxu0 0.0
        %511 = vmatpush1.msra.mxu0 0.0
        %512 = vmatprep.subr.mxu0 0.0
        %513 = vmatpush1.msra.mxu0 0.0
        %514 = vmatprep.subr.mxu0 0.0
        %515 = vmatpush1.msra.mxu0 0.0
        %516 = vmatprep.subr.mxu0 0.0
        %517 = vmatpush1.msra.mxu0 0.0
        %518 = vmatprep.subr.mxu0 0.0
        %519 = vmatpush1.msra.mxu0 0.0
        %520 = vmatprep.subr.mxu0 0.0
        %521 = vmatpush1.msra.mxu0 0.0
        %522 = vmatprep.subr.mxu0 0.0
        %523 = vmatpush1.msra.mxu0 0.0
        %524 = vmatprep.subr.mxu0 0.0
        %525 = vmatpush1.msra.mxu0 0.0
        %526 = vmatprep.subr.mxu0 0.0
        %527 = vmatpush1.msra.mxu0 0.0
        %528 = vmatprep.subr.mxu0 0.0
        %529 = vmatpush1.msra.mxu0 0.0
        %530 = vmatprep.subr.mxu0 0.0
        %531 = vmatpush1.msra.mxu0 0.0
        %532 = vmatprep.subr.mxu0 0.0
        %533 = vmatpush1.msra.mxu0 0.0
        %534 = vmatprep.subr.mxu0 0.0
        %535 = vmatpush1.msra.mxu0 0.0
        %536 = vmatprep.subr.mxu0 0.0
        %537 = vmatpush1.msra.mxu0 0.0
        %538 = vmatprep.subr.mxu0 0.0
        %539 = vmatpush1.msra.mxu0 0.0
        %540 = vmatprep.subr.mxu0 0.0
        %541 = vmatpush1.msra.mxu0 0.0
        %542 = vmatprep.subr.mxu0 0.0
        %543 = vmatpush1.msra.mxu0 0.0
        %544 = vmatprep.subr.mxu0 0.0
        %545 = vmatpush1.msra.mxu0 0.0
        %546 = vmatprep.subr.mxu0 0.0
        %547 = vmatpush1.msra.mxu0 0.0
        %548 = vmatprep.subr.mxu0 0.0
        %549 = vmatpush1.msra.mxu0 0.0
        %550 = vmatprep.subr.mxu0 0.0
        %551 = vmatpush1.msra.mxu0 0.0
        %552 = vmatprep.subr.mxu0 0.0
        %553 = vmatpush1.msra.mxu0 0.0
        %554 = vmatprep.subr.mxu0 0.0
        %555 = vmatpush1.msra.mxu0 0.0
        %556 = vmatprep.mubr.f32.mxu0 0.0
        %557 = vmatmul.mubr.f32.gmra.mrb[0].mxu0 %v485
        %v558 = vpop.f32.mrb[0].mxu0
        %v559 = vadd.f32 0.0, %v558
        %v560 = vpop.f32.mrb[0].mxu0
        %v561 = vadd.f32 0.0, %v560
        %562 = vdwg.mxu0
        %v563 = vld [vmem:[#allocation9] sm:$0xff]
        %v564 = vld [vmem:[#allocation9 + $0x8] sm:$0xff]
        %v565 = vld [vmem:[#allocation9 + $0x10] sm:$0xff]
        %v566 = vld [vmem:[#allocation9 + $0x18] sm:$0xff]
        %v567 = vld [vmem:[#allocation9 + $0x20] sm:$0xff]
        %v568 = vld [vmem:[#allocation9 + $0x28] sm:$0xff]
        %v569 = vld [vmem:[#allocation9 + $0x30] sm:$0xff]
        %v570 = vld [vmem:[#allocation9 + $0x38] sm:$0xff]
        %v571 = vld [vmem:[#allocation9 + $0x40] sm:$0xff]
        %v572 = vld [vmem:[#allocation9 + $0x48] sm:$0xff]
        %v573 = vld [vmem:[#allocation9 + $0x50] sm:$0xff]
        %v574 = vld [vmem:[#allocation9 + $0x58] sm:$0xff]
        %v575 = vld [vmem:[#allocation9 + $0x60] sm:$0xff]
        %v576 = vld [vmem:[#allocation9 + $0x68] sm:$0xff]
        %v577 = vld [vmem:[#allocation9 + $0x70] sm:$0xff]
        %v578 = vld [vmem:[#allocation9 + $0x78] sm:$0xff]
        %v579 = vld [vmem:[#allocation9 + $0x80] sm:$0xff]
        %v580 = vld [vmem:[#allocation9 + $0x88] sm:$0xff]
        %v581 = vld [vmem:[#allocation9 + $0x90] sm:$0xff]
        %v582 = vld [vmem:[#allocation9 + $0x98] sm:$0xff]
        %v583 = vld [vmem:[#allocation9 + $0xa0] sm:$0xff]
        %v584 = vld [vmem:[#allocation9 + $0xa8] sm:$0xff]
        %v585 = vld [vmem:[#allocation9 + $0xb0] sm:$0xff]
        %v586 = vld [vmem:[#allocation9 + $0xb8] sm:$0xff]
        %v587 = vld [vmem:[#allocation9 + $0xc0] sm:$0xff]
        %v588 = vld [vmem:[#allocation9 + $0xc8] sm:$0xff]
        %v589 = vld [vmem:[#allocation9 + $0xd0] sm:$0xff]
        %v590 = vld [vmem:[#allocation9 + $0xd8] sm:$0xff]
        %v591 = vld [vmem:[#allocation9 + $0xe0] sm:$0xff]
        %v592 = vld [vmem:[#allocation9 + $0xe8] sm:$0xff]
        %v593 = vld [vmem:[#allocation9 + $0xf0] sm:$0xff]
        %v594 = vld [vmem:[#allocation9 + $0xf8] sm:$0xff]
        %v595 = vld [vmem:[#allocation9 + $0x100] sm:$0xff]
        %v596 = vld [vmem:[#allocation9 + $0x108] sm:$0xff]
        %v597 = vld [vmem:[#allocation9 + $0x110] sm:$0xff]
        %v598 = vld [vmem:[#allocation9 + $0x118] sm:$0xff]
        %v599 = vld [vmem:[#allocation9 + $0x120] sm:$0xff]
        %v600 = vld [vmem:[#allocation9 + $0x128] sm:$0xff]
        %v601 = vld [vmem:[#allocation9 + $0x130] sm:$0xff]
        %v602 = vld [vmem:[#allocation9 + $0x138] sm:$0xff]
        %v603 = vld [vmem:[#allocation9 + $0x140] sm:$0xff]
        %v604 = vld [vmem:[#allocation9 + $0x148] sm:$0xff]
        %v605 = vld [vmem:[#allocation9 + $0x150] sm:$0xff]
        %v606 = vld [vmem:[#allocation9 + $0x158] sm:$0xff]
        %v607 = vld [vmem:[#allocation9 + $0x160] sm:$0xff]
        %v608 = vld [vmem:[#allocation9 + $0x168] sm:$0xff]
        %v609 = vld [vmem:[#allocation9 + $0x170] sm:$0xff]
        %v610 = vld [vmem:[#allocation9 + $0x178] sm:$0xff]
        %v611 = vld [vmem:[#allocation9 + $0x180] sm:$0xff]
        %v612 = vld [vmem:[#allocation9 + $0x188] sm:$0xff]
        %v613 = vld [vmem:[#allocation9 + $0x190] sm:$0xff]
        %v614 = vld [vmem:[#allocation9 + $0x198] sm:$0xff]
        %v615 = vld [vmem:[#allocation9 + $0x1a0] sm:$0xff]
        %v616 = vld [vmem:[#allocation9 + $0x1a8] sm:$0xff]
        %v617 = vld [vmem:[#allocation9 + $0x1b0] sm:$0xff]
        %v618 = vld [vmem:[#allocation9 + $0x1b8] sm:$0xff]
        %v619 = vld [vmem:[#allocation9 + $0x1c0] sm:$0xff]
        %v620 = vld [vmem:[#allocation9 + $0x1c8] sm:$0xff]
        %v621 = vld [vmem:[#allocation9 + $0x1d0] sm:$0xff]
        %v622 = vld [vmem:[#allocation9 + $0x1d8] sm:$0xff]
        %v623 = vld [vmem:[#allocation9 + $0x1e0] sm:$0xff]
        %v624 = vld [vmem:[#allocation9 + $0x1e8] sm:$0xff]
        %v625 = vld [vmem:[#allocation9 + $0x1f0] sm:$0xff]
        %v626 = vld [vmem:[#allocation9 + $0x1f8] sm:$0xff]
        %v627 = vld [vmem:[#allocation9 + $0x200] sm:$0xff]
        %v628 = vld [vmem:[#allocation9 + $0x208] sm:$0xff]
        %v629 = vld [vmem:[#allocation9 + $0x210] sm:$0xff]
        %v630 = vld [vmem:[#allocation9 + $0x218] sm:$0xff]
        %v631 = vld [vmem:[#allocation9 + $0x220] sm:$0xff]
        %v632 = vld [vmem:[#allocation9 + $0x228] sm:$0xff]
        %v633 = vld [vmem:[#allocation9 + $0x230] sm:$0xff]
        %v634 = vld [vmem:[#allocation9 + $0x238] sm:$0xff]
        %v635 = vld [vmem:[#allocation9 + $0x240] sm:$0xff]
        %v636 = vld [vmem:[#allocation9 + $0x248] sm:$0xff]
        %v637 = vld [vmem:[#allocation9 + $0x250] sm:$0xff]
        %v638 = vld [vmem:[#allocation9 + $0x258] sm:$0xff]
        %v639 = vld [vmem:[#allocation9 + $0x260] sm:$0xff]
        %v640 = vld [vmem:[#allocation9 + $0x268] sm:$0xff]
        %v641 = vld [vmem:[#allocation9 + $0x270] sm:$0xff]
        %v642 = vld [vmem:[#allocation9 + $0x278] sm:$0xff]
        %v643 = vld [vmem:[#allocation9 + $0x280] sm:$0xff]
        %v644 = vld [vmem:[#allocation9 + $0x288] sm:$0xff]
        %v645 = vld [vmem:[#allocation9 + $0x290] sm:$0xff]
        %v646 = vld [vmem:[#allocation9 + $0x298] sm:$0xff]
        %v647 = vld [vmem:[#allocation9 + $0x2a0] sm:$0xff]
        %v648 = vld [vmem:[#allocation9 + $0x2a8] sm:$0xff]
        %v649 = vld [vmem:[#allocation9 + $0x2b0] sm:$0xff]
        %v650 = vld [vmem:[#allocation9 + $0x2b8] sm:$0xff]
        %v651 = vld [vmem:[#allocation9 + $0x2c0] sm:$0xff]
        %v652 = vld [vmem:[#allocation9 + $0x2c8] sm:$0xff]
        %v653 = vld [vmem:[#allocation9 + $0x2d0] sm:$0xff]
        %v654 = vld [vmem:[#allocation9 + $0x2d8] sm:$0xff]
        %v655 = vld [vmem:[#allocation9 + $0x2e0] sm:$0xff]
        %v656 = vld [vmem:[#allocation9 + $0x2e8] sm:$0xff]
        %v657 = vld [vmem:[#allocation9 + $0x2f0] sm:$0xff]
        %v658 = vld [vmem:[#allocation9 + $0x2f8] sm:$0xff]
        %v659 = vld [vmem:[#allocation9 + $0x300] sm:$0xff]
        %v660 = vld [vmem:[#allocation9 + $0x308] sm:$0xff]
        %v661 = vld [vmem:[#allocation9 + $0x310] sm:$0xff]
        %v662 = vld [vmem:[#allocation9 + $0x318] sm:$0xff]
        %v663 = vld [vmem:[#allocation9 + $0x320] sm:$0xff]
        %v664 = vld [vmem:[#allocation9 + $0x328] sm:$0xff]
        %v665 = vld [vmem:[#allocation9 + $0x330] sm:$0xff]
        %v666 = vld [vmem:[#allocation9 + $0x338] sm:$0xff]
        %v667 = vld [vmem:[#allocation9 + $0x340] sm:$0xff]
        %v668 = vld [vmem:[#allocation9 + $0x348] sm:$0xff]
        %v669 = vld [vmem:[#allocation9 + $0x350] sm:$0xff]
        %v670 = vld [vmem:[#allocation9 + $0x358] sm:$0xff]
        %v671 = vld [vmem:[#allocation9 + $0x360] sm:$0xff]
        %v672 = vld [vmem:[#allocation9 + $0x368] sm:$0xff]
        %v673 = vld [vmem:[#allocation9 + $0x370] sm:$0xff]
        %v674 = vld [vmem:[#allocation9 + $0x378] sm:$0xff]
        %v675 = vld [vmem:[#allocation9 + $0x380] sm:$0xff]
        %v676 = vld [vmem:[#allocation9 + $0x388] sm:$0xff]
        %v677 = vld [vmem:[#allocation9 + $0x390] sm:$0xff]
        %v678 = vld [vmem:[#allocation9 + $0x398] sm:$0xff]
        %v679 = vld [vmem:[#allocation9 + $0x3a0] sm:$0xff]
        %v680 = vld [vmem:[#allocation9 + $0x3a8] sm:$0xff]
        %v681 = vld [vmem:[#allocation9 + $0x3b0] sm:$0xff]
        %v682 = vld [vmem:[#allocation9 + $0x3b8] sm:$0xff]
        %v683 = vld [vmem:[#allocation9 + $0x3c0] sm:$0xff]
        %v684 = vld [vmem:[#allocation9 + $0x3c8] sm:$0xff]
        %v685 = vld [vmem:[#allocation9 + $0x3d0] sm:$0xff]
        %v686 = vld [vmem:[#allocation9 + $0x3d8] sm:$0xff]
        %v687 = vld [vmem:[#allocation9 + $0x3e0] sm:$0xff]
        %v688 = vld [vmem:[#allocation9 + $0x3e8] sm:$0xff]
        %v689 = vld [vmem:[#allocation9 + $0x3f0] sm:$0xff]
        %v690 = vld [vmem:[#allocation9 + $0x3f8] sm:$0xff]
        %v691 = vld [vmem:[#allocation9 + $0x400] sm:$0xff]
        %v692 = vld [vmem:[#allocation9 + $0x408] sm:$0xff]
        %v693 = vld [vmem:[#allocation9 + $0x410] sm:$0xff]
        %v694 = vld [vmem:[#allocation9 + $0x418] sm:$0xff]
        %v695 = vld [vmem:[#allocation9 + $0x420] sm:$0xff]
        %v696 = vld [vmem:[#allocation9 + $0x428] sm:$0xff]
        %v697 = vld [vmem:[#allocation9 + $0x430] sm:$0xff]
        %v698 = vld [vmem:[#allocation9 + $0x438] sm:$0xff]
        %v699 = vld [vmem:[#allocation9 + $0x440] sm:$0xff]
        %v700 = vld [vmem:[#allocation9 + $0x448] sm:$0xff]
        %v701 = vld [vmem:[#allocation9 + $0x450] sm:$0xff]
        %v702 = vld [vmem:[#allocation9 + $0x458] sm:$0xff]
        %v703 = vld [vmem:[#allocation9 + $0x460] sm:$0xff]
        %v704 = vld [vmem:[#allocation9 + $0x468] sm:$0xff]
        %v705 = vld [vmem:[#allocation9 + $0x470] sm:$0xff]
        %v706 = vld [vmem:[#allocation9 + $0x478] sm:$0xff]
        %v707 = vld [vmem:[#allocation9 + $0x480] sm:$0xff]
        %v708 = vld [vmem:[#allocation9 + $0x488] sm:$0xff]
        %v709 = vld [vmem:[#allocation9 + $0x490] sm:$0xff]
        %v710 = vld [vmem:[#allocation9 + $0x498] sm:$0xff]
        %v711 = vld [vmem:[#allocation9 + $0x4a0] sm:$0xff]
        %v712 = vld [vmem:[#allocation9 + $0x4a8] sm:$0xff]
        %v713 = vld [vmem:[#allocation9 + $0x4b0] sm:$0xff]
        %v714 = vld [vmem:[#allocation9 + $0x4b8] sm:$0xff]
        %v715 = vld [vmem:[#allocation9 + $0x4c0] sm:$0xff]
        %v716 = vld [vmem:[#allocation9 + $0x4c8] sm:$0xff]
        %v717 = vld [vmem:[#allocation9 + $0x4d0] sm:$0xff]
        %v718 = vld [vmem:[#allocation9 + $0x4d8] sm:$0xff]
        %v719 = vld [vmem:[#allocation9 + $0x4e0] sm:$0xff]
        %v720 = vld [vmem:[#allocation9 + $0x4e8] sm:$0xff]
        %v721 = vld [vmem:[#allocation9 + $0x4f0] sm:$0xff]
        %v722 = vld [vmem:[#allocation9 + $0x4f8] sm:$0xff]
        %v723 = vld [vmem:[#allocation9 + $0x500] sm:$0xff]
        %v724 = vld [vmem:[#allocation9 + $0x508] sm:$0xff]
        %v725 = vld [vmem:[#allocation9 + $0x510] sm:$0xff]
        %v726 = vld [vmem:[#allocation9 + $0x518] sm:$0xff]
        %v727 = vld [vmem:[#allocation9 + $0x520] sm:$0xff]
        %v728 = vld [vmem:[#allocation9 + $0x528] sm:$0xff]
        %v729 = vld [vmem:[#allocation9 + $0x530] sm:$0xff]
        %v730 = vld [vmem:[#allocation9 + $0x538] sm:$0xff]
        %v731 = vld [vmem:[#allocation9 + $0x540] sm:$0xff]
        %v732 = vld [vmem:[#allocation9 + $0x548] sm:$0xff]
        %v733 = vld [vmem:[#allocation9 + $0x550] sm:$0xff]
        %v734 = vld [vmem:[#allocation9 + $0x558] sm:$0xff]
        %v735 = vld [vmem:[#allocation9 + $0x560] sm:$0xff]
        %v736 = vld [vmem:[#allocation9 + $0x568] sm:$0xff]
        %v737 = vld [vmem:[#allocation9 + $0x570] sm:$0xff]
        %v738 = vld [vmem:[#allocation9 + $0x578] sm:$0xff]
        %v739 = vld [vmem:[#allocation9 + $0x580] sm:$0xff]
        %v740 = vld [vmem:[#allocation9 + $0x588] sm:$0xff]
        %v741 = vld [vmem:[#allocation9 + $0x590] sm:$0xff]
        %v742 = vld [vmem:[#allocation9 + $0x598] sm:$0xff]
        %v743 = vld [vmem:[#allocation9 + $0x5a0] sm:$0xff]
        %v744 = vld [vmem:[#allocation9 + $0x5a8] sm:$0xff]
        %v745 = vld [vmem:[#allocation9 + $0x5b0] sm:$0xff]
        %v746 = vld [vmem:[#allocation9 + $0x5b8] sm:$0xff]
        %v747 = vld [vmem:[#allocation9 + $0x5c0] sm:$0xff]
        %v748 = vld [vmem:[#allocation9 + $0x5c8] sm:$0xff]
        %v749 = vld [vmem:[#allocation9 + $0x5d0] sm:$0xff]
        %v750 = vld [vmem:[#allocation9 + $0x5d8] sm:$0xff]
        %v751 = vld [vmem:[#allocation9 + $0x5e0] sm:$0xff]
        %v752 = vld [vmem:[#allocation9 + $0x5e8] sm:$0xff]
        %v753 = vld [vmem:[#allocation9 + $0x5f0] sm:$0xff]
        %v754 = vld [vmem:[#allocation9 + $0x5f8] sm:$0xff]
        %v755 = vld [vmem:[#allocation9 + $0x600] sm:$0xff]
        %v756 = vld [vmem:[#allocation9 + $0x608] sm:$0xff]
        %v757 = vld [vmem:[#allocation9 + $0x610] sm:$0xff]
        %v758 = vld [vmem:[#allocation9 + $0x618] sm:$0xff]
        %v759 = vld [vmem:[#allocation9 + $0x620] sm:$0xff]
        %v760 = vld [vmem:[#allocation9 + $0x628] sm:$0xff]
        %v761 = vld [vmem:[#allocation9 + $0x630] sm:$0xff]
        %v762 = vld [vmem:[#allocation9 + $0x638] sm:$0xff]
        %v763 = vld [vmem:[#allocation9 + $0x640] sm:$0xff]
        %v764 = vld [vmem:[#allocation9 + $0x648] sm:$0xff]
        %v765 = vld [vmem:[#allocation9 + $0x650] sm:$0xff]
        %v766 = vld [vmem:[#allocation9 + $0x658] sm:$0xff]
        %v767 = vld [vmem:[#allocation9 + $0x660] sm:$0xff]
        %v768 = vld [vmem:[#allocation9 + $0x668] sm:$0xff]
        %v769 = vld [vmem:[#allocation9 + $0x670] sm:$0xff]
        %v770 = vld [vmem:[#allocation9 + $0x678] sm:$0xff]
        %v771 = vld [vmem:[#allocation9 + $0x680] sm:$0xff]
        %v772 = vld [vmem:[#allocation9 + $0x688] sm:$0xff]
        %v773 = vld [vmem:[#allocation9 + $0x690] sm:$0xff]
        %v774 = vld [vmem:[#allocation9 + $0x698] sm:$0xff]
        %v775 = vld [vmem:[#allocation9 + $0x6a0] sm:$0xff]
        %v776 = vld [vmem:[#allocation9 + $0x6a8] sm:$0xff]
        %v777 = vld [vmem:[#allocation9 + $0x6b0] sm:$0xff]
        %v778 = vld [vmem:[#allocation9 + $0x6b8] sm:$0xff]
        %v779 = vld [vmem:[#allocation9 + $0x6c0] sm:$0xff]
        %v780 = vld [vmem:[#allocation9 + $0x6c8] sm:$0xff]
        %v781 = vld [vmem:[#allocation9 + $0x6d0] sm:$0xff]
        %v782 = vld [vmem:[#allocation9 + $0x6d8] sm:$0xff]
        %v783 = vld [vmem:[#allocation9 + $0x6e0] sm:$0xff]
        %v784 = vld [vmem:[#allocation9 + $0x6e8] sm:$0xff]
        %v785 = vld [vmem:[#allocation9 + $0x6f0] sm:$0xff]
        %v786 = vld [vmem:[#allocation9 + $0x6f8] sm:$0xff]
        %v787 = vld [vmem:[#allocation9 + $0x700] sm:$0xff]
        %v788 = vld [vmem:[#allocation9 + $0x708] sm:$0xff]
        %v789 = vld [vmem:[#allocation9 + $0x710] sm:$0xff]
        %v790 = vld [vmem:[#allocation9 + $0x718] sm:$0xff]
        %v791 = vld [vmem:[#allocation9 + $0x720] sm:$0xff]
        %v792 = vld [vmem:[#allocation9 + $0x728] sm:$0xff]
        %v793 = vld [vmem:[#allocation9 + $0x730] sm:$0xff]
        %v794 = vld [vmem:[#allocation9 + $0x738] sm:$0xff]
        %v795 = vld [vmem:[#allocation9 + $0x740] sm:$0xff]
        %v796 = vld [vmem:[#allocation9 + $0x748] sm:$0xff]
        %v797 = vld [vmem:[#allocation9 + $0x750] sm:$0xff]
        %v798 = vld [vmem:[#allocation9 + $0x758] sm:$0xff]
        %v799 = vld [vmem:[#allocation9 + $0x760] sm:$0xff]
        %v800 = vld [vmem:[#allocation9 + $0x768] sm:$0xff]
        %v801 = vld [vmem:[#allocation9 + $0x770] sm:$0xff]
        %v802 = vld [vmem:[#allocation9 + $0x778] sm:$0xff]
        %v803 = vld [vmem:[#allocation9 + $0x780] sm:$0xff]
        %v804 = vld [vmem:[#allocation9 + $0x788] sm:$0xff]
        %v805 = vld [vmem:[#allocation9 + $0x790] sm:$0xff]
        %v806 = vld [vmem:[#allocation9 + $0x798] sm:$0xff]
        %v807 = vld [vmem:[#allocation9 + $0x7a0] sm:$0xff]
        %v808 = vld [vmem:[#allocation9 + $0x7a8] sm:$0xff]
        %v809 = vld [vmem:[#allocation9 + $0x7b0] sm:$0xff]
        %v810 = vld [vmem:[#allocation9 + $0x7b8] sm:$0xff]
        %v811 = vld [vmem:[#allocation9 + $0x7c0] sm:$0xff]
        %v812 = vld [vmem:[#allocation9 + $0x7c8] sm:$0xff]
        %v813 = vld [vmem:[#allocation9 + $0x7d0] sm:$0xff]
        %v814 = vld [vmem:[#allocation9 + $0x7d8] sm:$0xff]
        %v815 = vld [vmem:[#allocation9 + $0x7e0] sm:$0xff]
        %v816 = vld [vmem:[#allocation9 + $0x7e8] sm:$0xff]
        %v817 = vld [vmem:[#allocation9 + $0x7f0] sm:$0xff]
        %v818 = vld [vmem:[#allocation9 + $0x7f8] sm:$0xff]
        %v819 = vld [vmem:[%s3] sm:$0x3]
        %821 = vset.pattern.permute.xlu0 0
        %822 = vperm.xlu0 %821, %v819
        %v823 = vpop.permute.xlu0 %822
        %825 = vmatprep.subr.mxu0 %v564
        %826 = vmatpush1.msra.mxu0 %v563
        %827 = vmatprep.subr.mxu0 %v572
        %828 = vmatpush1.msra.mxu0 %v571
        %829 = vmatprep.subr.mxu0 %v580
        %830 = vmatpush1.msra.mxu0 %v579
        %831 = vmatprep.subr.mxu0 %v588
        %832 = vmatpush1.msra.mxu0 %v587
        %833 = vmatprep.subr.mxu0 %v596
        %834 = vmatpush1.msra.mxu0 %v595
        %835 = vmatprep.subr.mxu0 %v604
        %836 = vmatpush1.msra.mxu0 %v603
        %837 = vmatprep.subr.mxu0 %v612
        %838 = vmatpush1.msra.mxu0 %v611
        %839 = vmatprep.subr.mxu0 %v620
        %840 = vmatpush1.msra.mxu0 %v619
        %841 = vmatprep.subr.mxu0 %v628
        %842 = vmatpush1.msra.mxu0 %v627
        %843 = vmatprep.subr.mxu0 %v636
        %844 = vmatpush1.msra.mxu0 %v635
        %845 = vmatprep.subr.mxu0 %v644
        %846 = vmatpush1.msra.mxu0 %v643
        %847 = vmatprep.subr.mxu0 %v652
        %848 = vmatpush1.msra.mxu0 %v651
        %849 = vmatprep.subr.mxu0 %v660
        %850 = vmatpush1.msra.mxu0 %v659
        %851 = vmatprep.subr.mxu0 %v668
        %852 = vmatpush1.msra.mxu0 %v667
        %853 = vmatprep.subr.mxu0 %v676
        %854 = vmatpush1.msra.mxu0 %v675
        %855 = vmatprep.subr.mxu0 %v684
        %856 = vmatpush1.msra.mxu0 %v683
        %857 = vmatprep.subr.mxu0 %v692
        %858 = vmatpush1.msra.mxu0 %v691
        %859 = vmatprep.subr.mxu0 %v700
        %860 = vmatpush1.msra.mxu0 %v699
        %861 = vmatprep.subr.mxu0 %v708
        %862 = vmatpush1.msra.mxu0 %v707
        %863 = vmatprep.subr.mxu0 %v716
        %864 = vmatpush1.msra.mxu0 %v715
        %865 = vmatprep.subr.mxu0 %v724
        %866 = vmatpush1.msra.mxu0 %v723
        %867 = vmatprep.subr.mxu0 %v732
        %868 = vmatpush1.msra.mxu0 %v731
        %869 = vmatprep.subr.mxu0 %v740
        %870 = vmatpush1.msra.mxu0 %v739
        %871 = vmatprep.subr.mxu0 %v748
        %872 = vmatpush1.msra.mxu0 %v747
        %873 = vmatprep.subr.mxu0 %v756
        %874 = vmatpush1.msra.mxu0 %v755
        %875 = vmatprep.subr.mxu0 %v764
        %876 = vmatpush1.msra.mxu0 %v763
        %877 = vmatprep.subr.mxu0 %v772
        %878 = vmatpush1.msra.mxu0 %v771
        %879 = vmatprep.subr.mxu0 %v780
        %880 = vmatpush1.msra.mxu0 %v779
        %881 = vmatprep.subr.mxu0 %v788
        %882 = vmatpush1.msra.mxu0 %v787
        %883 = vmatprep.subr.mxu0 %v796
        %884 = vmatpush1.msra.mxu0 %v795
        %885 = vmatprep.subr.mxu0 %v804
        %886 = vmatpush1.msra.mxu0 %v803
        %887 = vmatprep.subr.mxu0 %v812
        %888 = vmatpush1.msra.mxu0 %v811
        %889 = vmatprep.mubr.f32.mxu0 %v561
        %890 = vmatmul.mubr.f32.gmra.mrb[0].mxu0 %v559
        %v891 = vpop.f32.mrb[0].mxu0
        %v892 = vadd.f32 %v823, %v891
        %v893 = vpop.f32.mrb[0].mxu0
        %v894 = vadd.f32 %v823, %v893
        %895 = vdwg.mxu0
        %896 = vmatprep.subr.mxu0 %v566
        %897 = vmatpush1.msra.mxu0 %v565
        %898 = vmatprep.subr.mxu0 %v574
        %899 = vmatpush1.msra.mxu0 %v573
        %900 = vmatprep.subr.mxu0 %v582
        %901 = vmatpush1.msra.mxu0 %v581
        %902 = vmatprep.subr.mxu0 %v590
        %903 = vmatpush1.msra.mxu0 %v589
        %904 = vmatprep.subr.mxu0 %v598
        %905 = vmatpush1.msra.mxu0 %v597
        %906 = vmatprep.subr.mxu0 %v606
        %907 = vmatpush1.msra.mxu0 %v605
        %908 = vmatprep.subr.mxu0 %v614
        %909 = vmatpush1.msra.mxu0 %v613
        %910 = vmatprep.subr.mxu0 %v622
        %911 = vmatpush1.msra.mxu0 %v621
        %912 = vmatprep.subr.mxu0 %v630
        %913 = vmatpush1.msra.mxu0 %v629
        %914 = vmatprep.subr.mxu0 %v638
        %915 = vmatpush1.msra.mxu0 %v637
        %916 = vmatprep.subr.mxu0 %v646
        %917 = vmatpush1.msra.mxu0 %v645
        %918 = vmatprep.subr.mxu0 %v654
        %919 = vmatpush1.msra.mxu0 %v653
        %920 = vmatprep.subr.mxu0 %v662
        %921 = vmatpush1.msra.mxu0 %v661
        %922 = vmatprep.subr.mxu0 %v670
        %923 = vmatpush1.msra.mxu0 %v669
        %924 = vmatprep.subr.mxu0 %v678
        %925 = vmatpush1.msra.mxu0 %v677
        %926 = vmatprep.subr.mxu0 %v686
        %927 = vmatpush1.msra.mxu0 %v685
        %928 = vmatprep.subr.mxu0 %v694
        %929 = vmatpush1.msra.mxu0 %v693
        %930 = vmatprep.subr.mxu0 %v702
        %931 = vmatpush1.msra.mxu0 %v701
        %932 = vmatprep.subr.mxu0 %v710
        %933 = vmatpush1.msra.mxu0 %v709
        %934 = vmatprep.subr.mxu0 %v718
        %935 = vmatpush1.msra.mxu0 %v717
        %936 = vmatprep.subr.mxu0 %v726
        %937 = vmatpush1.msra.mxu0 %v725
        %938 = vmatprep.subr.mxu0 %v734
        %939 = vmatpush1.msra.mxu0 %v733
        %940 = vmatprep.subr.mxu0 %v742
        %941 = vmatpush1.msra.mxu0 %v741
        %942 = vmatprep.subr.mxu0 %v750
        %943 = vmatpush1.msra.mxu0 %v749
        %944 = vmatprep.subr.mxu0 %v758
        %945 = vmatpush1.msra.mxu0 %v757
        %946 = vmatprep.subr.mxu0 %v766
        %947 = vmatpush1.msra.mxu0 %v765
        %948 = vmatprep.subr.mxu0 %v774
        %949 = vmatpush1.msra.mxu0 %v773
        %950 = vmatprep.subr.mxu0 %v782
        %951 = vmatpush1.msra.mxu0 %v781
        %952 = vmatprep.subr.mxu0 %v790
        %953 = vmatpush1.msra.mxu0 %v789
        %954 = vmatprep.subr.mxu0 %v798
        %955 = vmatpush1.msra.mxu0 %v797
        %956 = vmatprep.subr.mxu0 %v806
        %957 = vmatpush1.msra.mxu0 %v805
        %958 = vmatprep.subr.mxu0 %v814
        %959 = vmatpush1.msra.mxu0 %v813
        %960 = vmatprep.mubr.f32.mxu0 %v561
        %961 = vmatmul.mubr.f32.gmra.mrb[0].mxu0 %v559
        %v962 = vpop.f32.mrb[0].mxu0
        %v963 = vadd.f32 %v823, %v962
        %v964 = vpop.f32.mrb[0].mxu0
        %v965 = vadd.f32 %v823, %v964
        %966 = vdwg.mxu0
        %967 = vmatprep.subr.mxu0 %v568
        %968 = vmatpush1.msra.mxu0 %v567
        %969 = vmatprep.subr.mxu0 %v576
        %970 = vmatpush1.msra.mxu0 %v575
        %971 = vmatprep.subr.mxu0 %v584
        %972 = vmatpush1.msra.mxu0 %v583
        %973 = vmatprep.subr.mxu0 %v592
        %974 = vmatpush1.msra.mxu0 %v591
        %975 = vmatprep.subr.mxu0 %v600
        %976 = vmatpush1.msra.mxu0 %v599
        %977 = vmatprep.subr.mxu0 %v608
        %978 = vmatpush1.msra.mxu0 %v607
        %979 = vmatprep.subr.mxu0 %v616
        %980 = vmatpush1.msra.mxu0 %v615
        %981 = vmatprep.subr.mxu0 %v624
        %982 = vmatpush1.msra.mxu0 %v623
        %983 = vmatprep.subr.mxu0 %v632
        %984 = vmatpush1.msra.mxu0 %v631
        %985 = vmatprep.subr.mxu0 %v640
        %986 = vmatpush1.msra.mxu0 %v639
        %987 = vmatprep.subr.mxu0 %v648
        %988 = vmatpush1.msra.mxu0 %v647
        %989 = vmatprep.subr.mxu0 %v656
        %990 = vmatpush1.msra.mxu0 %v655
        %991 = vmatprep.subr.mxu0 %v664
        %992 = vmatpush1.msra.mxu0 %v663
        %993 = vmatprep.subr.mxu0 %v672
        %994 = vmatpush1.msra.mxu0 %v671
        %995 = vmatprep.subr.mxu0 %v680
        %996 = vmatpush1.msra.mxu0 %v679
        %997 = vmatprep.subr.mxu0 %v688
        %998 = vmatpush1.msra.mxu0 %v687
        %999 = vmatprep.subr.mxu0 %v696
        %1000 = vmatpush1.msra.mxu0 %v695
        %1001 = vmatprep.subr.mxu0 %v704
        %1002 = vmatpush1.msra.mxu0 %v703
        %1003 = vmatprep.subr.mxu0 %v712
        %1004 = vmatpush1.msra.mxu0 %v711
        %1005 = vmatprep.subr.mxu0 %v720
        %1006 = vmatpush1.msra.mxu0 %v719
        %1007 = vmatprep.subr.mxu0 %v728
        %1008 = vmatpush1.msra.mxu0 %v727
        %1009 = vmatprep.subr.mxu0 %v736
        %1010 = vmatpush1.msra.mxu0 %v735
        %1011 = vmatprep.subr.mxu0 %v744
        %1012 = vmatpush1.msra.mxu0 %v743
        %1013 = vmatprep.subr.mxu0 %v752
        %1014 = vmatpush1.msra.mxu0 %v751
        %1015 = vmatprep.subr.mxu0 %v760
        %1016 = vmatpush1.msra.mxu0 %v759
        %1017 = vmatprep.subr.mxu0 %v768
        %1018 = vmatpush1.msra.mxu0 %v767
        %1019 = vmatprep.subr.mxu0 %v776
        %1020 = vmatpush1.msra.mxu0 %v775
        %1021 = vmatprep.subr.mxu0 %v784
        %1022 = vmatpush1.msra.mxu0 %v783
        %1023 = vmatprep.subr.mxu0 %v792
        %1024 = vmatpush1.msra.mxu0 %v791
        %1025 = vmatprep.subr.mxu0 %v800
        %1026 = vmatpush1.msra.mxu0 %v799
        %1027 = vmatprep.subr.mxu0 %v808
        %1028 = vmatpush1.msra.mxu0 %v807
        %1029 = vmatprep.subr.mxu0 %v816
        %1030 = vmatpush1.msra.mxu0 %v815
        %1031 = vmatprep.mubr.f32.mxu0 %v561
        %1032 = vmatmul.mubr.f32.gmra.mrb[0].mxu0 %v559
        %v1033 = vpop.f32.mrb[0].mxu0
        %v1034 = vadd.f32 %v823, %v1033
        %v1035 = vpop.f32.mrb[0].mxu0
        %v1036 = vadd.f32 %v823, %v1035
        %1037 = vdwg.mxu0
        %1038 = vmatprep.subr.mxu0 %v570
        %1039 = vmatpush1.msra.mxu0 %v569
        %1040 = vmatprep.subr.mxu0 %v578
        %1041 = vmatpush1.msra.mxu0 %v577
        %1042 = vmatprep.subr.mxu0 %v586
        %1043 = vmatpush1.msra.mxu0 %v585
        %1044 = vmatprep.subr.mxu0 %v594
        %1045 = vmatpush1.msra.mxu0 %v593
        %1046 = vmatprep.subr.mxu0 %v602
        %1047 = vmatpush1.msra.mxu0 %v601
        %1048 = vmatprep.subr.mxu0 %v610
        %1049 = vmatpush1.msra.mxu0 %v609
        %1050 = vmatprep.subr.mxu0 %v618
        %1051 = vmatpush1.msra.mxu0 %v617
        %1052 = vmatprep.subr.mxu0 %v626
        %1053 = vmatpush1.msra.mxu0 %v625
        %1054 = vmatprep.subr.mxu0 %v634
        %1055 = vmatpush1.msra.mxu0 %v633
        %1056 = vmatprep.subr.mxu0 %v642
        %1057 = vmatpush1.msra.mxu0 %v641
        %1058 = vmatprep.subr.mxu0 %v650
        %1059 = vmatpush1.msra.mxu0 %v649
        %1060 = vmatprep.subr.mxu0 %v658
        %1061 = vmatpush1.msra.mxu0 %v657
        %1062 = vmatprep.subr.mxu0 %v666
        %1063 = vmatpush1.msra.mxu0 %v665
        %1064 = vmatprep.subr.mxu0 %v674
        %1065 = vmatpush1.msra.mxu0 %v673
        %1066 = vmatprep.subr.mxu0 %v682
        %1067 = vmatpush1.msra.mxu0 %v681
        %1068 = vmatprep.subr.mxu0 %v690
        %1069 = vmatpush1.msra.mxu0 %v689
        %1070 = vmatprep.subr.mxu0 %v698
        %1071 = vmatpush1.msra.mxu0 %v697
        %1072 = vmatprep.subr.mxu0 %v706
        %1073 = vmatpush1.msra.mxu0 %v705
        %1074 = vmatprep.subr.mxu0 %v714
        %1075 = vmatpush1.msra.mxu0 %v713
        %1076 = vmatprep.subr.mxu0 %v722
        %1077 = vmatpush1.msra.mxu0 %v721
        %1078 = vmatprep.subr.mxu0 %v730
        %1079 = vmatpush1.msra.mxu0 %v729
        %1080 = vmatprep.subr.mxu0 %v738
        %1081 = vmatpush1.msra.mxu0 %v737
        %1082 = vmatprep.subr.mxu0 %v746
        %1083 = vmatpush1.msra.mxu0 %v745
        %1084 = vmatprep.subr.mxu0 %v754
        %1085 = vmatpush1.msra.mxu0 %v753
        %1086 = vmatprep.subr.mxu0 %v762
        %1087 = vmatpush1.msra.mxu0 %v761
        %1088 = vmatprep.subr.mxu0 %v770
        %1089 = vmatpush1.msra.mxu0 %v769
        %1090 = vmatprep.subr.mxu0 %v778
        %1091 = vmatpush1.msra.mxu0 %v777
        %1092 = vmatprep.subr.mxu0 %v786
        %1093 = vmatpush1.msra.mxu0 %v785
        %1094 = vmatprep.subr.mxu0 %v794
        %1095 = vmatpush1.msra.mxu0 %v793
        %1096 = vmatprep.subr.mxu0 %v802
        %1097 = vmatpush1.msra.mxu0 %v801
        %1098 = vmatprep.subr.mxu0 %v810
        %1099 = vmatpush1.msra.mxu0 %v809
        %1100 = vmatprep.subr.mxu0 %v818
        %1101 = vmatpush1.msra.mxu0 %v817
        %1102 = vmatprep.mubr.f32.mxu0 %v561
        %1103 = vmatmul.mubr.f32.gmra.mrb[0].mxu0 %v559
        %v1104 = vpop.f32.mrb[0].mxu0
        %v1105 = vadd.f32 %v823, %v1104
        %v1106 = vpop.f32.mrb[0].mxu0
        %v1107 = vadd.f32 %v823, %v1106
        %1108 = vdwg.mxu0
        %vm1109 = vcmp.ge.f32.partialorder %v892, 0.0
        %vm1110 = vcmp.ge.f32.partialorder %v894, 0.0
        %vm1111 = vcmp.ge.f32.partialorder %v963, 0.0
        %vm1112 = vcmp.ge.f32.partialorder %v965, 0.0
        %vm1113 = vcmp.ge.f32.partialorder %v1034, 0.0
        %vm1114 = vcmp.ge.f32.partialorder %v1036, 0.0
        %vm1115 = vcmp.ge.f32.partialorder %v1105, 0.0
        %vm1116 = vcmp.ge.f32.partialorder %v1107, 0.0
        %v1117 = vmul.f32 %v892, 0.1
        %v1118 = vmul.f32 %v894, 0.1
        %v1119 = vmul.f32 %v963, 0.1
        %v1120 = vmul.f32 %v965, 0.1
        %v1121 = vmul.f32 %v1034, 0.1
        %v1122 = vmul.f32 %v1036, 0.1
        %v1123 = vmul.f32 %v1105, 0.1
        %v1124 = vmul.f32 %v1107, 0.1
        %v1125 = vsel %vm1109, %v892, %v1117
        %v1126 = vsel %vm1110, %v894, %v1118
        %v1127 = vsel %vm1111, %v963, %v1119
        %v1128 = vsel %vm1112, %v965, %v1120
        %v1129 = vsel %vm1113, %v1034, %v1121
        %v1130 = vsel %vm1114, %v1036, %v1122
        %v1131 = vsel %vm1115, %v1105, %v1123
        %v1132 = vsel %vm1116, %v1107, %v1124
        %1133 = vst [vmem:[#allocation2 + $0x8] sm:$0x3] %v1125
        %1134 = vst [vmem:[#allocation2 + $0x10] sm:$0x3] %v1126
        %1135 = vst [vmem:[#allocation2 + $0x18] sm:$0x3] %v1127
        %1136 = vst [vmem:[#allocation2 + $0x20] sm:$0x3] %v1128
        %1137 = vst [vmem:[#allocation2 + $0x28] sm:$0x3] %v1129
        %1138 = vst [vmem:[#allocation2 + $0x30] sm:$0x3] %v1130
        %1139 = vst [vmem:[#allocation2 + $0x38] sm:$0x3] %v1131
        %1140 = vst [vmem:[#allocation2 + $0x40] sm:$0x3] %v1132
        %v1141 = vld [vmem:[%s393] sm:$0xff]
        %v1142 = vld [vmem:[%s393 + $0x8] sm:$0xff]
        %v1145 = vcombine.high %v1141, %v1141
        %v1147 = vunpack.c.l.s4 1983009808
        %v1148 = vunpack.c.0.s8 %v1147
        %v1149 = vlaneseq
        %v1150 = vshrl.u32 %v1149, 7
        %v1151 = vsub.s32 %v1148, %v1150
        %v1152 = vrot.slane %v1141, %v1151
        %v1154 = vunpack.c.l.s4 1983009808
        %v1155 = vunpack.c.0.s8 %v1154
        %v1156 = vlaneseq
        %v1157 = vshrl.u32 %v1156, 7
        %v1158 = vsub.s32 %v1155, %v1157
        %v1159 = vrot.slane %v1145, %v1158
        %v1160 = vcombine.high %v1152, %v1152
        %v1161 = vcombine.high %v1159, %v1159
        %v1162 = vcombine.high %v1142, %v1142
        %v1164 = vunpack.c.l.s4 1983009808
        %v1165 = vunpack.c.0.s8 %v1164
        %v1166 = vlaneseq
        %v1167 = vshrl.u32 %v1166, 7
        %v1168 = vsub.s32 %v1165, %v1167
        %v1169 = vrot.slane %v1142, %v1168
        %v1171 = vunpack.c.l.s4 1983009808
        %v1172 = vunpack.c.0.s8 %v1171
        %v1173 = vlaneseq
        %v1174 = vshrl.u32 %v1173, 7
        %v1175 = vsub.s32 %v1172, %v1174
        %v1176 = vrot.slane %v1162, %v1175
        %v1177 = vcombine.high %v1169, %v1169
        %v1178 = vcombine.high %v1176, %v1176
        %1187 = vst [vmem:[#allocation2 + $0x58] sm:$0x3] %v1152
        %1188 = vst [vmem:[#allocation2 + $0x60] sm:$0x3] %v1160
        %1189 = vst [vmem:[#allocation2 + $0x68] sm:$0x3] %v1159
        %1190 = vst [vmem:[#allocation2 + $0x70] sm:$0x3] %v1161
        %1191 = vst [vmem:[#allocation2 + $0x78] sm:$0x3] %v1169
        %1192 = vst [vmem:[#allocation2 + $0x80] sm:$0x3] %v1177
        %1193 = vst [vmem:[#allocation2 + $0x88] sm:$0x3] %v1176
        %1194 = vst [vmem:[#allocation2 + $0x90] sm:$0x3] %v1178
        %v1195 = vld [vmem:[#allocation2] sm:$0xff]
        %v1196 = vld [vmem:[#allocation2 + $0x8] sm:$0xff]
        %v1197 = vld [vmem:[#allocation2 + $0x10] sm:$0xff]
        %v1198 = vld [vmem:[#allocation2 + $0x18] sm:$0xff]
        %v1199 = vld [vmem:[#allocation2 + $0x20] sm:$0xff]
        %v1200 = vld [vmem:[#allocation2 + $0x28] sm:$0xff]
        %v1201 = vld [vmem:[#allocation2 + $0x30] sm:$0xff]
        %v1202 = vld [vmem:[#allocation2 + $0x38] sm:$0xff]
        %v1203 = vld [vmem:[#allocation2 + $0x40] sm:$0xff]
        %v1204 = vld [vmem:[#allocation2 + $0x50] sm:$0xff]
        %v1205 = vld [vmem:[#allocation2 + $0x58] sm:$0xff]
        %v1206 = vld [vmem:[#allocation2 + $0x60] sm:$0xff]
        %v1207 = vld [vmem:[#allocation2 + $0x68] sm:$0xff]
        %v1208 = vld [vmem:[#allocation2 + $0x70] sm:$0xff]
        %v1209 = vld [vmem:[#allocation2 + $0x78] sm:$0xff]
        %v1210 = vld [vmem:[#allocation2 + $0x80] sm:$0xff]
        %v1211 = vld [vmem:[#allocation2 + $0x88] sm:$0xff]
        %v1212 = vld [vmem:[#allocation2 + $0x90] sm:$0xff]
        %v1213 = vlaneseq
        %v1214 = vshrl.u32 %v1213, 7
        %v1215 = vsub.s32 0, %v1214
        %v1216 = vrot.slane %v463, %v1215
        %v1217 = vlaneseq
        %v1218 = vshrl.u32 %v1217, 7
        %v1219 = vsub.s32 0, %v1218
        %v1220 = vrot.slane %v464, %v1219
        %v1221 = vlaneseq
        %v1222 = vshrl.u32 %v1221, 7
        %v1223 = vsub.s32 0, %v1222
        %v1224 = vrot.slane %v465, %v1223
        %v1225 = vlaneseq
        %v1226 = vshrl.u32 %v1225, 7
        %v1227 = vsub.s32 0, %v1226
        %v1228 = vrot.slane %v466, %v1227
        %v1229 = vlaneseq
        %v1230 = vshrl.u32 %v1229, 7
        %v1231 = vsub.s32 0, %v1230
        %v1232 = vrot.slane %v467, %v1231
        %v1233 = vlaneseq
        %v1234 = vshrl.u32 %v1233, 7
        %v1235 = vsub.s32 0, %v1234
        %v1236 = vrot.slane %v468, %v1235
        %v1237 = vlaneseq
        %v1238 = vshrl.u32 %v1237, 7
        %v1239 = vsub.s32 0, %v1238
        %v1240 = vrot.slane %v469, %v1239
        %v1241 = vlaneseq
        %v1242 = vshrl.u32 %v1241, 7
        %v1243 = vsub.s32 0, %v1242
        %v1244 = vrot.slane %v470, %v1243
        %1253 = vrot.lane.b32.xlu0 %v1216, 95
        %v1254 = vpop.permute.xlu0 %1253
        %1255 = vrot.lane.b32.xlu0 %v1220, 95
        %v1256 = vpop.permute.xlu0 %1255
        %1257 = vrot.lane.b32.xlu0 %v1224, 95
        %v1258 = vpop.permute.xlu0 %1257
        %1259 = vrot.lane.b32.xlu0 %v1228, 95
        %v1260 = vpop.permute.xlu0 %1259
        %1261 = vrot.lane.b32.xlu0 %v1232, 95
        %v1262 = vpop.permute.xlu0 %1261
        %1263 = vrot.lane.b32.xlu0 %v1236, 95
        %v1264 = vpop.permute.xlu0 %1263
        %1265 = vrot.lane.b32.xlu0 %v1240, 95
        %v1266 = vpop.permute.xlu0 %1265
        %1267 = vrot.lane.b32.xlu0 %v1244, 95
        %v1268 = vpop.permute.xlu0 %1267
        %vm1269 = vcmask 777216
        %v1270 = vsel %vm1269, %v1254, %v1256
        %v1271 = vsel %vm1269, %v1256, %v1258
        %v1272 = vsel %vm1269, %v1258, %v1260
        %v1273 = vsel %vm1269, %v1260, %v1262
        %v1274 = vsel %vm1269, %v1262, %v1264
        %v1275 = vsel %vm1269, %v1264, %v1266
        %v1276 = vsel %vm1269, %v1266, %v1268
        %v1286 = vmul.f32 %v1195, %v1254
        %v1287 = vmul.f32 %v1196, %v1270
        %v1288 = vmul.f32 %v1197, %v1271
        %v1289 = vmul.f32 %v1198, %v1272
        %v1290 = vmul.f32 %v1199, %v1273
        %v1291 = vmul.f32 %v1200, %v1274
        %v1292 = vmul.f32 %v1201, %v1275
        %v1293 = vmul.f32 %v1202, %v1276
        %v1294 = vmul.f32 %v1203, %v1268
        %v1295 = vmul.f32 %v1204, %v1254
        %v1296 = vmul.f32 %v1205, %v1270
        %v1297 = vmul.f32 %v1206, %v1271
        %v1298 = vmul.f32 %v1207, %v1272
        %v1299 = vmul.f32 %v1208, %v1273
        %v1300 = vmul.f32 %v1209, %v1274
        %v1301 = vmul.f32 %v1210, %v1275
        %v1302 = vmul.f32 %v1211, %v1276
        %v1303 = vmul.f32 %v1212, %v1268
        %1322 = vrot.lane.b32.xlu0 %v1286, 33
        %v1323 = vpop.permute.xlu0 %1322
        %1324 = vrot.lane.b32.xlu0 %v1287, 33
        %v1325 = vpop.permute.xlu0 %1324
        %1326 = vrot.lane.b32.xlu0 %v1288, 33
        %v1327 = vpop.permute.xlu0 %1326
        %1328 = vrot.lane.b32.xlu0 %v1289, 33
        %v1329 = vpop.permute.xlu0 %1328
        %1330 = vrot.lane.b32.xlu0 %v1290, 33
        %v1331 = vpop.permute.xlu0 %1330
        %1332 = vrot.lane.b32.xlu0 %v1291, 33
        %v1333 = vpop.permute.xlu0 %1332
        %1334 = vrot.lane.b32.xlu0 %v1292, 33
        %v1335 = vpop.permute.xlu0 %1334
        %1336 = vrot.lane.b32.xlu0 %v1293, 33
        %v1337 = vpop.permute.xlu0 %1336
        %1338 = vrot.lane.b32.xlu0 %v1294, 33
        %v1339 = vpop.permute.xlu0 %1338
        %1340 = vrot.lane.b32.xlu0 %v1295, 33
        %v1341 = vpop.permute.xlu0 %1340
        %1342 = vrot.lane.b32.xlu0 %v1296, 33
        %v1343 = vpop.permute.xlu0 %1342
        %1344 = vrot.lane.b32.xlu0 %v1297, 33
        %v1345 = vpop.permute.xlu0 %1344
        %1346 = vrot.lane.b32.xlu0 %v1298, 33
        %v1347 = vpop.permute.xlu0 %1346
        %1348 = vrot.lane.b32.xlu0 %v1299, 33
        %v1349 = vpop.permute.xlu0 %1348
        %1350 = vrot.lane.b32.xlu0 %v1300, 33
        %v1351 = vpop.permute.xlu0 %1350
        %1352 = vrot.lane.b32.xlu0 %v1301, 33
        %v1353 = vpop.permute.xlu0 %1352
        %1354 = vrot.lane.b32.xlu0 %v1302, 33
        %v1355 = vpop.permute.xlu0 %1354
        %1356 = vrot.lane.b32.xlu0 %v1303, 33
        %v1357 = vpop.permute.xlu0 %1356
        %vm1358 = vcmask 269312
        %v1359 = vsel %vm1358, %v1323, %v1325
        %v1360 = vsel %vm1358, %v1325, %v1327
        %v1361 = vsel %vm1358, %v1327, %v1329
        %v1362 = vsel %vm1358, %v1329, %v1331
        %v1363 = vsel %vm1358, %v1331, %v1333
        %v1364 = vsel %vm1358, %v1333, %v1335
        %v1365 = vsel %vm1358, %v1335, %v1337
        %v1366 = vsel %vm1358, %v1337, %v1339
        %v1367 = vsel %vm1358, %v1341, %v1343
        %v1368 = vsel %vm1358, %v1343, %v1345
        %v1369 = vsel %vm1358, %v1345, %v1347
        %v1370 = vsel %vm1358, %v1347, %v1349
        %v1371 = vsel %vm1358, %v1349, %v1351
        %v1372 = vsel %vm1358, %v1351, %v1353
        %v1373 = vsel %vm1358, %v1353, %v1355
        %v1374 = vsel %vm1358, %v1355, %v1357
        %1391 = vst [vmem:[#allocation3] sm:$0xff] %v1359
        %1392 = vst [vmem:[#allocation3 + $0x8] sm:$0xff] %v1360
        %1393 = vst [vmem:[#allocation3 + $0x10] sm:$0xff] %v1361
        %1394 = vst [vmem:[#allocation3 + $0x18] sm:$0xff] %v1362
        %1395 = vst [vmem:[#allocation3 + $0x20] sm:$0xff] %v1363
        %1396 = vst [vmem:[#allocation3 + $0x28] sm:$0xff] %v1364
        %1397 = vst [vmem:[#allocation3 + $0x30] sm:$0xff] %v1365
        %1398 = vst [vmem:[#allocation3 + $0x38] sm:$0xff] %v1366
        %1399 = vst [vmem:[#allocation3 + $0x40] sm:$0xff] %v1367
        %1400 = vst [vmem:[#allocation3 + $0x48] sm:$0xff] %v1368
        %1401 = vst [vmem:[#allocation3 + $0x50] sm:$0xff] %v1369
        %1402 = vst [vmem:[#allocation3 + $0x58] sm:$0xff] %v1370
        %1403 = vst [vmem:[#allocation3 + $0x60] sm:$0xff] %v1371
        %1404 = vst [vmem:[#allocation3 + $0x68] sm:$0xff] %v1372
        %1405 = vst [vmem:[#allocation3 + $0x70] sm:$0xff] %v1373
        %1406 = vst [vmem:[#allocation3 + $0x78] sm:$0xff] %v1374
        %v1407 = vld [vmem:[#allocation2] sm:$0xff]
        %v1408 = vld [vmem:[#allocation2 + $0x8] sm:$0xff]
        %v1409 = vld [vmem:[#allocation2 + $0x10] sm:$0xff]
        %v1410 = vld [vmem:[#allocation2 + $0x18] sm:$0xff]
        %v1411 = vld [vmem:[#allocation2 + $0x20] sm:$0xff]
        %v1412 = vld [vmem:[#allocation2 + $0x28] sm:$0xff]
        %v1413 = vld [vmem:[#allocation2 + $0x30] sm:$0xff]
        %v1414 = vld [vmem:[#allocation2 + $0x38] sm:$0xff]
        %v1415 = vld [vmem:[#allocation2 + $0x40] sm:$0xff]
        %v1416 = vld [vmem:[#allocation2 + $0x50] sm:$0xff]
        %v1417 = vld [vmem:[#allocation2 + $0x58] sm:$0xff]
        %v1418 = vld [vmem:[#allocation2 + $0x60] sm:$0xff]
        %v1419 = vld [vmem:[#allocation2 + $0x68] sm:$0xff]
        %v1420 = vld [vmem:[#allocation2 + $0x70] sm:$0xff]
        %v1421 = vld [vmem:[#allocation2 + $0x78] sm:$0xff]
        %v1422 = vld [vmem:[#allocation2 + $0x80] sm:$0xff]
        %v1423 = vld [vmem:[#allocation2 + $0x88] sm:$0xff]
        %v1424 = vld [vmem:[#allocation2 + $0x90] sm:$0xff]
        %v1425 = vlaneseq
        %v1426 = vshrl.u32 %v1425, 7
        %v1427 = vsub.s32 1, %v1426
        %v1428 = vrot.slane %v463, %v1427
        %v1429 = vlaneseq
        %v1430 = vshrl.u32 %v1429, 7
        %v1431 = vsub.s32 1, %v1430
        %v1432 = vrot.slane %v464, %v1431
        %v1433 = vlaneseq
        %v1434 = vshrl.u32 %v1433, 7
        %v1435 = vsub.s32 1, %v1434
        %v1436 = vrot.slane %v465, %v1435
        %v1437 = vlaneseq
        %v1438 = vshrl.u32 %v1437, 7
        %v1439 = vsub.s32 1, %v1438
        %v1440 = vrot.slane %v466, %v1439
        %v1441 = vlaneseq
        %v1442 = vshrl.u32 %v1441, 7
        %v1443 = vsub.s32 1, %v1442
        %v1444 = vrot.slane %v467, %v1443
        %v1445 = vlaneseq
        %v1446 = vshrl.u32 %v1445, 7
        %v1447 = vsub.s32 1, %v1446
        %v1448 = vrot.slane %v468, %v1447
        %v1449 = vlaneseq
        %v1450 = vshrl.u32 %v1449, 7
        %v1451 = vsub.s32 1, %v1450
        %v1452 = vrot.slane %v469, %v1451
        %v1453 = vlaneseq
        %v1454 = vshrl.u32 %v1453, 7
        %v1455 = vsub.s32 1, %v1454
        %v1456 = vrot.slane %v470, %v1455
        %1465 = vrot.lane.b32.xlu0 %v1428, 96
        %v1466 = vpop.permute.xlu0 %1465
        %1467 = vrot.lane.b32.xlu0 %v1432, 96
        %v1468 = vpop.permute.xlu0 %1467
        %1469 = vrot.lane.b32.xlu0 %v1436, 96
        %v1470 = vpop.permute.xlu0 %1469
        %1471 = vrot.lane.b32.xlu0 %v1440, 96
        %v1472 = vpop.permute.xlu0 %1471
        %1473 = vrot.lane.b32.xlu0 %v1444, 96
        %v1474 = vpop.permute.xlu0 %1473
        %1475 = vrot.lane.b32.xlu0 %v1448, 96
        %v1476 = vpop.permute.xlu0 %1475
        %1477 = vrot.lane.b32.xlu0 %v1452, 96
        %v1478 = vpop.permute.xlu0 %1477
        %1479 = vrot.lane.b32.xlu0 %v1456, 96
        %v1480 = vpop.permute.xlu0 %1479
        %vm1481 = vcmask 785408
        %v1482 = vsel %vm1481, %v1466, %v1468
        %v1483 = vsel %vm1481, %v1468, %v1470
        %v1484 = vsel %vm1481, %v1470, %v1472
        %v1485 = vsel %vm1481, %v1472, %v1474
        %v1486 = vsel %vm1481, %v1474, %v1476
        %v1487 = vsel %vm1481, %v1476, %v1478
        %v1488 = vsel %vm1481, %v1478, %v1480
        %v1498 = vmul.f32 %v1407, %v1466
        %v1499 = vmul.f32 %v1408, %v1482
        %v1500 = vmul.f32 %v1409, %v1483
        %v1501 = vmul.f32 %v1410, %v1484
        %v1502 = vmul.f32 %v1411, %v1485
        %v1503 = vmul.f32 %v1412, %v1486
        %v1504 = vmul.f32 %v1413, %v1487
        %v1505 = vmul.f32 %v1414, %v1488
        %v1506 = vmul.f32 %v1415, %v1480
        %v1507 = vmul.f32 %v1416, %v1466
        %v1508 = vmul.f32 %v1417, %v1482
        %v1509 = vmul.f32 %v1418, %v1483
        %v1510 = vmul.f32 %v1419, %v1484
        %v1511 = vmul.f32 %v1420, %v1485
        %v1512 = vmul.f32 %v1421, %v1486
        %v1513 = vmul.f32 %v1422, %v1487
        %v1514 = vmul.f32 %v1423, %v1488
        %v1515 = vmul.f32 %v1424, %v1480
        %1534 = vrot.lane.b32.xlu0 %v1498, 32
        %v1535 = vpop.permute.xlu0 %1534
        %1536 = vrot.lane.b32.xlu0 %v1499, 32
        %v1537 = vpop.permute.xlu0 %1536
        %1538 = vrot.lane.b32.xlu0 %v1500, 32
        %v1539 = vpop.permute.xlu0 %1538
        %1540 = vrot.lane.b32.xlu0 %v1501, 32
        %v1541 = vpop.permute.xlu0 %1540
        %1542 = vrot.lane.b32.xlu0 %v1502, 32
        %v1543 = vpop.permute.xlu0 %1542
        %1544 = vrot.lane.b32.xlu0 %v1503, 32
        %v1545 = vpop.permute.xlu0 %1544
        %1546 = vrot.lane.b32.xlu0 %v1504, 32
        %v1547 = vpop.permute.xlu0 %1546
        %1548 = vrot.lane.b32.xlu0 %v1505, 32
        %v1549 = vpop.permute.xlu0 %1548
        %1550 = vrot.lane.b32.xlu0 %v1506, 32
        %v1551 = vpop.permute.xlu0 %1550
        %1552 = vrot.lane.b32.xlu0 %v1507, 32
        %v1553 = vpop.permute.xlu0 %1552
        %1554 = vrot.lane.b32.xlu0 %v1508, 32
        %v1555 = vpop.permute.xlu0 %1554
        %1556 = vrot.lane.b32.xlu0 %v1509, 32
        %v1557 = vpop.permute.xlu0 %1556
        %1558 = vrot.lane.b32.xlu0 %v1510, 32
        %v1559 = vpop.permute.xlu0 %1558
        %1560 = vrot.lane.b32.xlu0 %v1511, 32
        %v1561 = vpop.permute.xlu0 %1560
        %1562 = vrot.lane.b32.xlu0 %v1512, 32
        %v1563 = vpop.permute.xlu0 %1562
        %1564 = vrot.lane.b32.xlu0 %v1513, 32
        %v1565 = vpop.permute.xlu0 %1564
        %1566 = vrot.lane.b32.xlu0 %v1514, 32
        %v1567 = vpop.permute.xlu0 %1566
        %1568 = vrot.lane.b32.xlu0 %v1515, 32
        %v1569 = vpop.permute.xlu0 %1568
        %vm1570 = vcmask 261120
        %v1571 = vsel %vm1570, %v1535, %v1537
        %v1572 = vsel %vm1570, %v1537, %v1539
        %v1573 = vsel %vm1570, %v1539, %v1541
        %v1574 = vsel %vm1570, %v1541, %v1543
        %v1575 = vsel %vm1570, %v1543, %v1545
        %v1576 = vsel %vm1570, %v1545, %v1547
        %v1577 = vsel %vm1570, %v1547, %v1549
        %v1578 = vsel %vm1570, %v1549, %v1551
        %v1579 = vsel %vm1570, %v1553, %v1555
        %v1580 = vsel %vm1570, %v1555, %v1557
        %v1581 = vsel %vm1570, %v1557, %v1559
        %v1582 = vsel %vm1570, %v1559, %v1561
        %v1583 = vsel %vm1570, %v1561, %v1563
        %v1584 = vsel %vm1570, %v1563, %v1565
        %v1585 = vsel %vm1570, %v1565, %v1567
        %v1586 = vsel %vm1570, %v1567, %v1569
        %1603 = vst [vmem:[#allocation3 + $0x80] sm:$0xff] %v1571
        %1604 = vst [vmem:[#allocation3 + $0x88] sm:$0xff] %v1572
        %1605 = vst [vmem:[#allocation3 + $0x90] sm:$0xff] %v1573
        %1606 = vst [vmem:[#allocation3 + $0x98] sm:$0xff] %v1574
        %1607 = vst [vmem:[#allocation3 + $0xa0] sm:$0xff] %v1575
        %1608 = vst [vmem:[#allocation3 + $0xa8] sm:$0xff] %v1576
        %1609 = vst [vmem:[#allocation3 + $0xb0] sm:$0xff] %v1577
        %1610 = vst [vmem:[#allocation3 + $0xb8] sm:$0xff] %v1578
        %1611 = vst [vmem:[#allocation3 + $0xc0] sm:$0xff] %v1579
        %1612 = vst [vmem:[#allocation3 + $0xc8] sm:$0xff] %v1580
        %1613 = vst [vmem:[#allocation3 + $0xd0] sm:$0xff] %v1581
        %1614 = vst [vmem:[#allocation3 + $0xd8] sm:$0xff] %v1582
        %1615 = vst [vmem:[#allocation3 + $0xe0] sm:$0xff] %v1583
        %1616 = vst [vmem:[#allocation3 + $0xe8] sm:$0xff] %v1584
        %1617 = vst [vmem:[#allocation3 + $0xf0] sm:$0xff] %v1585
        %1618 = vst [vmem:[#allocation3 + $0xf8] sm:$0xff] %v1586
        %v1619 = vld [vmem:[#allocation2] sm:$0xff]
        %v1620 = vld [vmem:[#allocation2 + $0x8] sm:$0xff]
        %v1621 = vld [vmem:[#allocation2 + $0x10] sm:$0xff]
        %v1622 = vld [vmem:[#allocation2 + $0x18] sm:$0xff]
        %v1623 = vld [vmem:[#allocation2 + $0x20] sm:$0xff]
        %v1624 = vld [vmem:[#allocation2 + $0x28] sm:$0xff]
        %v1625 = vld [vmem:[#allocation2 + $0x30] sm:$0xff]
        %v1626 = vld [vmem:[#allocation2 + $0x38] sm:$0xff]
        %v1627 = vld [vmem:[#allocation2 + $0x40] sm:$0xff]
        %v1628 = vld [vmem:[#allocation2 + $0x50] sm:$0xff]
        %v1629 = vld [vmem:[#allocation2 + $0x58] sm:$0xff]
        %v1630 = vld [vmem:[#allocation2 + $0x60] sm:$0xff]
        %v1631 = vld [vmem:[#allocation2 + $0x68] sm:$0xff]
        %v1632 = vld [vmem:[#allocation2 + $0x70] sm:$0xff]
        %v1633 = vld [vmem:[#allocation2 + $0x78] sm:$0xff]
        %v1634 = vld [vmem:[#allocation2 + $0x80] sm:$0xff]
        %v1635 = vld [vmem:[#allocation2 + $0x88] sm:$0xff]
        %v1636 = vld [vmem:[#allocation2 + $0x90] sm:$0xff]
        %v1637 = vlaneseq
        %v1638 = vshrl.u32 %v1637, 7
        %v1639 = vsub.s32 2, %v1638
        %v1640 = vrot.slane %v463, %v1639
        %v1641 = vlaneseq
        %v1642 = vshrl.u32 %v1641, 7
        %v1643 = vsub.s32 2, %v1642
        %v1644 = vrot.slane %v464, %v1643
        %v1645 = vlaneseq
        %v1646 = vshrl.u32 %v1645, 7
        %v1647 = vsub.s32 2, %v1646
        %v1648 = vrot.slane %v465, %v1647
        %v1649 = vlaneseq
        %v1650 = vshrl.u32 %v1649, 7
        %v1651 = vsub.s32 2, %v1650
        %v1652 = vrot.slane %v466, %v1651
        %v1653 = vlaneseq
        %v1654 = vshrl.u32 %v1653, 7
        %v1655 = vsub.s32 2, %v1654
        %v1656 = vrot.slane %v467, %v1655
        %v1657 = vlaneseq
        %v1658 = vshrl.u32 %v1657, 7
        %v1659 = vsub.s32 2, %v1658
        %v1660 = vrot.slane %v468, %v1659
        %v1661 = vlaneseq
        %v1662 = vshrl.u32 %v1661, 7
        %v1663 = vsub.s32 2, %v1662
        %v1664 = vrot.slane %v469, %v1663
        %v1665 = vlaneseq
        %v1666 = vshrl.u32 %v1665, 7
        %v1667 = vsub.s32 2, %v1666
        %v1668 = vrot.slane %v470, %v1667
        %1677 = vrot.lane.b32.xlu0 %v1640, 97
        %v1678 = vpop.permute.xlu0 %1677
        %1679 = vrot.lane.b32.xlu0 %v1644, 97
        %v1680 = vpop.permute.xlu0 %1679
        %1681 = vrot.lane.b32.xlu0 %v1648, 97
        %v1682 = vpop.permute.xlu0 %1681
        %1683 = vrot.lane.b32.xlu0 %v1652, 97
        %v1684 = vpop.permute.xlu0 %1683
        %1685 = vrot.lane.b32.xlu0 %v1656, 97
        %v1686 = vpop.permute.xlu0 %1685
        %1687 = vrot.lane.b32.xlu0 %v1660, 97
        %v1688 = vpop.permute.xlu0 %1687
        %1689 = vrot.lane.b32.xlu0 %v1664, 97
        %v1690 = vpop.permute.xlu0 %1689
        %1691 = vrot.lane.b32.xlu0 %v1668, 97
        %v1692 = vpop.permute.xlu0 %1691
        %vm1693 = vcmask 793600
        %v1694 = vsel %vm1693, %v1678, %v1680
        %v1695 = vsel %vm1693, %v1680, %v1682
        %v1696 = vsel %vm1693, %v1682, %v1684
        %v1697 = vsel %vm1693, %v1684, %v1686
        %v1698 = vsel %vm1693, %v1686, %v1688
        %v1699 = vsel %vm1693, %v1688, %v1690
        %v1700 = vsel %vm1693, %v1690, %v1692
        %v1710 = vmul.f32 %v1619, %v1678
        %v1711 = vmul.f32 %v1620, %v1694
        %v1712 = vmul.f32 %v1621, %v1695
        %v1713 = vmul.f32 %v1622, %v1696
        %v1714 = vmul.f32 %v1623, %v1697
        %v1715 = vmul.f32 %v1624, %v1698
        %v1716 = vmul.f32 %v1625, %v1699
        %v1717 = vmul.f32 %v1626, %v1700
        %v1718 = vmul.f32 %v1627, %v1692
        %v1719 = vmul.f32 %v1628, %v1678
        %v1720 = vmul.f32 %v1629, %v1694
        %v1721 = vmul.f32 %v1630, %v1695
        %v1722 = vmul.f32 %v1631, %v1696
        %v1723 = vmul.f32 %v1632, %v1697
        %v1724 = vmul.f32 %v1633, %v1698
        %v1725 = vmul.f32 %v1634, %v1699
        %v1726 = vmul.f32 %v1635, %v1700
        %v1727 = vmul.f32 %v1636, %v1692
        %1746 = vrot.lane.b32.xlu0 %v1710, 31
        %v1747 = vpop.permute.xlu0 %1746
        %1748 = vrot.lane.b32.xlu0 %v1711, 31
        %v1749 = vpop.permute.xlu0 %1748
        %1750 = vrot.lane.b32.xlu0 %v1712, 31
        %v1751 = vpop.permute.xlu0 %1750
        %1752 = vrot.lane.b32.xlu0 %v1713, 31
        %v1753 = vpop.permute.xlu0 %1752
        %1754 = vrot.lane.b32.xlu0 %v1714, 31
        %v1755 = vpop.permute.xlu0 %1754
        %1756 = vrot.lane.b32.xlu0 %v1715, 31
        %v1757 = vpop.permute.xlu0 %1756
        %1758 = vrot.lane.b32.xlu0 %v1716, 31
        %v1759 = vpop.permute.xlu0 %1758
        %1760 = vrot.lane.b32.xlu0 %v1717, 31
        %v1761 = vpop.permute.xlu0 %1760
        %1762 = vrot.lane.b32.xlu0 %v1718, 31
        %v1763 = vpop.permute.xlu0 %1762
        %1764 = vrot.lane.b32.xlu0 %v1719, 31
        %v1765 = vpop.permute.xlu0 %1764
        %1766 = vrot.lane.b32.xlu0 %v1720, 31
        %v1767 = vpop.permute.xlu0 %1766
        %1768 = vrot.lane.b32.xlu0 %v1721, 31
        %v1769 = vpop.permute.xlu0 %1768
        %1770 = vrot.lane.b32.xlu0 %v1722, 31
        %v1771 = vpop.permute.xlu0 %1770
        %1772 = vrot.lane.b32.xlu0 %v1723, 31
        %v1773 = vpop.permute.xlu0 %1772
        %1774 = vrot.lane.b32.xlu0 %v1724, 31
        %v1775 = vpop.permute.xlu0 %1774
        %1776 = vrot.lane.b32.xlu0 %v1725, 31
        %v1777 = vpop.permute.xlu0 %1776
        %1778 = vrot.lane.b32.xlu0 %v1726, 31
        %v1779 = vpop.permute.xlu0 %1778
        %1780 = vrot.lane.b32.xlu0 %v1727, 31
        %v1781 = vpop.permute.xlu0 %1780
        %vm1782 = vcmask 252928
        %v1783 = vsel %vm1782, %v1747, %v1749
        %v1784 = vsel %vm1782, %v1749, %v1751
        %v1785 = vsel %vm1782, %v1751, %v1753
        %v1786 = vsel %vm1782, %v1753, %v1755
        %v1787 = vsel %vm1782, %v1755, %v1757
        %v1788 = vsel %vm1782, %v1757, %v1759
        %v1789 = vsel %vm1782, %v1759, %v1761
        %v1790 = vsel %vm1782, %v1761, %v1763
        %v1791 = vsel %vm1782, %v1765, %v1767
        %v1792 = vsel %vm1782, %v1767, %v1769
        %v1793 = vsel %vm1782, %v1769, %v1771
        %v1794 = vsel %vm1782, %v1771, %v1773
        %v1795 = vsel %vm1782, %v1773, %v1775
        %v1796 = vsel %vm1782, %v1775, %v1777
        %v1797 = vsel %vm1782, %v1777, %v1779
        %v1798 = vsel %vm1782, %v1779, %v1781
        %1815 = vst [vmem:[#allocation3 + $0x100] sm:$0xff] %v1783
        %1816 = vst [vmem:[#allocation3 + $0x108] sm:$0xff] %v1784
        %1817 = vst [vmem:[#allocation3 + $0x110] sm:$0xff] %v1785
        %1818 = vst [vmem:[#allocation3 + $0x118] sm:$0xff] %v1786
        %1819 = vst [vmem:[#allocation3 + $0x120] sm:$0xff] %v1787
        %1820 = vst [vmem:[#allocation3 + $0x128] sm:$0xff] %v1788
        %1821 = vst [vmem:[#allocation3 + $0x130] sm:$0xff] %v1789
        %1822 = vst [vmem:[#allocation3 + $0x138] sm:$0xff] %v1790
        %1823 = vst [vmem:[#allocation3 + $0x140] sm:$0xff] %v1791
        %1824 = vst [vmem:[#allocation3 + $0x148] sm:$0xff] %v1792
        %1825 = vst [vmem:[#allocation3 + $0x150] sm:$0xff] %v1793
        %1826 = vst [vmem:[#allocation3 + $0x158] sm:$0xff] %v1794
        %1827 = vst [vmem:[#allocation3 + $0x160] sm:$0xff] %v1795
        %1828 = vst [vmem:[#allocation3 + $0x168] sm:$0xff] %v1796
        %1829 = vst [vmem:[#allocation3 + $0x170] sm:$0xff] %v1797
        %1830 = vst [vmem:[#allocation3 + $0x178] sm:$0xff] %v1798
        %v1831 = vld [vmem:[#allocation2] sm:$0xff]
        %v1832 = vld [vmem:[#allocation2 + $0x8] sm:$0xff]
        %v1833 = vld [vmem:[#allocation2 + $0x10] sm:$0xff]
        %v1834 = vld [vmem:[#allocation2 + $0x18] sm:$0xff]
        %v1835 = vld [vmem:[#allocation2 + $0x20] sm:$0xff]
        %v1836 = vld [vmem:[#allocation2 + $0x28] sm:$0xff]
        %v1837 = vld [vmem:[#allocation2 + $0x30] sm:$0xff]
        %v1838 = vld [vmem:[#allocation2 + $0x38] sm:$0xff]
        %v1839 = vld [vmem:[#allocation2 + $0x40] sm:$0xff]
        %v1840 = vld [vmem:[#allocation2 + $0x50] sm:$0xff]
        %v1841 = vld [vmem:[#allocation2 + $0x58] sm:$0xff]
        %v1842 = vld [vmem:[#allocation2 + $0x60] sm:$0xff]
        %v1843 = vld [vmem:[#allocation2 + $0x68] sm:$0xff]
        %v1844 = vld [vmem:[#allocation2 + $0x70] sm:$0xff]
        %v1845 = vld [vmem:[#allocation2 + $0x78] sm:$0xff]
        %v1846 = vld [vmem:[#allocation2 + $0x80] sm:$0xff]
        %v1847 = vld [vmem:[#allocation2 + $0x88] sm:$0xff]
        %v1848 = vld [vmem:[#allocation2 + $0x90] sm:$0xff]
        %v1849 = vlaneseq
        %v1850 = vshrl.u32 %v1849, 7
        %v1851 = vsub.s32 3, %v1850
        %v1852 = vrot.slane %v463, %v1851
        %v1853 = vlaneseq
        %v1854 = vshrl.u32 %v1853, 7
        %v1855 = vsub.s32 3, %v1854
        %v1856 = vrot.slane %v464, %v1855
        %v1857 = vlaneseq
        %v1858 = vshrl.u32 %v1857, 7
        %v1859 = vsub.s32 3, %v1858
        %v1860 = vrot.slane %v465, %v1859
        %v1861 = vlaneseq
        %v1862 = vshrl.u32 %v1861, 7
        %v1863 = vsub.s32 3, %v1862
        %v1864 = vrot.slane %v466, %v1863
        %v1865 = vlaneseq
        %v1866 = vshrl.u32 %v1865, 7
        %v1867 = vsub.s32 3, %v1866
        %v1868 = vrot.slane %v467, %v1867
        %v1869 = vlaneseq
        %v1870 = vshrl.u32 %v1869, 7
        %v1871 = vsub.s32 3, %v1870
        %v1872 = vrot.slane %v468, %v1871
        %v1873 = vlaneseq
        %v1874 = vshrl.u32 %v1873, 7
        %v1875 = vsub.s32 3, %v1874
        %v1876 = vrot.slane %v469, %v1875
        %v1877 = vlaneseq
        %v1878 = vshrl.u32 %v1877, 7
        %v1879 = vsub.s32 3, %v1878
        %v1880 = vrot.slane %v470, %v1879
        %1889 = vrot.lane.b32.xlu0 %v1852, 127
        %v1890 = vpop.permute.xlu0 %1889
        %1891 = vrot.lane.b32.xlu0 %v1856, 127
        %v1892 = vpop.permute.xlu0 %1891
        %1893 = vrot.lane.b32.xlu0 %v1860, 127
        %v1894 = vpop.permute.xlu0 %1893
        %1895 = vrot.lane.b32.xlu0 %v1864, 127
        %v1896 = vpop.permute.xlu0 %1895
        %1897 = vrot.lane.b32.xlu0 %v1868, 127
        %v1898 = vpop.permute.xlu0 %1897
        %1899 = vrot.lane.b32.xlu0 %v1872, 127
        %v1900 = vpop.permute.xlu0 %1899
        %1901 = vrot.lane.b32.xlu0 %v1876, 127
        %v1902 = vpop.permute.xlu0 %1901
        %1903 = vrot.lane.b32.xlu0 %v1880, 127
        %v1904 = vpop.permute.xlu0 %1903
        %vm1905 = vcmask 1039360
        %v1906 = vsel %vm1905, %v1890, %v1892
        %v1907 = vsel %vm1905, %v1892, %v1894
        %v1908 = vsel %vm1905, %v1894, %v1896
        %v1909 = vsel %vm1905, %v1896, %v1898
        %v1910 = vsel %vm1905, %v1898, %v1900
        %v1911 = vsel %vm1905, %v1900, %v1902
        %v1912 = vsel %vm1905, %v1902, %v1904
        %v1922 = vmul.f32 %v1831, %v1890
        %v1923 = vmul.f32 %v1832, %v1906
        %v1924 = vmul.f32 %v1833, %v1907
        %v1925 = vmul.f32 %v1834, %v1908
        %v1926 = vmul.f32 %v1835, %v1909
        %v1927 = vmul.f32 %v1836, %v1910
        %v1928 = vmul.f32 %v1837, %v1911
        %v1929 = vmul.f32 %v1838, %v1912
        %v1930 = vmul.f32 %v1839, %v1904
        %v1931 = vmul.f32 %v1840, %v1890
        %v1932 = vmul.f32 %v1841, %v1906
        %v1933 = vmul.f32 %v1842, %v1907
        %v1934 = vmul.f32 %v1843, %v1908
        %v1935 = vmul.f32 %v1844, %v1909
        %v1936 = vmul.f32 %v1845, %v1910
        %v1937 = vmul.f32 %v1846, %v1911
        %v1938 = vmul.f32 %v1847, %v1912
        %v1939 = vmul.f32 %v1848, %v1904
        %1958 = vrot.lane.b32.xlu0 %v1922, 1
        %v1959 = vpop.permute.xlu0 %1958
        %1960 = vrot.lane.b32.xlu0 %v1923, 1
        %v1961 = vpop.permute.xlu0 %1960
        %1962 = vrot.lane.b32.xlu0 %v1924, 1
        %v1963 = vpop.permute.xlu0 %1962
        %1964 = vrot.lane.b32.xlu0 %v1925, 1
        %v1965 = vpop.permute.xlu0 %1964
        %1966 = vrot.lane.b32.xlu0 %v1926, 1
        %v1967 = vpop.permute.xlu0 %1966
        %1968 = vrot.lane.b32.xlu0 %v1927, 1
        %v1969 = vpop.permute.xlu0 %1968
        %1970 = vrot.lane.b32.xlu0 %v1928, 1
        %v1971 = vpop.permute.xlu0 %1970
        %1972 = vrot.lane.b32.xlu0 %v1929, 1
        %v1973 = vpop.permute.xlu0 %1972
        %1974 = vrot.lane.b32.xlu0 %v1930, 1
        %v1975 = vpop.permute.xlu0 %1974
        %1976 = vrot.lane.b32.xlu0 %v1931, 1
        %v1977 = vpop.permute.xlu0 %1976
        %1978 = vrot.lane.b32.xlu0 %v1932, 1
        %v1979 = vpop.permute.xlu0 %1978
        %1980 = vrot.lane.b32.xlu0 %v1933, 1
        %v1981 = vpop.permute.xlu0 %1980
        %1982 = vrot.lane.b32.xlu0 %v1934, 1
        %v1983 = vpop.permute.xlu0 %1982
        %1984 = vrot.lane.b32.xlu0 %v1935, 1
        %v1985 = vpop.permute.xlu0 %1984
        %1986 = vrot.lane.b32.xlu0 %v1936, 1
        %v1987 = vpop.permute.xlu0 %1986
        %1988 = vrot.lane.b32.xlu0 %v1937, 1
        %v1989 = vpop.permute.xlu0 %1988
        %1990 = vrot.lane.b32.xlu0 %v1938, 1
        %v1991 = vpop.permute.xlu0 %1990
        %1992 = vrot.lane.b32.xlu0 %v1939, 1
        %v1993 = vpop.permute.xlu0 %1992
        %vm1994 = vcmask 7168
        %v1995 = vsel %vm1994, %v1959, %v1961
        %v1996 = vsel %vm1994, %v1961, %v1963
        %v1997 = vsel %vm1994, %v1963, %v1965
        %v1998 = vsel %vm1994, %v1965, %v1967
        %v1999 = vsel %vm1994, %v1967, %v1969
        %v2000 = vsel %vm1994, %v1969, %v1971
        %v2001 = vsel %vm1994, %v1971, %v1973
        %v2002 = vsel %vm1994, %v1973, %v1975
        %v2003 = vsel %vm1994, %v1977, %v1979
        %v2004 = vsel %vm1994, %v1979, %v1981
        %v2005 = vsel %vm1994, %v1981, %v1983
        %v2006 = vsel %vm1994, %v1983, %v1985
        %v2007 = vsel %vm1994, %v1985, %v1987
        %v2008 = vsel %vm1994, %v1987, %v1989
        %v2009 = vsel %vm1994, %v1989, %v1991
        %v2010 = vsel %vm1994, %v1991, %v1993
        %2027 = vst [vmem:[#allocation3 + $0x180] sm:$0xff] %v1995
        %2028 = vst [vmem:[#allocation3 + $0x188] sm:$0xff] %v1996
        %2029 = vst [vmem:[#allocation3 + $0x190] sm:$0xff] %v1997
        %2030 = vst [vmem:[#allocation3 + $0x198] sm:$0xff] %v1998
        %2031 = vst [vmem:[#allocation3 + $0x1a0] sm:$0xff] %v1999
        %2032 = vst [vmem:[#allocation3 + $0x1a8] sm:$0xff] %v2000
        %2033 = vst [vmem:[#allocation3 + $0x1b0] sm:$0xff] %v2001
        %2034 = vst [vmem:[#allocation3 + $0x1b8] sm:$0xff] %v2002
        %2035 = vst [vmem:[#allocation3 + $0x1c0] sm:$0xff] %v2003
        %2036 = vst [vmem:[#allocation3 + $0x1c8] sm:$0xff] %v2004
        %2037 = vst [vmem:[#allocation3 + $0x1d0] sm:$0xff] %v2005
        %2038 = vst [vmem:[#allocation3 + $0x1d8] sm:$0xff] %v2006
        %2039 = vst [vmem:[#allocation3 + $0x1e0] sm:$0xff] %v2007
        %2040 = vst [vmem:[#allocation3 + $0x1e8] sm:$0xff] %v2008
        %2041 = vst [vmem:[#allocation3 + $0x1f0] sm:$0xff] %v2009
        %2042 = vst [vmem:[#allocation3 + $0x1f8] sm:$0xff] %v2010
        %v2043 = vld [vmem:[#allocation2 + $0x8] sm:$0xff]
        %v2044 = vld [vmem:[#allocation2 + $0x10] sm:$0xff]
        %v2045 = vld [vmem:[#allocation2 + $0x18] sm:$0xff]
        %v2046 = vld [vmem:[#allocation2 + $0x20] sm:$0xff]
        %v2047 = vld [vmem:[#allocation2 + $0x28] sm:$0xff]
        %v2048 = vld [vmem:[#allocation2 + $0x30] sm:$0xff]
        %v2049 = vld [vmem:[#allocation2 + $0x38] sm:$0xff]
        %v2050 = vld [vmem:[#allocation2 + $0x40] sm:$0xff]
        %v2051 = vld [vmem:[#allocation2 + $0x58] sm:$0xff]
        %v2052 = vld [vmem:[#allocation2 + $0x60] sm:$0xff]
        %v2053 = vld [vmem:[#allocation2 + $0x68] sm:$0xff]
        %v2054 = vld [vmem:[#allocation2 + $0x70] sm:$0xff]
        %v2055 = vld [vmem:[#allocation2 + $0x78] sm:$0xff]
        %v2056 = vld [vmem:[#allocation2 + $0x80] sm:$0xff]
        %v2057 = vld [vmem:[#allocation2 + $0x88] sm:$0xff]
        %v2058 = vld [vmem:[#allocation2 + $0x90] sm:$0xff]
        %v2059 = vlaneseq
        %v2060 = vshrl.u32 %v2059, 7
        %v2061 = vsub.s32 4, %v2060
        %v2062 = vrot.slane %v463, %v2061
        %v2063 = vlaneseq
        %v2064 = vshrl.u32 %v2063, 7
        %v2065 = vsub.s32 4, %v2064
        %v2066 = vrot.slane %v464, %v2065
        %v2067 = vlaneseq
        %v2068 = vshrl.u32 %v2067, 7
        %v2069 = vsub.s32 4, %v2068
        %v2070 = vrot.slane %v465, %v2069
        %v2071 = vlaneseq
        %v2072 = vshrl.u32 %v2071, 7
        %v2073 = vsub.s32 4, %v2072
        %v2074 = vrot.slane %v466, %v2073
        %v2075 = vlaneseq
        %v2076 = vshrl.u32 %v2075, 7
        %v2077 = vsub.s32 4, %v2076
        %v2078 = vrot.slane %v467, %v2077
        %v2079 = vlaneseq
        %v2080 = vshrl.u32 %v2079, 7
        %v2081 = vsub.s32 4, %v2080
        %v2082 = vrot.slane %v468, %v2081
        %v2083 = vlaneseq
        %v2084 = vshrl.u32 %v2083, 7
        %v2085 = vsub.s32 4, %v2084
        %v2086 = vrot.slane %v469, %v2085
        %v2087 = vlaneseq
        %v2088 = vshrl.u32 %v2087, 7
        %v2089 = vsub.s32 4, %v2088
        %v2090 = vrot.slane %v470, %v2089
        %v2091 = vmul.f32 %v2043, %v2062
        %v2092 = vmul.f32 %v2044, %v2066
        %v2093 = vmul.f32 %v2045, %v2070
        %v2094 = vmul.f32 %v2046, %v2074
        %v2095 = vmul.f32 %v2047, %v2078
        %v2096 = vmul.f32 %v2048, %v2082
        %v2097 = vmul.f32 %v2049, %v2086
        %v2098 = vmul.f32 %v2050, %v2090
        %v2099 = vmul.f32 %v2051, %v2062
        %v2100 = vmul.f32 %v2052, %v2066
        %v2101 = vmul.f32 %v2053, %v2070
        %v2102 = vmul.f32 %v2054, %v2074
        %v2103 = vmul.f32 %v2055, %v2078
        %v2104 = vmul.f32 %v2056, %v2082
        %v2105 = vmul.f32 %v2057, %v2086
        %v2106 = vmul.f32 %v2058, %v2090
        %2107 = vst [vmem:[#allocation3 + $0x200] sm:$0xff] %v2091
        %2108 = vst [vmem:[#allocation3 + $0x208] sm:$0xff] %v2092
        %2109 = vst [vmem:[#allocation3 + $0x210] sm:$0xff] %v2093
        %2110 = vst [vmem:[#allocation3 + $0x218] sm:$0xff] %v2094
        %2111 = vst [vmem:[#allocation3 + $0x220] sm:$0xff] %v2095
        %2112 = vst [vmem:[#allocation3 + $0x228] sm:$0xff] %v2096
        %2113 = vst [vmem:[#allocation3 + $0x230] sm:$0xff] %v2097
        %2114 = vst [vmem:[#allocation3 + $0x238] sm:$0xff] %v2098
        %2115 = vst [vmem:[#allocation3 + $0x240] sm:$0xff] %v2099
        %2116 = vst [vmem:[#allocation3 + $0x248] sm:$0xff] %v2100
        %2117 = vst [vmem:[#allocation3 + $0x250] sm:$0xff] %v2101
        %2118 = vst [vmem:[#allocation3 + $0x258] sm:$0xff] %v2102
        %2119 = vst [vmem:[#allocation3 + $0x260] sm:$0xff] %v2103
        %2120 = vst [vmem:[#allocation3 + $0x268] sm:$0xff] %v2104
        %2121 = vst [vmem:[#allocation3 + $0x270] sm:$0xff] %v2105
        %2122 = vst [vmem:[#allocation3 + $0x278] sm:$0xff] %v2106
        %v2123 = vld [vmem:[#allocation2 + $0x8] sm:$0xff]
        %v2124 = vld [vmem:[#allocation2 + $0x10] sm:$0xff]
        %v2125 = vld [vmem:[#allocation2 + $0x18] sm:$0xff]
        %v2126 = vld [vmem:[#allocation2 + $0x20] sm:$0xff]
        %v2127 = vld [vmem:[#allocation2 + $0x28] sm:$0xff]
        %v2128 = vld [vmem:[#allocation2 + $0x30] sm:$0xff]
        %v2129 = vld [vmem:[#allocation2 + $0x38] sm:$0xff]
        %v2130 = vld [vmem:[#allocation2 + $0x40] sm:$0xff]
        %v2131 = vld [vmem:[#allocation2 + $0x48] sm:$0xff]
        %v2132 = vld [vmem:[#allocation2 + $0x58] sm:$0xff]
        %v2133 = vld [vmem:[#allocation2 + $0x60] sm:$0xff]
        %v2134 = vld [vmem:[#allocation2 + $0x68] sm:$0xff]
        %v2135 = vld [vmem:[#allocation2 + $0x70] sm:$0xff]
        %v2136 = vld [vmem:[#allocation2 + $0x78] sm:$0xff]
        %v2137 = vld [vmem:[#allocation2 + $0x80] sm:$0xff]
        %v2138 = vld [vmem:[#allocation2 + $0x88] sm:$0xff]
        %v2139 = vld [vmem:[#allocation2 + $0x90] sm:$0xff]
        %v2140 = vld [vmem:[#allocation2 + $0x98] sm:$0xff]
        %v2141 = vlaneseq
        %v2142 = vshrl.u32 %v2141, 7
        %v2143 = vsub.s32 5, %v2142
        %v2144 = vrot.slane %v463, %v2143
        %v2145 = vlaneseq
        %v2146 = vshrl.u32 %v2145, 7
        %v2147 = vsub.s32 5, %v2146
        %v2148 = vrot.slane %v464, %v2147
        %v2149 = vlaneseq
        %v2150 = vshrl.u32 %v2149, 7
        %v2151 = vsub.s32 5, %v2150
        %v2152 = vrot.slane %v465, %v2151
        %v2153 = vlaneseq
        %v2154 = vshrl.u32 %v2153, 7
        %v2155 = vsub.s32 5, %v2154
        %v2156 = vrot.slane %v466, %v2155
        %v2157 = vlaneseq
        %v2158 = vshrl.u32 %v2157, 7
        %v2159 = vsub.s32 5, %v2158
        %v2160 = vrot.slane %v467, %v2159
        %v2161 = vlaneseq
        %v2162 = vshrl.u32 %v2161, 7
        %v2163 = vsub.s32 5, %v2162
        %v2164 = vrot.slane %v468, %v2163
        %v2165 = vlaneseq
        %v2166 = vshrl.u32 %v2165, 7
        %v2167 = vsub.s32 5, %v2166
        %v2168 = vrot.slane %v469, %v2167
        %v2169 = vlaneseq
        %v2170 = vshrl.u32 %v2169, 7
        %v2171 = vsub.s32 5, %v2170
        %v2172 = vrot.slane %v470, %v2171
        %2181 = vrot.lane.b32.xlu0 %v2144, 1
        %v2182 = vpop.permute.xlu0 %2181
        %2183 = vrot.lane.b32.xlu0 %v2148, 1
        %v2184 = vpop.permute.xlu0 %2183
        %2185 = vrot.lane.b32.xlu0 %v2152, 1
        %v2186 = vpop.permute.xlu0 %2185
        %2187 = vrot.lane.b32.xlu0 %v2156, 1
        %v2188 = vpop.permute.xlu0 %2187
        %2189 = vrot.lane.b32.xlu0 %v2160, 1
        %v2190 = vpop.permute.xlu0 %2189
        %2191 = vrot.lane.b32.xlu0 %v2164, 1
        %v2192 = vpop.permute.xlu0 %2191
        %2193 = vrot.lane.b32.xlu0 %v2168, 1
        %v2194 = vpop.permute.xlu0 %2193
        %2195 = vrot.lane.b32.xlu0 %v2172, 1
        %v2196 = vpop.permute.xlu0 %2195
        %v2197 = vsel %vm1994, %v2182, %v2184
        %v2198 = vsel %vm1994, %v2184, %v2186
        %v2199 = vsel %vm1994, %v2186, %v2188
        %v2200 = vsel %vm1994, %v2188, %v2190
        %v2201 = vsel %vm1994, %v2190, %v2192
        %v2202 = vsel %vm1994, %v2192, %v2194
        %v2203 = vsel %vm1994, %v2194, %v2196
        %v2213 = vmul.f32 %v2123, %v2182
        %v2214 = vmul.f32 %v2124, %v2197
        %v2215 = vmul.f32 %v2125, %v2198
        %v2216 = vmul.f32 %v2126, %v2199
        %v2217 = vmul.f32 %v2127, %v2200
        %v2218 = vmul.f32 %v2128, %v2201
        %v2219 = vmul.f32 %v2129, %v2202
        %v2220 = vmul.f32 %v2130, %v2203
        %v2221 = vmul.f32 %v2131, %v2196
        %v2222 = vmul.f32 %v2132, %v2182
        %v2223 = vmul.f32 %v2133, %v2197
        %v2224 = vmul.f32 %v2134, %v2198
        %v2225 = vmul.f32 %v2135, %v2199
        %v2226 = vmul.f32 %v2136, %v2200
        %v2227 = vmul.f32 %v2137, %v2201
        %v2228 = vmul.f32 %v2138, %v2202
        %v2229 = vmul.f32 %v2139, %v2203
        %v2230 = vmul.f32 %v2140, %v2196
        %2249 = vrot.lane.b32.xlu0 %v2213, 127
        %v2250 = vpop.permute.xlu0 %2249
        %2251 = vrot.lane.b32.xlu0 %v2214, 127
        %v2252 = vpop.permute.xlu0 %2251
        %2253 = vrot.lane.b32.xlu0 %v2215, 127
        %v2254 = vpop.permute.xlu0 %2253
        %2255 = vrot.lane.b32.xlu0 %v2216, 127
        %v2256 = vpop.permute.xlu0 %2255
        %2257 = vrot.lane.b32.xlu0 %v2217, 127
        %v2258 = vpop.permute.xlu0 %2257
        %2259 = vrot.lane.b32.xlu0 %v2218, 127
        %v2260 = vpop.permute.xlu0 %2259
        %2261 = vrot.lane.b32.xlu0 %v2219, 127
        %v2262 = vpop.permute.xlu0 %2261
        %2263 = vrot.lane.b32.xlu0 %v2220, 127
        %v2264 = vpop.permute.xlu0 %2263
        %2265 = vrot.lane.b32.xlu0 %v2221, 127
        %v2266 = vpop.permute.xlu0 %2265
        %2267 = vrot.lane.b32.xlu0 %v2222, 127
        %v2268 = vpop.permute.xlu0 %2267
        %2269 = vrot.lane.b32.xlu0 %v2223, 127
        %v2270 = vpop.permute.xlu0 %2269
        %2271 = vrot.lane.b32.xlu0 %v2224, 127
        %v2272 = vpop.permute.xlu0 %2271
        %2273 = vrot.lane.b32.xlu0 %v2225, 127
        %v2274 = vpop.permute.xlu0 %2273
        %2275 = vrot.lane.b32.xlu0 %v2226, 127
        %v2276 = vpop.permute.xlu0 %2275
        %2277 = vrot.lane.b32.xlu0 %v2227, 127
        %v2278 = vpop.permute.xlu0 %2277
        %2279 = vrot.lane.b32.xlu0 %v2228, 127
        %v2280 = vpop.permute.xlu0 %2279
        %2281 = vrot.lane.b32.xlu0 %v2229, 127
        %v2282 = vpop.permute.xlu0 %2281
        %2283 = vrot.lane.b32.xlu0 %v2230, 127
        %v2284 = vpop.permute.xlu0 %2283
        %v2285 = vsel %vm1905, %v2250, %v2252
        %v2286 = vsel %vm1905, %v2252, %v2254
        %v2287 = vsel %vm1905, %v2254, %v2256
        %v2288 = vsel %vm1905, %v2256, %v2258
        %v2289 = vsel %vm1905, %v2258, %v2260
        %v2290 = vsel %vm1905, %v2260, %v2262
        %v2291 = vsel %vm1905, %v2262, %v2264
        %v2292 = vsel %vm1905, %v2264, %v2266
        %v2293 = vsel %vm1905, %v2268, %v2270
        %v2294 = vsel %vm1905, %v2270, %v2272
        %v2295 = vsel %vm1905, %v2272, %v2274
        %v2296 = vsel %vm1905, %v2274, %v2276
        %v2297 = vsel %vm1905, %v2276, %v2278
        %v2298 = vsel %vm1905, %v2278, %v2280
        %v2299 = vsel %vm1905, %v2280, %v2282
        %v2300 = vsel %vm1905, %v2282, %v2284
        %2317 = vst [vmem:[#allocation3 + $0x280] sm:$0xff] %v2285
        %2318 = vst [vmem:[#allocation3 + $0x288] sm:$0xff] %v2286
        %2319 = vst [vmem:[#allocation3 + $0x290] sm:$0xff] %v2287
        %2320 = vst [vmem:[#allocation3 + $0x298] sm:$0xff] %v2288
        %2321 = vst [vmem:[#allocation3 + $0x2a0] sm:$0xff] %v2289
        %2322 = vst [vmem:[#allocation3 + $0x2a8] sm:$0xff] %v2290
        %2323 = vst [vmem:[#allocation3 + $0x2b0] sm:$0xff] %v2291
        %2324 = vst [vmem:[#allocation3 + $0x2b8] sm:$0xff] %v2292
        %2325 = vst [vmem:[#allocation3 + $0x2c0] sm:$0xff] %v2293
        %2326 = vst [vmem:[#allocation3 + $0x2c8] sm:$0xff] %v2294
        %2327 = vst [vmem:[#allocation3 + $0x2d0] sm:$0xff] %v2295
        %2328 = vst [vmem:[#allocation3 + $0x2d8] sm:$0xff] %v2296
        %2329 = vst [vmem:[#allocation3 + $0x2e0] sm:$0xff] %v2297
        %2330 = vst [vmem:[#allocation3 + $0x2e8] sm:$0xff] %v2298
        %2331 = vst [vmem:[#allocation3 + $0x2f0] sm:$0xff] %v2299
        %2332 = vst [vmem:[#allocation3 + $0x2f8] sm:$0xff] %v2300
        %v2333 = vld [vmem:[#allocation2 + $0x8] sm:$0xff]
        %v2334 = vld [vmem:[#allocation2 + $0x10] sm:$0xff]
        %v2335 = vld [vmem:[#allocation2 + $0x18] sm:$0xff]
        %v2336 = vld [vmem:[#allocation2 + $0x20] sm:$0xff]
        %v2337 = vld [vmem:[#allocation2 + $0x28] sm:$0xff]
        %v2338 = vld [vmem:[#allocation2 + $0x30] sm:$0xff]
        %v2339 = vld [vmem:[#allocation2 + $0x38] sm:$0xff]
        %v2340 = vld [vmem:[#allocation2 + $0x40] sm:$0xff]
        %v2341 = vld [vmem:[#allocation2 + $0x48] sm:$0xff]
        %v2342 = vld [vmem:[#allocation2 + $0x58] sm:$0xff]
        %v2343 = vld [vmem:[#allocation2 + $0x60] sm:$0xff]
        %v2344 = vld [vmem:[#allocation2 + $0x68] sm:$0xff]
        %v2345 = vld [vmem:[#allocation2 + $0x70] sm:$0xff]
        %v2346 = vld [vmem:[#allocation2 + $0x78] sm:$0xff]
        %v2347 = vld [vmem:[#allocation2 + $0x80] sm:$0xff]
        %v2348 = vld [vmem:[#allocation2 + $0x88] sm:$0xff]
        %v2349 = vld [vmem:[#allocation2 + $0x90] sm:$0xff]
        %v2350 = vld [vmem:[#allocation2 + $0x98] sm:$0xff]
        %v2351 = vlaneseq
        %v2352 = vshrl.u32 %v2351, 7
        %v2353 = vsub.s32 6, %v2352
        %v2354 = vrot.slane %v463, %v2353
        %v2355 = vlaneseq
        %v2356 = vshrl.u32 %v2355, 7
        %v2357 = vsub.s32 6, %v2356
        %v2358 = vrot.slane %v464, %v2357
        %v2359 = vlaneseq
        %v2360 = vshrl.u32 %v2359, 7
        %v2361 = vsub.s32 6, %v2360
        %v2362 = vrot.slane %v465, %v2361
        %v2363 = vlaneseq
        %v2364 = vshrl.u32 %v2363, 7
        %v2365 = vsub.s32 6, %v2364
        %v2366 = vrot.slane %v466, %v2365
        %v2367 = vlaneseq
        %v2368 = vshrl.u32 %v2367, 7
        %v2369 = vsub.s32 6, %v2368
        %v2370 = vrot.slane %v467, %v2369
        %v2371 = vlaneseq
        %v2372 = vshrl.u32 %v2371, 7
        %v2373 = vsub.s32 6, %v2372
        %v2374 = vrot.slane %v468, %v2373
        %v2375 = vlaneseq
        %v2376 = vshrl.u32 %v2375, 7
        %v2377 = vsub.s32 6, %v2376
        %v2378 = vrot.slane %v469, %v2377
        %v2379 = vlaneseq
        %v2380 = vshrl.u32 %v2379, 7
        %v2381 = vsub.s32 6, %v2380
        %v2382 = vrot.slane %v470, %v2381
        %2391 = vrot.lane.b32.xlu0 %v2354, 31
        %v2392 = vpop.permute.xlu0 %2391
        %2393 = vrot.lane.b32.xlu0 %v2358, 31
        %v2394 = vpop.permute.xlu0 %2393
        %2395 = vrot.lane.b32.xlu0 %v2362, 31
        %v2396 = vpop.permute.xlu0 %2395
        %2397 = vrot.lane.b32.xlu0 %v2366, 31
        %v2398 = vpop.permute.xlu0 %2397
        %2399 = vrot.lane.b32.xlu0 %v2370, 31
        %v2400 = vpop.permute.xlu0 %2399
        %2401 = vrot.lane.b32.xlu0 %v2374, 31
        %v2402 = vpop.permute.xlu0 %2401
        %2403 = vrot.lane.b32.xlu0 %v2378, 31
        %v2404 = vpop.permute.xlu0 %2403
        %2405 = vrot.lane.b32.xlu0 %v2382, 31
        %v2406 = vpop.permute.xlu0 %2405
        %v2407 = vsel %vm1782, %v2392, %v2394
        %v2408 = vsel %vm1782, %v2394, %v2396
        %v2409 = vsel %vm1782, %v2396, %v2398
        %v2410 = vsel %vm1782, %v2398, %v2400
        %v2411 = vsel %vm1782, %v2400, %v2402
        %v2412 = vsel %vm1782, %v2402, %v2404
        %v2413 = vsel %vm1782, %v2404, %v2406
        %v2423 = vmul.f32 %v2333, %v2392
        %v2424 = vmul.f32 %v2334, %v2407
        %v2425 = vmul.f32 %v2335, %v2408
        %v2426 = vmul.f32 %v2336, %v2409
        %v2427 = vmul.f32 %v2337, %v2410
        %v2428 = vmul.f32 %v2338, %v2411
        %v2429 = vmul.f32 %v2339, %v2412
        %v2430 = vmul.f32 %v2340, %v2413
        %v2431 = vmul.f32 %v2341, %v2406
        %v2432 = vmul.f32 %v2342, %v2392
        %v2433 = vmul.f32 %v2343, %v2407
        %v2434 = vmul.f32 %v2344, %v2408
        %v2435 = vmul.f32 %v2345, %v2409
        %v2436 = vmul.f32 %v2346, %v2410
        %v2437 = vmul.f32 %v2347, %v2411
        %v2438 = vmul.f32 %v2348, %v2412
        %v2439 = vmul.f32 %v2349, %v2413
        %v2440 = vmul.f32 %v2350, %v2406
        %2459 = vrot.lane.b32.xlu0 %v2423, 97
        %v2460 = vpop.permute.xlu0 %2459
        %2461 = vrot.lane.b32.xlu0 %v2424, 97
        %v2462 = vpop.permute.xlu0 %2461
        %2463 = vrot.lane.b32.xlu0 %v2425, 97
        %v2464 = vpop.permute.xlu0 %2463
        %2465 = vrot.lane.b32.xlu0 %v2426, 97
        %v2466 = vpop.permute.xlu0 %2465
        %2467 = vrot.lane.b32.xlu0 %v2427, 97
        %v2468 = vpop.permute.xlu0 %2467
        %2469 = vrot.lane.b32.xlu0 %v2428, 97
        %v2470 = vpop.permute.xlu0 %2469
        %2471 = vrot.lane.b32.xlu0 %v2429, 97
        %v2472 = vpop.permute.xlu0 %2471
        %2473 = vrot.lane.b32.xlu0 %v2430, 97
        %v2474 = vpop.permute.xlu0 %2473
        %2475 = vrot.lane.b32.xlu0 %v2431, 97
        %v2476 = vpop.permute.xlu0 %2475
        %2477 = vrot.lane.b32.xlu0 %v2432, 97
        %v2478 = vpop.permute.xlu0 %2477
        %2479 = vrot.lane.b32.xlu0 %v2433, 97
        %v2480 = vpop.permute.xlu0 %2479
        %2481 = vrot.lane.b32.xlu0 %v2434, 97
        %v2482 = vpop.permute.xlu0 %2481
        %2483 = vrot.lane.b32.xlu0 %v2435, 97
        %v2484 = vpop.permute.xlu0 %2483
        %2485 = vrot.lane.b32.xlu0 %v2436, 97
        %v2486 = vpop.permute.xlu0 %2485
        %2487 = vrot.lane.b32.xlu0 %v2437, 97
        %v2488 = vpop.permute.xlu0 %2487
        %2489 = vrot.lane.b32.xlu0 %v2438, 97
        %v2490 = vpop.permute.xlu0 %2489
        %2491 = vrot.lane.b32.xlu0 %v2439, 97
        %v2492 = vpop.permute.xlu0 %2491
        %2493 = vrot.lane.b32.xlu0 %v2440, 97
        %v2494 = vpop.permute.xlu0 %2493
        %v2495 = vsel %vm1693, %v2460, %v2462
        %v2496 = vsel %vm1693, %v2462, %v2464
        %v2497 = vsel %vm1693, %v2464, %v2466
        %v2498 = vsel %vm1693, %v2466, %v2468
        %v2499 = vsel %vm1693, %v2468, %v2470
        %v2500 = vsel %vm1693, %v2470, %v2472
        %v2501 = vsel %vm1693, %v2472, %v2474
        %v2502 = vsel %vm1693, %v2474, %v2476
        %v2503 = vsel %vm1693, %v2478, %v2480
        %v2504 = vsel %vm1693, %v2480, %v2482
        %v2505 = vsel %vm1693, %v2482, %v2484
        %v2506 = vsel %vm1693, %v2484, %v2486
        %v2507 = vsel %vm1693, %v2486, %v2488
        %v2508 = vsel %vm1693, %v2488, %v2490
        %v2509 = vsel %vm1693, %v2490, %v2492
        %v2510 = vsel %vm1693, %v2492, %v2494
        %2527 = vst [vmem:[#allocation3 + $0x300] sm:$0xff] %v2495
        %2528 = vst [vmem:[#allocation3 + $0x308] sm:$0xff] %v2496
        %2529 = vst [vmem:[#allocation3 + $0x310] sm:$0xff] %v2497
        %2530 = vst [vmem:[#allocation3 + $0x318] sm:$0xff] %v2498
        %2531 = vst [vmem:[#allocation3 + $0x320] sm:$0xff] %v2499
        %2532 = vst [vmem:[#allocation3 + $0x328] sm:$0xff] %v2500
        %2533 = vst [vmem:[#allocation3 + $0x330] sm:$0xff] %v2501
        %2534 = vst [vmem:[#allocation3 + $0x338] sm:$0xff] %v2502
        %2535 = vst [vmem:[#allocation3 + $0x340] sm:$0xff] %v2503
        %2536 = vst [vmem:[#allocation3 + $0x348] sm:$0xff] %v2504
        %2537 = vst [vmem:[#allocation3 + $0x350] sm:$0xff] %v2505
        %2538 = vst [vmem:[#allocation3 + $0x358] sm:$0xff] %v2506
        %2539 = vst [vmem:[#allocation3 + $0x360] sm:$0xff] %v2507
        %2540 = vst [vmem:[#allocation3 + $0x368] sm:$0xff] %v2508
        %2541 = vst [vmem:[#allocation3 + $0x370] sm:$0xff] %v2509
        %2542 = vst [vmem:[#allocation3 + $0x378] sm:$0xff] %v2510
        %v2543 = vld [vmem:[#allocation2 + $0x8] sm:$0xff]
        %v2544 = vld [vmem:[#allocation2 + $0x10] sm:$0xff]
        %v2545 = vld [vmem:[#allocation2 + $0x18] sm:$0xff]
        %v2546 = vld [vmem:[#allocation2 + $0x20] sm:$0xff]
        %v2547 = vld [vmem:[#allocation2 + $0x28] sm:$0xff]
        %v2548 = vld [vmem:[#allocation2 + $0x30] sm:$0xff]
        %v2549 = vld [vmem:[#allocation2 + $0x38] sm:$0xff]
        %v2550 = vld [vmem:[#allocation2 + $0x40] sm:$0xff]
        %v2551 = vld [vmem:[#allocation2 + $0x48] sm:$0xff]
        %v2552 = vld [vmem:[#allocation2 + $0x58] sm:$0xff]
        %v2553 = vld [vmem:[#allocation2 + $0x60] sm:$0xff]
        %v2554 = vld [vmem:[#allocation2 + $0x68] sm:$0xff]
        %v2555 = vld [vmem:[#allocation2 + $0x70] sm:$0xff]
        %v2556 = vld [vmem:[#allocation2 + $0x78] sm:$0xff]
        %v2557 = vld [vmem:[#allocation2 + $0x80] sm:$0xff]
        %v2558 = vld [vmem:[#allocation2 + $0x88] sm:$0xff]
        %v2559 = vld [vmem:[#allocation2 + $0x90] sm:$0xff]
        %v2560 = vld [vmem:[#allocation2 + $0x98] sm:$0xff]
        %v2561 = vlaneseq
        %v2562 = vshrl.u32 %v2561, 7
        %v2563 = vsub.s32 7, %v2562
        %v2564 = vrot.slane %v463, %v2563
        %v2565 = vlaneseq
        %v2566 = vshrl.u32 %v2565, 7
        %v2567 = vsub.s32 7, %v2566
        %v2568 = vrot.slane %v464, %v2567
        %v2569 = vlaneseq
        %v2570 = vshrl.u32 %v2569, 7
        %v2571 = vsub.s32 7, %v2570
        %v2572 = vrot.slane %v465, %v2571
        %v2573 = vlaneseq
        %v2574 = vshrl.u32 %v2573, 7
        %v2575 = vsub.s32 7, %v2574
        %v2576 = vrot.slane %v466, %v2575
        %v2577 = vlaneseq
        %v2578 = vshrl.u32 %v2577, 7
        %v2579 = vsub.s32 7, %v2578
        %v2580 = vrot.slane %v467, %v2579
        %v2581 = vlaneseq
        %v2582 = vshrl.u32 %v2581, 7
        %v2583 = vsub.s32 7, %v2582
        %v2584 = vrot.slane %v468, %v2583
        %v2585 = vlaneseq
        %v2586 = vshrl.u32 %v2585, 7
        %v2587 = vsub.s32 7, %v2586
        %v2588 = vrot.slane %v469, %v2587
        %v2589 = vlaneseq
        %v2590 = vshrl.u32 %v2589, 7
        %v2591 = vsub.s32 7, %v2590
        %v2592 = vrot.slane %v470, %v2591
        %2601 = vrot.lane.b32.xlu0 %v2564, 32
        %v2602 = vpop.permute.xlu0 %2601
        %2603 = vrot.lane.b32.xlu0 %v2568, 32
        %v2604 = vpop.permute.xlu0 %2603
        %2605 = vrot.lane.b32.xlu0 %v2572, 32
        %v2606 = vpop.permute.xlu0 %2605
        %2607 = vrot.lane.b32.xlu0 %v2576, 32
        %v2608 = vpop.permute.xlu0 %2607
        %2609 = vrot.lane.b32.xlu0 %v2580, 32
        %v2610 = vpop.permute.xlu0 %2609
        %2611 = vrot.lane.b32.xlu0 %v2584, 32
        %v2612 = vpop.permute.xlu0 %2611
        %2613 = vrot.lane.b32.xlu0 %v2588, 32
        %v2614 = vpop.permute.xlu0 %2613
        %2615 = vrot.lane.b32.xlu0 %v2592, 32
        %v2616 = vpop.permute.xlu0 %2615
        %v2617 = vsel %vm1570, %v2602, %v2604
        %v2618 = vsel %vm1570, %v2604, %v2606
        %v2619 = vsel %vm1570, %v2606, %v2608
        %v2620 = vsel %vm1570, %v2608, %v2610
        %v2621 = vsel %vm1570, %v2610, %v2612
        %v2622 = vsel %vm1570, %v2612, %v2614
        %v2623 = vsel %vm1570, %v2614, %v2616
        %v2633 = vmul.f32 %v2543, %v2602
        %v2634 = vmul.f32 %v2544, %v2617
        %v2635 = vmul.f32 %v2545, %v2618
        %v2636 = vmul.f32 %v2546, %v2619
        %v2637 = vmul.f32 %v2547, %v2620
        %v2638 = vmul.f32 %v2548, %v2621
        %v2639 = vmul.f32 %v2549, %v2622
        %v2640 = vmul.f32 %v2550, %v2623
        %v2641 = vmul.f32 %v2551, %v2616
        %v2642 = vmul.f32 %v2552, %v2602
        %v2643 = vmul.f32 %v2553, %v2617
        %v2644 = vmul.f32 %v2554, %v2618
        %v2645 = vmul.f32 %v2555, %v2619
        %v2646 = vmul.f32 %v2556, %v2620
        %v2647 = vmul.f32 %v2557, %v2621
        %v2648 = vmul.f32 %v2558, %v2622
        %v2649 = vmul.f32 %v2559, %v2623
        %v2650 = vmul.f32 %v2560, %v2616
        %2669 = vrot.lane.b32.xlu0 %v2633, 96
        %v2670 = vpop.permute.xlu0 %2669
        %2671 = vrot.lane.b32.xlu0 %v2634, 96
        %v2672 = vpop.permute.xlu0 %2671
        %2673 = vrot.lane.b32.xlu0 %v2635, 96
        %v2674 = vpop.permute.xlu0 %2673
        %2675 = vrot.lane.b32.xlu0 %v2636, 96
        %v2676 = vpop.permute.xlu0 %2675
        %2677 = vrot.lane.b32.xlu0 %v2637, 96
        %v2678 = vpop.permute.xlu0 %2677
        %2679 = vrot.lane.b32.xlu0 %v2638, 96
        %v2680 = vpop.permute.xlu0 %2679
        %2681 = vrot.lane.b32.xlu0 %v2639, 96
        %v2682 = vpop.permute.xlu0 %2681
        %2683 = vrot.lane.b32.xlu0 %v2640, 96
        %v2684 = vpop.permute.xlu0 %2683
        %2685 = vrot.lane.b32.xlu0 %v2641, 96
        %v2686 = vpop.permute.xlu0 %2685
        %2687 = vrot.lane.b32.xlu0 %v2642, 96
        %v2688 = vpop.permute.xlu0 %2687
        %2689 = vrot.lane.b32.xlu0 %v2643, 96
        %v2690 = vpop.permute.xlu0 %2689
        %2691 = vrot.lane.b32.xlu0 %v2644, 96
        %v2692 = vpop.permute.xlu0 %2691
        %2693 = vrot.lane.b32.xlu0 %v2645, 96
        %v2694 = vpop.permute.xlu0 %2693
        %2695 = vrot.lane.b32.xlu0 %v2646, 96
        %v2696 = vpop.permute.xlu0 %2695
        %2697 = vrot.lane.b32.xlu0 %v2647, 96
        %v2698 = vpop.permute.xlu0 %2697
        %2699 = vrot.lane.b32.xlu0 %v2648, 96
        %v2700 = vpop.permute.xlu0 %2699
        %2701 = vrot.lane.b32.xlu0 %v2649, 96
        %v2702 = vpop.permute.xlu0 %2701
        %2703 = vrot.lane.b32.xlu0 %v2650, 96
        %v2704 = vpop.permute.xlu0 %2703
        %v2705 = vsel %vm1481, %v2670, %v2672
        %v2706 = vsel %vm1481, %v2672, %v2674
        %v2707 = vsel %vm1481, %v2674, %v2676
        %v2708 = vsel %vm1481, %v2676, %v2678
        %v2709 = vsel %vm1481, %v2678, %v2680
        %v2710 = vsel %vm1481, %v2680, %v2682
        %v2711 = vsel %vm1481, %v2682, %v2684
        %v2712 = vsel %vm1481, %v2684, %v2686
        %v2713 = vsel %vm1481, %v2688, %v2690
        %v2714 = vsel %vm1481, %v2690, %v2692
        %v2715 = vsel %vm1481, %v2692, %v2694
        %v2716 = vsel %vm1481, %v2694, %v2696
        %v2717 = vsel %vm1481, %v2696, %v2698
        %v2718 = vsel %vm1481, %v2698, %v2700
        %v2719 = vsel %vm1481, %v2700, %v2702
        %v2720 = vsel %vm1481, %v2702, %v2704
        %2737 = vst [vmem:[#allocation3 + $0x380] sm:$0xff] %v2705
        %2738 = vst [vmem:[#allocation3 + $0x388] sm:$0xff] %v2706
        %2739 = vst [vmem:[#allocation3 + $0x390] sm:$0xff] %v2707
        %2740 = vst [vmem:[#allocation3 + $0x398] sm:$0xff] %v2708
        %2741 = vst [vmem:[#allocation3 + $0x3a0] sm:$0xff] %v2709
        %2742 = vst [vmem:[#allocation3 + $0x3a8] sm:$0xff] %v2710
        %2743 = vst [vmem:[#allocation3 + $0x3b0] sm:$0xff] %v2711
        %2744 = vst [vmem:[#allocation3 + $0x3b8] sm:$0xff] %v2712
        %2745 = vst [vmem:[#allocation3 + $0x3c0] sm:$0xff] %v2713
        %2746 = vst [vmem:[#allocation3 + $0x3c8] sm:$0xff] %v2714
        %2747 = vst [vmem:[#allocation3 + $0x3d0] sm:$0xff] %v2715
        %2748 = vst [vmem:[#allocation3 + $0x3d8] sm:$0xff] %v2716
        %2749 = vst [vmem:[#allocation3 + $0x3e0] sm:$0xff] %v2717
        %2750 = vst [vmem:[#allocation3 + $0x3e8] sm:$0xff] %v2718
        %2751 = vst [vmem:[#allocation3 + $0x3f0] sm:$0xff] %v2719
        %2752 = vst [vmem:[#allocation3 + $0x3f8] sm:$0xff] %v2720
        %v2753 = vld [vmem:[#allocation2 + $0x8] sm:$0xff]
        %v2754 = vld [vmem:[#allocation2 + $0x10] sm:$0xff]
        %v2755 = vld [vmem:[#allocation2 + $0x18] sm:$0xff]
        %v2756 = vld [vmem:[#allocation2 + $0x20] sm:$0xff]
        %v2757 = vld [vmem:[#allocation2 + $0x28] sm:$0xff]
        %v2758 = vld [vmem:[#allocation2 + $0x30] sm:$0xff]
        %v2759 = vld [vmem:[#allocation2 + $0x38] sm:$0xff]
        %v2760 = vld [vmem:[#allocation2 + $0x40] sm:$0xff]
        %v2761 = vld [vmem:[#allocation2 + $0x48] sm:$0xff]
        %v2762 = vld [vmem:[#allocation2 + $0x58] sm:$0xff]
        %v2763 = vld [vmem:[#allocation2 + $0x60] sm:$0xff]
        %v2764 = vld [vmem:[#allocation2 + $0x68] sm:$0xff]
        %v2765 = vld [vmem:[#allocation2 + $0x70] sm:$0xff]
        %v2766 = vld [vmem:[#allocation2 + $0x78] sm:$0xff]
        %v2767 = vld [vmem:[#allocation2 + $0x80] sm:$0xff]
        %v2768 = vld [vmem:[#allocation2 + $0x88] sm:$0xff]
        %v2769 = vld [vmem:[#allocation2 + $0x90] sm:$0xff]
        %v2770 = vld [vmem:[#allocation2 + $0x98] sm:$0xff]
        %v2771 = vlaneseq
        %v2772 = vshrl.u32 %v2771, 7
        %v2773 = vsub.s32 0, %v2772
        %v2774 = vrot.slane %v471, %v2773
        %v2775 = vlaneseq
        %v2776 = vshrl.u32 %v2775, 7
        %v2777 = vsub.s32 0, %v2776
        %v2778 = vrot.slane %v472, %v2777
        %v2779 = vlaneseq
        %v2780 = vshrl.u32 %v2779, 7
        %v2781 = vsub.s32 0, %v2780
        %v2782 = vrot.slane %v473, %v2781
        %v2783 = vlaneseq
        %v2784 = vshrl.u32 %v2783, 7
        %v2785 = vsub.s32 0, %v2784
        %v2786 = vrot.slane %v474, %v2785
        %v2787 = vlaneseq
        %v2788 = vshrl.u32 %v2787, 7
        %v2789 = vsub.s32 0, %v2788
        %v2790 = vrot.slane %v475, %v2789
        %v2791 = vlaneseq
        %v2792 = vshrl.u32 %v2791, 7
        %v2793 = vsub.s32 0, %v2792
        %v2794 = vrot.slane %v476, %v2793
        %v2795 = vlaneseq
        %v2796 = vshrl.u32 %v2795, 7
        %v2797 = vsub.s32 0, %v2796
        %v2798 = vrot.slane %v477, %v2797
        %v2799 = vlaneseq
        %v2800 = vshrl.u32 %v2799, 7
        %v2801 = vsub.s32 0, %v2800
        %v2802 = vrot.slane %v478, %v2801
        %2811 = vrot.lane.b32.xlu0 %v2774, 33
        %v2812 = vpop.permute.xlu0 %2811
        %2813 = vrot.lane.b32.xlu0 %v2778, 33
        %v2814 = vpop.permute.xlu0 %2813
        %2815 = vrot.lane.b32.xlu0 %v2782, 33
        %v2816 = vpop.permute.xlu0 %2815
        %2817 = vrot.lane.b32.xlu0 %v2786, 33
        %v2818 = vpop.permute.xlu0 %2817
        %2819 = vrot.lane.b32.xlu0 %v2790, 33
        %v2820 = vpop.permute.xlu0 %2819
        %2821 = vrot.lane.b32.xlu0 %v2794, 33
        %v2822 = vpop.permute.xlu0 %2821
        %2823 = vrot.lane.b32.xlu0 %v2798, 33
        %v2824 = vpop.permute.xlu0 %2823
        %2825 = vrot.lane.b32.xlu0 %v2802, 33
        %v2826 = vpop.permute.xlu0 %2825
        %v2827 = vsel %vm1358, %v2812, %v2814
        %v2828 = vsel %vm1358, %v2814, %v2816
        %v2829 = vsel %vm1358, %v2816, %v2818
        %v2830 = vsel %vm1358, %v2818, %v2820
        %v2831 = vsel %vm1358, %v2820, %v2822
        %v2832 = vsel %vm1358, %v2822, %v2824
        %v2833 = vsel %vm1358, %v2824, %v2826
        %v2843 = vmul.f32 %v2753, %v2812
        %v2844 = vmul.f32 %v2754, %v2827
        %v2845 = vmul.f32 %v2755, %v2828
        %v2846 = vmul.f32 %v2756, %v2829
        %v2847 = vmul.f32 %v2757, %v2830
        %v2848 = vmul.f32 %v2758, %v2831
        %v2849 = vmul.f32 %v2759, %v2832
        %v2850 = vmul.f32 %v2760, %v2833
        %v2851 = vmul.f32 %v2761, %v2826
        %v2852 = vmul.f32 %v2762, %v2812
        %v2853 = vmul.f32 %v2763, %v2827
        %v2854 = vmul.f32 %v2764, %v2828
        %v2855 = vmul.f32 %v2765, %v2829
        %v2856 = vmul.f32 %v2766, %v2830
        %v2857 = vmul.f32 %v2767, %v2831
        %v2858 = vmul.f32 %v2768, %v2832
        %v2859 = vmul.f32 %v2769, %v2833
        %v2860 = vmul.f32 %v2770, %v2826
        %2879 = vrot.lane.b32.xlu0 %v2843, 95
        %v2880 = vpop.permute.xlu0 %2879
        %2881 = vrot.lane.b32.xlu0 %v2844, 95
        %v2882 = vpop.permute.xlu0 %2881
        %2883 = vrot.lane.b32.xlu0 %v2845, 95
        %v2884 = vpop.permute.xlu0 %2883
        %2885 = vrot.lane.b32.xlu0 %v2846, 95
        %v2886 = vpop.permute.xlu0 %2885
        %2887 = vrot.lane.b32.xlu0 %v2847, 95
        %v2888 = vpop.permute.xlu0 %2887
        %2889 = vrot.lane.b32.xlu0 %v2848, 95
        %v2890 = vpop.permute.xlu0 %2889
        %2891 = vrot.lane.b32.xlu0 %v2849, 95
        %v2892 = vpop.permute.xlu0 %2891
        %2893 = vrot.lane.b32.xlu0 %v2850, 95
        %v2894 = vpop.permute.xlu0 %2893
        %2895 = vrot.lane.b32.xlu0 %v2851, 95
        %v2896 = vpop.permute.xlu0 %2895
        %2897 = vrot.lane.b32.xlu0 %v2852, 95
        %v2898 = vpop.permute.xlu0 %2897
        %2899 = vrot.lane.b32.xlu0 %v2853, 95
        %v2900 = vpop.permute.xlu0 %2899
        %2901 = vrot.lane.b32.xlu0 %v2854, 95
        %v2902 = vpop.permute.xlu0 %2901
        %2903 = vrot.lane.b32.xlu0 %v2855, 95
        %v2904 = vpop.permute.xlu0 %2903
        %2905 = vrot.lane.b32.xlu0 %v2856, 95
        %v2906 = vpop.permute.xlu0 %2905
        %2907 = vrot.lane.b32.xlu0 %v2857, 95
        %v2908 = vpop.permute.xlu0 %2907
        %2909 = vrot.lane.b32.xlu0 %v2858, 95
        %v2910 = vpop.permute.xlu0 %2909
        %2911 = vrot.lane.b32.xlu0 %v2859, 95
        %v2912 = vpop.permute.xlu0 %2911
        %2913 = vrot.lane.b32.xlu0 %v2860, 95
        %v2914 = vpop.permute.xlu0 %2913
        %v2915 = vsel %vm1269, %v2880, %v2882
        %v2916 = vsel %vm1269, %v2882, %v2884
        %v2917 = vsel %vm1269, %v2884, %v2886
        %v2918 = vsel %vm1269, %v2886, %v2888
        %v2919 = vsel %vm1269, %v2888, %v2890
        %v2920 = vsel %vm1269, %v2890, %v2892
        %v2921 = vsel %vm1269, %v2892, %v2894
        %v2922 = vsel %vm1269, %v2894, %v2896
        %v2923 = vsel %vm1269, %v2898, %v2900
        %v2924 = vsel %vm1269, %v2900, %v2902
        %v2925 = vsel %vm1269, %v2902, %v2904
        %v2926 = vsel %vm1269, %v2904, %v2906
        %v2927 = vsel %vm1269, %v2906, %v2908
        %v2928 = vsel %vm1269, %v2908, %v2910
        %v2929 = vsel %vm1269, %v2910, %v2912
        %v2930 = vsel %vm1269, %v2912, %v2914
        %2947 = vst [vmem:[#allocation3 + $0x400] sm:$0xff] %v2915
        %2948 = vst [vmem:[#allocation3 + $0x408] sm:$0xff] %v2916
        %2949 = vst [vmem:[#allocation3 + $0x410] sm:$0xff] %v2917
        %2950 = vst [vmem:[#allocation3 + $0x418] sm:$0xff] %v2918
        %2951 = vst [vmem:[#allocation3 + $0x420] sm:$0xff] %v2919
        %2952 = vst [vmem:[#allocation3 + $0x428] sm:$0xff] %v2920
        %2953 = vst [vmem:[#allocation3 + $0x430] sm:$0xff] %v2921
        %2954 = vst [vmem:[#allocation3 + $0x438] sm:$0xff] %v2922
        %2955 = vst [vmem:[#allocation3 + $0x440] sm:$0xff] %v2923
        %2956 = vst [vmem:[#allocation3 + $0x448] sm:$0xff] %v2924
        %2957 = vst [vmem:[#allocation3 + $0x450] sm:$0xff] %v2925
        %2958 = vst [vmem:[#allocation3 + $0x458] sm:$0xff] %v2926
        %2959 = vst [vmem:[#allocation3 + $0x460] sm:$0xff] %v2927
        %2960 = vst [vmem:[#allocation3 + $0x468] sm:$0xff] %v2928
        %2961 = vst [vmem:[#allocation3 + $0x470] sm:$0xff] %v2929
        %2962 = vst [vmem:[#allocation3 + $0x478] sm:$0xff] %v2930
        %v2963 = vld [vmem:[%s6] sm:$0xff]
        %v2964 = vld [vmem:[#allocation3] sm:$0xff]
        %v2965 = vld [vmem:[#allocation3 + $0x8] sm:$0xff]
        %v2966 = vld [vmem:[#allocation3 + $0x10] sm:$0xff]
        %v2967 = vld [vmem:[#allocation3 + $0x18] sm:$0xff]
        %v2968 = vld [vmem:[#allocation3 + $0x20] sm:$0xff]
        %v2969 = vld [vmem:[#allocation3 + $0x28] sm:$0xff]
        %v2970 = vld [vmem:[#allocation3 + $0x30] sm:$0xff]
        %v2971 = vld [vmem:[#allocation3 + $0x38] sm:$0xff]
        %v2972 = vld [vmem:[#allocation3 + $0x40] sm:$0xff]
        %v2973 = vld [vmem:[#allocation3 + $0x48] sm:$0xff]
        %v2974 = vld [vmem:[#allocation3 + $0x50] sm:$0xff]
        %v2975 = vld [vmem:[#allocation3 + $0x58] sm:$0xff]
        %v2976 = vld [vmem:[#allocation3 + $0x60] sm:$0xff]
        %v2977 = vld [vmem:[#allocation3 + $0x68] sm:$0xff]
        %v2978 = vld [vmem:[#allocation3 + $0x70] sm:$0xff]
        %v2979 = vld [vmem:[#allocation3 + $0x78] sm:$0xff]
        %v2980 = vld [vmem:[#allocation3 + $0x80] sm:$0xff]
        %v2981 = vld [vmem:[#allocation3 + $0x88] sm:$0xff]
        %v2982 = vld [vmem:[#allocation3 + $0x90] sm:$0xff]
        %v2983 = vld [vmem:[#allocation3 + $0x98] sm:$0xff]
        %v2984 = vld [vmem:[#allocation3 + $0xa0] sm:$0xff]
        %v2985 = vld [vmem:[#allocation3 + $0xa8] sm:$0xff]
        %v2986 = vld [vmem:[#allocation3 + $0xb0] sm:$0xff]
        %v2987 = vld [vmem:[#allocation3 + $0xb8] sm:$0xff]
        %v2988 = vld [vmem:[#allocation3 + $0xc0] sm:$0xff]
        %v2989 = vld [vmem:[#allocation3 + $0xc8] sm:$0xff]
        %v2990 = vld [vmem:[#allocation3 + $0xd0] sm:$0xff]
        %v2991 = vld [vmem:[#allocation3 + $0xd8] sm:$0xff]
        %v2992 = vld [vmem:[#allocation3 + $0xe0] sm:$0xff]
        %v2993 = vld [vmem:[#allocation3 + $0xe8] sm:$0xff]
        %v2994 = vld [vmem:[#allocation3 + $0xf0] sm:$0xff]
        %v2995 = vld [vmem:[#allocation3 + $0xf8] sm:$0xff]
        %v2996 = vld [vmem:[#allocation3 + $0x100] sm:$0xff]
        %v2997 = vld [vmem:[#allocation3 + $0x108] sm:$0xff]
        %v2998 = vld [vmem:[#allocation3 + $0x110] sm:$0xff]
        %v2999 = vld [vmem:[#allocation3 + $0x118] sm:$0xff]
        %v3000 = vld [vmem:[#allocation3 + $0x120] sm:$0xff]
        %v3001 = vld [vmem:[#allocation3 + $0x128] sm:$0xff]
        %v3002 = vld [vmem:[#allocation3 + $0x130] sm:$0xff]
        %v3003 = vld [vmem:[#allocation3 + $0x138] sm:$0xff]
        %v3004 = vld [vmem:[#allocation3 + $0x140] sm:$0xff]
        %v3005 = vld [vmem:[#allocation3 + $0x148] sm:$0xff]
        %v3006 = vld [vmem:[#allocation3 + $0x150] sm:$0xff]
        %v3007 = vld [vmem:[#allocation3 + $0x158] sm:$0xff]
        %v3008 = vld [vmem:[#allocation3 + $0x160] sm:$0xff]
        %v3009 = vld [vmem:[#allocation3 + $0x168] sm:$0xff]
        %v3010 = vld [vmem:[#allocation3 + $0x170] sm:$0xff]
        %v3011 = vld [vmem:[#allocation3 + $0x178] sm:$0xff]
        %v3012 = vld [vmem:[#allocation3 + $0x180] sm:$0xff]
        %v3013 = vld [vmem:[#allocation3 + $0x188] sm:$0xff]
        %v3014 = vld [vmem:[#allocation3 + $0x190] sm:$0xff]
        %v3015 = vld [vmem:[#allocation3 + $0x198] sm:$0xff]
        %v3016 = vld [vmem:[#allocation3 + $0x1a0] sm:$0xff]
        %v3017 = vld [vmem:[#allocation3 + $0x1a8] sm:$0xff]
        %v3018 = vld [vmem:[#allocation3 + $0x1b0] sm:$0xff]
        %v3019 = vld [vmem:[#allocation3 + $0x1b8] sm:$0xff]
        %v3020 = vld [vmem:[#allocation3 + $0x1c0] sm:$0xff]
        %v3021 = vld [vmem:[#allocation3 + $0x1c8] sm:$0xff]
        %v3022 = vld [vmem:[#allocation3 + $0x1d0] sm:$0xff]
        %v3023 = vld [vmem:[#allocation3 + $0x1d8] sm:$0xff]
        %v3024 = vld [vmem:[#allocation3 + $0x1e0] sm:$0xff]
        %v3025 = vld [vmem:[#allocation3 + $0x1e8] sm:$0xff]
        %v3026 = vld [vmem:[#allocation3 + $0x1f0] sm:$0xff]
        %v3027 = vld [vmem:[#allocation3 + $0x1f8] sm:$0xff]
        %v3028 = vld [vmem:[#allocation3 + $0x200] sm:$0xff]
        %v3029 = vld [vmem:[#allocation3 + $0x208] sm:$0xff]
        %v3030 = vld [vmem:[#allocation3 + $0x210] sm:$0xff]
        %v3031 = vld [vmem:[#allocation3 + $0x218] sm:$0xff]
        %v3032 = vld [vmem:[#allocation3 + $0x220] sm:$0xff]
        %v3033 = vld [vmem:[#allocation3 + $0x228] sm:$0xff]
        %v3034 = vld [vmem:[#allocation3 + $0x230] sm:$0xff]
        %v3035 = vld [vmem:[#allocation3 + $0x238] sm:$0xff]
        %v3036 = vld [vmem:[#allocation3 + $0x240] sm:$0xff]
        %v3037 = vld [vmem:[#allocation3 + $0x248] sm:$0xff]
        %v3038 = vld [vmem:[#allocation3 + $0x250] sm:$0xff]
        %v3039 = vld [vmem:[#allocation3 + $0x258] sm:$0xff]
        %v3040 = vld [vmem:[#allocation3 + $0x260] sm:$0xff]
        %v3041 = vld [vmem:[#allocation3 + $0x268] sm:$0xff]
        %v3042 = vld [vmem:[#allocation3 + $0x270] sm:$0xff]
        %v3043 = vld [vmem:[#allocation3 + $0x278] sm:$0xff]
        %v3044 = vld [vmem:[#allocation3 + $0x280] sm:$0xff]
        %v3045 = vld [vmem:[#allocation3 + $0x288] sm:$0xff]
        %v3046 = vld [vmem:[#allocation3 + $0x290] sm:$0xff]
        %v3047 = vld [vmem:[#allocation3 + $0x298] sm:$0xff]
        %v3048 = vld [vmem:[#allocation3 + $0x2a0] sm:$0xff]
        %v3049 = vld [vmem:[#allocation3 + $0x2a8] sm:$0xff]
        %v3050 = vld [vmem:[#allocation3 + $0x2b0] sm:$0xff]
        %v3051 = vld [vmem:[#allocation3 + $0x2b8] sm:$0xff]
        %v3052 = vld [vmem:[#allocation3 + $0x2c0] sm:$0xff]
        %v3053 = vld [vmem:[#allocation3 + $0x2c8] sm:$0xff]
        %v3054 = vld [vmem:[#allocation3 + $0x2d0] sm:$0xff]
        %v3055 = vld [vmem:[#allocation3 + $0x2d8] sm:$0xff]
        %v3056 = vld [vmem:[#allocation3 + $0x2e0] sm:$0xff]
        %v3057 = vld [vmem:[#allocation3 + $0x2e8] sm:$0xff]
        %v3058 = vld [vmem:[#allocation3 + $0x2f0] sm:$0xff]
        %v3059 = vld [vmem:[#allocation3 + $0x2f8] sm:$0xff]
        %v3060 = vld [vmem:[#allocation3 + $0x300] sm:$0xff]
        %v3061 = vld [vmem:[#allocation3 + $0x308] sm:$0xff]
        %v3062 = vld [vmem:[#allocation3 + $0x310] sm:$0xff]
        %v3063 = vld [vmem:[#allocation3 + $0x318] sm:$0xff]
        %v3064 = vld [vmem:[#allocation3 + $0x320] sm:$0xff]
        %v3065 = vld [vmem:[#allocation3 + $0x328] sm:$0xff]
        %v3066 = vld [vmem:[#allocation3 + $0x330] sm:$0xff]
        %v3067 = vld [vmem:[#allocation3 + $0x338] sm:$0xff]
        %v3068 = vld [vmem:[#allocation3 + $0x340] sm:$0xff]
        %v3069 = vld [vmem:[#allocation3 + $0x348] sm:$0xff]
        %v3070 = vld [vmem:[#allocation3 + $0x350] sm:$0xff]
        %v3071 = vld [vmem:[#allocation3 + $0x358] sm:$0xff]
        %v3072 = vld [vmem:[#allocation3 + $0x360] sm:$0xff]
        %v3073 = vld [vmem:[#allocation3 + $0x368] sm:$0xff]
        %v3074 = vld [vmem:[#allocation3 + $0x370] sm:$0xff]
        %v3075 = vld [vmem:[#allocation3 + $0x378] sm:$0xff]
        %v3076 = vld [vmem:[#allocation3 + $0x380] sm:$0xff]
        %v3077 = vld [vmem:[#allocation3 + $0x388] sm:$0xff]
        %v3078 = vld [vmem:[#allocation3 + $0x390] sm:$0xff]
        %v3079 = vld [vmem:[#allocation3 + $0x398] sm:$0xff]
        %v3080 = vld [vmem:[#allocation3 + $0x3a0] sm:$0xff]
        %v3081 = vld [vmem:[#allocation3 + $0x3a8] sm:$0xff]
        %v3082 = vld [vmem:[#allocation3 + $0x3b0] sm:$0xff]
        %v3083 = vld [vmem:[#allocation3 + $0x3b8] sm:$0xff]
        %v3084 = vld [vmem:[#allocation3 + $0x3c0] sm:$0xff]
        %v3085 = vld [vmem:[#allocation3 + $0x3c8] sm:$0xff]
        %v3086 = vld [vmem:[#allocation3 + $0x3d0] sm:$0xff]
        %v3087 = vld [vmem:[#allocation3 + $0x3d8] sm:$0xff]
        %v3088 = vld [vmem:[#allocation3 + $0x3e0] sm:$0xff]
        %v3089 = vld [vmem:[#allocation3 + $0x3e8] sm:$0xff]
        %v3090 = vld [vmem:[#allocation3 + $0x3f0] sm:$0xff]
        %v3091 = vld [vmem:[#allocation3 + $0x3f8] sm:$0xff]
        %v3092 = vld [vmem:[#allocation3 + $0x400] sm:$0xff]
        %v3093 = vld [vmem:[#allocation3 + $0x408] sm:$0xff]
        %v3094 = vld [vmem:[#allocation3 + $0x410] sm:$0xff]
        %v3095 = vld [vmem:[#allocation3 + $0x418] sm:$0xff]
        %v3096 = vld [vmem:[#allocation3 + $0x420] sm:$0xff]
        %v3097 = vld [vmem:[#allocation3 + $0x428] sm:$0xff]
        %v3098 = vld [vmem:[#allocation3 + $0x430] sm:$0xff]
        %v3099 = vld [vmem:[#allocation3 + $0x438] sm:$0xff]
        %v3100 = vld [vmem:[#allocation3 + $0x440] sm:$0xff]
        %v3101 = vld [vmem:[#allocation3 + $0x448] sm:$0xff]
        %v3102 = vld [vmem:[#allocation3 + $0x450] sm:$0xff]
        %v3103 = vld [vmem:[#allocation3 + $0x458] sm:$0xff]
        %v3104 = vld [vmem:[#allocation3 + $0x460] sm:$0xff]
        %v3105 = vld [vmem:[#allocation3 + $0x468] sm:$0xff]
        %v3106 = vld [vmem:[#allocation3 + $0x470] sm:$0xff]
        %v3107 = vld [vmem:[#allocation3 + $0x478] sm:$0xff]
        %v3108 = vld [vmem:[%s7] sm:$0xf]
        %3110 = vset.pattern.permute.xlu0 0
        %3111 = vperm.xlu0 %3110, %v3108
        %v3112 = vpop.permute.xlu0 %3111
        %v3115 = vcombine.high %v2963, %v2963
        %vm3116 = vcmask 130048
        %v3117 = vsel %vm3116, %v3115, 0
        %3119 = vmatprep.subr.mxu0 %v2965
        %3120 = vmatpush1.msra.mxu0 %v2964
        %3121 = vmatprep.subr.mxu0 %v2973
        %3122 = vmatpush1.msra.mxu0 %v2972
        %3123 = vmatprep.subr.mxu0 %v2981
        %3124 = vmatpush1.msra.mxu0 %v2980
        %3125 = vmatprep.subr.mxu0 %v2989
        %3126 = vmatpush1.msra.mxu0 %v2988
        %3127 = vmatprep.subr.mxu0 %v2997
        %3128 = vmatpush1.msra.mxu0 %v2996
        %3129 = vmatprep.subr.mxu0 %v3005
        %3130 = vmatpush1.msra.mxu0 %v3004
        %3131 = vmatprep.subr.mxu0 %v3013
        %3132 = vmatpush1.msra.mxu0 %v3012
        %3133 = vmatprep.subr.mxu0 %v3021
        %3134 = vmatpush1.msra.mxu0 %v3020
        %3135 = vmatprep.subr.mxu0 %v3029
        %3136 = vmatpush1.msra.mxu0 %v3028
        %3137 = vmatprep.subr.mxu0 %v3037
        %3138 = vmatpush1.msra.mxu0 %v3036
        %3139 = vmatprep.subr.mxu0 %v3045
        %3140 = vmatpush1.msra.mxu0 %v3044
        %3141 = vmatprep.subr.mxu0 %v3053
        %3142 = vmatpush1.msra.mxu0 %v3052
        %3143 = vmatprep.subr.mxu0 %v3061
        %3144 = vmatpush1.msra.mxu0 %v3060
        %3145 = vmatprep.subr.mxu0 %v3069
        %3146 = vmatpush1.msra.mxu0 %v3068
        %3147 = vmatprep.subr.mxu0 %v3077
        %3148 = vmatpush1.msra.mxu0 %v3076
        %3149 = vmatprep.subr.mxu0 %v3085
        %3150 = vmatpush1.msra.mxu0 %v3084
        %3151 = vmatprep.subr.mxu0 %v3093
        %3152 = vmatpush1.msra.mxu0 %v3092
        %3153 = vmatprep.subr.mxu0 %v3101
        %3154 = vmatpush1.msra.mxu0 %v3100
        %3155 = vmatprep.subr.mxu0 0.0
        %3156 = vmatpush1.msra.mxu0 0.0
        %3157 = vmatprep.subr.mxu0 0.0
        %3158 = vmatpush1.msra.mxu0 0.0
        %3159 = vmatprep.subr.mxu0 0.0
        %3160 = vmatpush1.msra.mxu0 0.0
        %3161 = vmatprep.subr.mxu0 0.0
        %3162 = vmatpush1.msra.mxu0 0.0
        %3163 = vmatprep.subr.mxu0 0.0
        %3164 = vmatpush1.msra.mxu0 0.0
        %3165 = vmatprep.subr.mxu0 0.0
        %3166 = vmatpush1.msra.mxu0 0.0
        %3167 = vmatprep.subr.mxu0 0.0
        %3168 = vmatpush1.msra.mxu0 0.0
        %3169 = vmatprep.subr.mxu0 0.0
        %3170 = vmatpush1.msra.mxu0 0.0
        %3171 = vmatprep.subr.mxu0 0.0
        %3172 = vmatpush1.msra.mxu0 0.0
        %3173 = vmatprep.subr.mxu0 0.0
        %3174 = vmatpush1.msra.mxu0 0.0
        %3175 = vmatprep.subr.mxu0 0.0
        %3176 = vmatpush1.msra.mxu0 0.0
        %3177 = vmatprep.subr.mxu0 0.0
        %3178 = vmatpush1.msra.mxu0 0.0
        %3179 = vmatprep.subr.mxu0 0.0
        %3180 = vmatpush1.msra.mxu0 0.0
        %3181 = vmatprep.subr.mxu0 0.0
        %3182 = vmatpush1.msra.mxu0 0.0
        %3183 = vmatprep.mubr.f32.mxu0 %v3117
        %3184 = vmatmul.mubr.f32.gmra.mrb[0].mxu0 %v2963
        %v3185 = vpop.f32.mrb[0].mxu0
        %v3186 = vadd.f32 %v3112, %v3185
        %v3187 = vpop.f32.mrb[0].mxu0
        %v3188 = vadd.f32 %v3112, %v3187
        %3189 = vdwg.mxu0
        %3190 = vmatprep.subr.mxu0 %v2967
        %3191 = vmatpush1.msra.mxu0 %v2966
        %3192 = vmatprep.subr.mxu0 %v2975
        %3193 = vmatpush1.msra.mxu0 %v2974
        %3194 = vmatprep.subr.mxu0 %v2983
        %3195 = vmatpush1.msra.mxu0 %v2982
        %3196 = vmatprep.subr.mxu0 %v2991
        %3197 = vmatpush1.msra.mxu0 %v2990
        %3198 = vmatprep.subr.mxu0 %v2999
        %3199 = vmatpush1.msra.mxu0 %v2998
        %3200 = vmatprep.subr.mxu0 %v3007
        %3201 = vmatpush1.msra.mxu0 %v3006
        %3202 = vmatprep.subr.mxu0 %v3015
        %3203 = vmatpush1.msra.mxu0 %v3014
        %3204 = vmatprep.subr.mxu0 %v3023
        %3205 = vmatpush1.msra.mxu0 %v3022
        %3206 = vmatprep.subr.mxu0 %v3031
        %3207 = vmatpush1.msra.mxu0 %v3030
        %3208 = vmatprep.subr.mxu0 %v3039
        %3209 = vmatpush1.msra.mxu0 %v3038
        %3210 = vmatprep.subr.mxu0 %v3047
        %3211 = vmatpush1.msra.mxu0 %v3046
        %3212 = vmatprep.subr.mxu0 %v3055
        %3213 = vmatpush1.msra.mxu0 %v3054
        %3214 = vmatprep.subr.mxu0 %v3063
        %3215 = vmatpush1.msra.mxu0 %v3062
        %3216 = vmatprep.subr.mxu0 %v3071
        %3217 = vmatpush1.msra.mxu0 %v3070
        %3218 = vmatprep.subr.mxu0 %v3079
        %3219 = vmatpush1.msra.mxu0 %v3078
        %3220 = vmatprep.subr.mxu0 %v3087
        %3221 = vmatpush1.msra.mxu0 %v3086
        %3222 = vmatprep.subr.mxu0 %v3095
        %3223 = vmatpush1.msra.mxu0 %v3094
        %3224 = vmatprep.subr.mxu0 %v3103
        %3225 = vmatpush1.msra.mxu0 %v3102
        %3226 = vmatprep.subr.mxu0 0.0
        %3227 = vmatpush1.msra.mxu0 0.0
        %3228 = vmatprep.subr.mxu0 0.0
        %3229 = vmatpush1.msra.mxu0 0.0
        %3230 = vmatprep.subr.mxu0 0.0
        %3231 = vmatpush1.msra.mxu0 0.0
        %3232 = vmatprep.subr.mxu0 0.0
        %3233 = vmatpush1.msra.mxu0 0.0
        %3234 = vmatprep.subr.mxu0 0.0
        %3235 = vmatpush1.msra.mxu0 0.0
        %3236 = vmatprep.subr.mxu0 0.0
        %3237 = vmatpush1.msra.mxu0 0.0
        %3238 = vmatprep.subr.mxu0 0.0
        %3239 = vmatpush1.msra.mxu0 0.0
        %3240 = vmatprep.subr.mxu0 0.0
        %3241 = vmatpush1.msra.mxu0 0.0
        %3242 = vmatprep.subr.mxu0 0.0
        %3243 = vmatpush1.msra.mxu0 0.0
        %3244 = vmatprep.subr.mxu0 0.0
        %3245 = vmatpush1.msra.mxu0 0.0
        %3246 = vmatprep.subr.mxu0 0.0
        %3247 = vmatpush1.msra.mxu0 0.0
        %3248 = vmatprep.subr.mxu0 0.0
        %3249 = vmatpush1.msra.mxu0 0.0
        %3250 = vmatprep.subr.mxu0 0.0
        %3251 = vmatpush1.msra.mxu0 0.0
        %3252 = vmatprep.subr.mxu0 0.0
        %3253 = vmatpush1.msra.mxu0 0.0
        %3254 = vmatprep.mubr.f32.mxu0 %v3117
        %3255 = vmatmul.mubr.f32.gmra.mrb[0].mxu0 %v2963
        %v3256 = vpop.f32.mrb[0].mxu0
        %v3257 = vadd.f32 %v3112, %v3256
        %v3258 = vpop.f32.mrb[0].mxu0
        %v3259 = vadd.f32 %v3112, %v3258
        %3260 = vdwg.mxu0
        %3261 = vmatprep.subr.mxu0 %v2969
        %3262 = vmatpush1.msra.mxu0 %v2968
        %3263 = vmatprep.subr.mxu0 %v2977
        %3264 = vmatpush1.msra.mxu0 %v2976
        %3265 = vmatprep.subr.mxu0 %v2985
        %3266 = vmatpush1.msra.mxu0 %v2984
        %3267 = vmatprep.subr.mxu0 %v2993
        %3268 = vmatpush1.msra.mxu0 %v2992
        %3269 = vmatprep.subr.mxu0 %v3001
        %3270 = vmatpush1.msra.mxu0 %v3000
        %3271 = vmatprep.subr.mxu0 %v3009
        %3272 = vmatpush1.msra.mxu0 %v3008
        %3273 = vmatprep.subr.mxu0 %v3017
        %3274 = vmatpush1.msra.mxu0 %v3016
        %3275 = vmatprep.subr.mxu0 %v3025
        %3276 = vmatpush1.msra.mxu0 %v3024
        %3277 = vmatprep.subr.mxu0 %v3033
        %3278 = vmatpush1.msra.mxu0 %v3032
        %3279 = vmatprep.subr.mxu0 %v3041
        %3280 = vmatpush1.msra.mxu0 %v3040
        %3281 = vmatprep.subr.mxu0 %v3049
        %3282 = vmatpush1.msra.mxu0 %v3048
        %3283 = vmatprep.subr.mxu0 %v3057
        %3284 = vmatpush1.msra.mxu0 %v3056
        %3285 = vmatprep.subr.mxu0 %v3065
        %3286 = vmatpush1.msra.mxu0 %v3064
        %3287 = vmatprep.subr.mxu0 %v3073
        %3288 = vmatpush1.msra.mxu0 %v3072
        %3289 = vmatprep.subr.mxu0 %v3081
        %3290 = vmatpush1.msra.mxu0 %v3080
        %3291 = vmatprep.subr.mxu0 %v3089
        %3292 = vmatpush1.msra.mxu0 %v3088
        %3293 = vmatprep.subr.mxu0 %v3097
        %3294 = vmatpush1.msra.mxu0 %v3096
        %3295 = vmatprep.subr.mxu0 %v3105
        %3296 = vmatpush1.msra.mxu0 %v3104
        %3297 = vmatprep.subr.mxu0 0.0
        %3298 = vmatpush1.msra.mxu0 0.0
        %3299 = vmatprep.subr.mxu0 0.0
        %3300 = vmatpush1.msra.mxu0 0.0
        %3301 = vmatprep.subr.mxu0 0.0
        %3302 = vmatpush1.msra.mxu0 0.0
        %3303 = vmatprep.subr.mxu0 0.0
        %3304 = vmatpush1.msra.mxu0 0.0
        %3305 = vmatprep.subr.mxu0 0.0
        %3306 = vmatpush1.msra.mxu0 0.0
        %3307 = vmatprep.subr.mxu0 0.0
        %3308 = vmatpush1.msra.mxu0 0.0
        %3309 = vmatprep.subr.mxu0 0.0
        %3310 = vmatpush1.msra.mxu0 0.0
        %3311 = vmatprep.subr.mxu0 0.0
        %3312 = vmatpush1.msra.mxu0 0.0
        %3313 = vmatprep.subr.mxu0 0.0
        %3314 = vmatpush1.msra.mxu0 0.0
        %3315 = vmatprep.subr.mxu0 0.0
        %3316 = vmatpush1.msra.mxu0 0.0
        %3317 = vmatprep.subr.mxu0 0.0
        %3318 = vmatpush1.msra.mxu0 0.0
        %3319 = vmatprep.subr.mxu0 0.0
        %3320 = vmatpush1.msra.mxu0 0.0
        %3321 = vmatprep.subr.mxu0 0.0
        %3322 = vmatpush1.msra.mxu0 0.0
        %3323 = vmatprep.subr.mxu0 0.0
        %3324 = vmatpush1.msra.mxu0 0.0
        %3325 = vmatprep.mubr.f32.mxu0 %v3117
        %3326 = vmatmul.mubr.f32.gmra.mrb[0].mxu0 %v2963
        %v3327 = vpop.f32.mrb[0].mxu0
        %v3328 = vadd.f32 %v3112, %v3327
        %v3329 = vpop.f32.mrb[0].mxu0
        %v3330 = vadd.f32 %v3112, %v3329
        %3331 = vdwg.mxu0
        %3332 = vmatprep.subr.mxu0 %v2971
        %3333 = vmatpush1.msra.mxu0 %v2970
        %3334 = vmatprep.subr.mxu0 %v2979
        %3335 = vmatpush1.msra.mxu0 %v2978
        %3336 = vmatprep.subr.mxu0 %v2987
        %3337 = vmatpush1.msra.mxu0 %v2986
        %3338 = vmatprep.subr.mxu0 %v2995
        %3339 = vmatpush1.msra.mxu0 %v2994
        %3340 = vmatprep.subr.mxu0 %v3003
        %3341 = vmatpush1.msra.mxu0 %v3002
        %3342 = vmatprep.subr.mxu0 %v3011
        %3343 = vmatpush1.msra.mxu0 %v3010
        %3344 = vmatprep.subr.mxu0 %v3019
        %3345 = vmatpush1.msra.mxu0 %v3018
        %3346 = vmatprep.subr.mxu0 %v3027
        %3347 = vmatpush1.msra.mxu0 %v3026
        %3348 = vmatprep.subr.mxu0 %v3035
        %3349 = vmatpush1.msra.mxu0 %v3034
        %3350 = vmatprep.subr.mxu0 %v3043
        %3351 = vmatpush1.msra.mxu0 %v3042
        %3352 = vmatprep.subr.mxu0 %v3051
        %3353 = vmatpush1.msra.mxu0 %v3050
        %3354 = vmatprep.subr.mxu0 %v3059
        %3355 = vmatpush1.msra.mxu0 %v3058
        %3356 = vmatprep.subr.mxu0 %v3067
        %3357 = vmatpush1.msra.mxu0 %v3066
        %3358 = vmatprep.subr.mxu0 %v3075
        %3359 = vmatpush1.msra.mxu0 %v3074
        %3360 = vmatprep.subr.mxu0 %v3083
        %3361 = vmatpush1.msra.mxu0 %v3082
        %3362 = vmatprep.subr.mxu0 %v3091
        %3363 = vmatpush1.msra.mxu0 %v3090
        %3364 = vmatprep.subr.mxu0 %v3099
        %3365 = vmatpush1.msra.mxu0 %v3098
        %3366 = vmatprep.subr.mxu0 %v3107
        %3367 = vmatpush1.msra.mxu0 %v3106
        %3368 = vmatprep.subr.mxu0 0.0
        %3369 = vmatpush1.msra.mxu0 0.0
        %3370 = vmatprep.subr.mxu0 0.0
        %3371 = vmatpush1.msra.mxu0 0.0
        %3372 = vmatprep.subr.mxu0 0.0
        %3373 = vmatpush1.msra.mxu0 0.0
        %3374 = vmatprep.subr.mxu0 0.0
        %3375 = vmatpush1.msra.mxu0 0.0
        %3376 = vmatprep.subr.mxu0 0.0
        %3377 = vmatpush1.msra.mxu0 0.0
        %3378 = vmatprep.subr.mxu0 0.0
        %3379 = vmatpush1.msra.mxu0 0.0
        %3380 = vmatprep.subr.mxu0 0.0
        %3381 = vmatpush1.msra.mxu0 0.0
        %3382 = vmatprep.subr.mxu0 0.0
        %3383 = vmatpush1.msra.mxu0 0.0
        %3384 = vmatprep.subr.mxu0 0.0
        %3385 = vmatpush1.msra.mxu0 0.0
        %3386 = vmatprep.subr.mxu0 0.0
        %3387 = vmatpush1.msra.mxu0 0.0
        %3388 = vmatprep.subr.mxu0 0.0
        %3389 = vmatpush1.msra.mxu0 0.0
        %3390 = vmatprep.subr.mxu0 0.0
        %3391 = vmatpush1.msra.mxu0 0.0
        %3392 = vmatprep.subr.mxu0 0.0
        %3393 = vmatpush1.msra.mxu0 0.0
        %3394 = vmatprep.subr.mxu0 0.0
        %3395 = vmatpush1.msra.mxu0 0.0
        %3396 = vmatprep.mubr.f32.mxu0 %v3117
        %3397 = vmatmul.mubr.f32.gmra.mrb[0].mxu0 %v2963
        %v3398 = vpop.f32.mrb[0].mxu0
        %v3399 = vadd.f32 %v3112, %v3398
        %v3400 = vpop.f32.mrb[0].mxu0
        %v3401 = vadd.f32 %v3112, %v3400
        %3402 = vdwg.mxu0
        %vm3403 = vcmp.ge.f32.partialorder %v3186, 0.0
        %vm3404 = vcmp.ge.f32.partialorder %v3188, 0.0
        %vm3405 = vcmp.ge.f32.partialorder %v3257, 0.0
        %vm3406 = vcmp.ge.f32.partialorder %v3259, 0.0
        %vm3407 = vcmp.ge.f32.partialorder %v3328, 0.0
        %vm3408 = vcmp.ge.f32.partialorder %v3330, 0.0
        %vm3409 = vcmp.ge.f32.partialorder %v3399, 0.0
        %vm3410 = vcmp.ge.f32.partialorder %v3401, 0.0
        %v3411 = vmul.f32 %v3186, 0.1
        %v3412 = vmul.f32 %v3188, 0.1
        %v3413 = vmul.f32 %v3257, 0.1
        %v3414 = vmul.f32 %v3259, 0.1
        %v3415 = vmul.f32 %v3328, 0.1
        %v3416 = vmul.f32 %v3330, 0.1
        %v3417 = vmul.f32 %v3399, 0.1
        %v3418 = vmul.f32 %v3401, 0.1
        %v3419 = vsel %vm3403, %v3186, %v3411
        %v3420 = vsel %vm3404, %v3188, %v3412
        %v3421 = vsel %vm3405, %v3257, %v3413
        %v3422 = vsel %vm3406, %v3259, %v3414
        %v3423 = vsel %vm3407, %v3328, %v3415
        %v3424 = vsel %vm3408, %v3330, %v3416
        %v3425 = vsel %vm3409, %v3399, %v3417
        %v3426 = vsel %vm3410, %v3401, %v3418
        %3427 = vst [vmem:[#allocation2 + $0x8] sm:$0xf] %v3419
        %3428 = vst [vmem:[#allocation2 + $0x10] sm:$0xf] %v3420
        %3429 = vst [vmem:[#allocation2 + $0x18] sm:$0xf] %v3421
        %3430 = vst [vmem:[#allocation2 + $0x20] sm:$0xf] %v3422
        %3431 = vst [vmem:[#allocation2 + $0x28] sm:$0xf] %v3423
        %3432 = vst [vmem:[#allocation2 + $0x30] sm:$0xf] %v3424
        %3433 = vst [vmem:[#allocation2 + $0x38] sm:$0xf] %v3425
        %3434 = vst [vmem:[#allocation2 + $0x40] sm:$0xf] %v3426
        %v3435 = vld [vmem:[#allocation2] sm:$0xff]
        %v3436 = vld [vmem:[#allocation2 + $0x8] sm:$0xff]
        %v3437 = vld [vmem:[#allocation2 + $0x10] sm:$0xff]
        %v3438 = vld [vmem:[#allocation2 + $0x18] sm:$0xff]
        %v3439 = vld [vmem:[#allocation2 + $0x20] sm:$0xff]
        %v3440 = vld [vmem:[#allocation2 + $0x28] sm:$0xff]
        %v3441 = vld [vmem:[#allocation2 + $0x30] sm:$0xff]
        %v3442 = vld [vmem:[#allocation2 + $0x38] sm:$0xff]
        %v3443 = vld [vmem:[#allocation2 + $0x40] sm:$0xff]
        %v3444 = vld [vmem:[#allocation2 + $0x50] sm:$0xff]
        %v3445 = vld [vmem:[#allocation2 + $0x58] sm:$0xff]
        %v3446 = vld [vmem:[#allocation2 + $0x60] sm:$0xff]
        %v3447 = vld [vmem:[#allocation2 + $0x68] sm:$0xff]
        %v3448 = vld [vmem:[#allocation2 + $0x70] sm:$0xff]
        %v3449 = vld [vmem:[#allocation2 + $0x78] sm:$0xff]
        %v3450 = vld [vmem:[#allocation2 + $0x80] sm:$0xff]
        %v3451 = vld [vmem:[#allocation2 + $0x88] sm:$0xff]
        %v3452 = vld [vmem:[#allocation2 + $0x90] sm:$0xff]
        %v3453 = vmul.f32 %v3435, %v1254
        %v3454 = vmul.f32 %v3436, %v1270
        %v3455 = vmul.f32 %v3437, %v1271
        %v3456 = vmul.f32 %v3438, %v1272
        %v3457 = vmul.f32 %v3439, %v1273
        %v3458 = vmul.f32 %v3440, %v1274
        %v3459 = vmul.f32 %v3441, %v1275
        %v3460 = vmul.f32 %v3442, %v1276
        %v3461 = vmul.f32 %v3443, %v1268
        %v3462 = vmul.f32 %v3444, %v1254
        %v3463 = vmul.f32 %v3445, %v1270
        %v3464 = vmul.f32 %v3446, %v1271
        %v3465 = vmul.f32 %v3447, %v1272
        %v3466 = vmul.f32 %v3448, %v1273
        %v3467 = vmul.f32 %v3449, %v1274
        %v3468 = vmul.f32 %v3450, %v1275
        %v3469 = vmul.f32 %v3451, %v1276
        %v3470 = vmul.f32 %v3452, %v1268
        %3489 = vrot.lane.b32.xlu0 %v3453, 33
        %v3490 = vpop.permute.xlu0 %3489
        %3491 = vrot.lane.b32.xlu0 %v3454, 33
        %v3492 = vpop.permute.xlu0 %3491
        %3493 = vrot.lane.b32.xlu0 %v3455, 33
        %v3494 = vpop.permute.xlu0 %3493
        %3495 = vrot.lane.b32.xlu0 %v3456, 33
        %v3496 = vpop.permute.xlu0 %3495
        %3497 = vrot.lane.b32.xlu0 %v3457, 33
        %v3498 = vpop.permute.xlu0 %3497
        %3499 = vrot.lane.b32.xlu0 %v3458, 33
        %v3500 = vpop.permute.xlu0 %3499
        %3501 = vrot.lane.b32.xlu0 %v3459, 33
        %v3502 = vpop.permute.xlu0 %3501
        %3503 = vrot.lane.b32.xlu0 %v3460, 33
        %v3504 = vpop.permute.xlu0 %3503
        %3505 = vrot.lane.b32.xlu0 %v3461, 33
        %v3506 = vpop.permute.xlu0 %3505
        %3507 = vrot.lane.b32.xlu0 %v3462, 33
        %v3508 = vpop.permute.xlu0 %3507
        %3509 = vrot.lane.b32.xlu0 %v3463, 33
        %v3510 = vpop.permute.xlu0 %3509
        %3511 = vrot.lane.b32.xlu0 %v3464, 33
        %v3512 = vpop.permute.xlu0 %3511
        %3513 = vrot.lane.b32.xlu0 %v3465, 33
        %v3514 = vpop.permute.xlu0 %3513
        %3515 = vrot.lane.b32.xlu0 %v3466, 33
        %v3516 = vpop.permute.xlu0 %3515
        %3517 = vrot.lane.b32.xlu0 %v3467, 33
        %v3518 = vpop.permute.xlu0 %3517
        %3519 = vrot.lane.b32.xlu0 %v3468, 33
        %v3520 = vpop.permute.xlu0 %3519
        %3521 = vrot.lane.b32.xlu0 %v3469, 33
        %v3522 = vpop.permute.xlu0 %3521
        %3523 = vrot.lane.b32.xlu0 %v3470, 33
        %v3524 = vpop.permute.xlu0 %3523
        %v3525 = vsel %vm1358, %v3490, %v3492
        %v3526 = vsel %vm1358, %v3492, %v3494
        %v3527 = vsel %vm1358, %v3494, %v3496
        %v3528 = vsel %vm1358, %v3496, %v3498
        %v3529 = vsel %vm1358, %v3498, %v3500
        %v3530 = vsel %vm1358, %v3500, %v3502
        %v3531 = vsel %vm1358, %v3502, %v3504
        %v3532 = vsel %vm1358, %v3504, %v3506
        %v3533 = vsel %vm1358, %v3508, %v3510
        %v3534 = vsel %vm1358, %v3510, %v3512
        %v3535 = vsel %vm1358, %v3512, %v3514
        %v3536 = vsel %vm1358, %v3514, %v3516
        %v3537 = vsel %vm1358, %v3516, %v3518
        %v3538 = vsel %vm1358, %v3518, %v3520
        %v3539 = vsel %vm1358, %v3520, %v3522
        %v3540 = vsel %vm1358, %v3522, %v3524
        %3557 = vst [vmem:[#allocation3] sm:$0xff] %v3525
        %3558 = vst [vmem:[#allocation3 + $0x8] sm:$0xff] %v3526
        %3559 = vst [vmem:[#allocation3 + $0x10] sm:$0xff] %v3527
        %3560 = vst [vmem:[#allocation3 + $0x18] sm:$0xff] %v3528
        %3561 = vst [vmem:[#allocation3 + $0x20] sm:$0xff] %v3529
        %3562 = vst [vmem:[#allocation3 + $0x28] sm:$0xff] %v3530
        %3563 = vst [vmem:[#allocation3 + $0x30] sm:$0xff] %v3531
        %3564 = vst [vmem:[#allocation3 + $0x38] sm:$0xff] %v3532
        %3565 = vst [vmem:[#allocation3 + $0x40] sm:$0xff] %v3533
        %3566 = vst [vmem:[#allocation3 + $0x48] sm:$0xff] %v3534
        %3567 = vst [vmem:[#allocation3 + $0x50] sm:$0xff] %v3535
        %3568 = vst [vmem:[#allocation3 + $0x58] sm:$0xff] %v3536
        %3569 = vst [vmem:[#allocation3 + $0x60] sm:$0xff] %v3537
        %3570 = vst [vmem:[#allocation3 + $0x68] sm:$0xff] %v3538
        %3571 = vst [vmem:[#allocation3 + $0x70] sm:$0xff] %v3539
        %3572 = vst [vmem:[#allocation3 + $0x78] sm:$0xff] %v3540
        %v3573 = vld [vmem:[#allocation2] sm:$0xff]
        %v3574 = vld [vmem:[#allocation2 + $0x8] sm:$0xff]
        %v3575 = vld [vmem:[#allocation2 + $0x10] sm:$0xff]
        %v3576 = vld [vmem:[#allocation2 + $0x18] sm:$0xff]
        %v3577 = vld [vmem:[#allocation2 + $0x20] sm:$0xff]
        %v3578 = vld [vmem:[#allocation2 + $0x28] sm:$0xff]
        %v3579 = vld [vmem:[#allocation2 + $0x30] sm:$0xff]
        %v3580 = vld [vmem:[#allocation2 + $0x38] sm:$0xff]
        %v3581 = vld [vmem:[#allocation2 + $0x40] sm:$0xff]
        %v3582 = vld [vmem:[#allocation2 + $0x50] sm:$0xff]
        %v3583 = vld [vmem:[#allocation2 + $0x58] sm:$0xff]
        %v3584 = vld [vmem:[#allocation2 + $0x60] sm:$0xff]
        %v3585 = vld [vmem:[#allocation2 + $0x68] sm:$0xff]
        %v3586 = vld [vmem:[#allocation2 + $0x70] sm:$0xff]
        %v3587 = vld [vmem:[#allocation2 + $0x78] sm:$0xff]
        %v3588 = vld [vmem:[#allocation2 + $0x80] sm:$0xff]
        %v3589 = vld [vmem:[#allocation2 + $0x88] sm:$0xff]
        %v3590 = vld [vmem:[#allocation2 + $0x90] sm:$0xff]
        %v3591 = vmul.f32 %v3573, %v1466
        %v3592 = vmul.f32 %v3574, %v1482
        %v3593 = vmul.f32 %v3575, %v1483
        %v3594 = vmul.f32 %v3576, %v1484
        %v3595 = vmul.f32 %v3577, %v1485
        %v3596 = vmul.f32 %v3578, %v1486
        %v3597 = vmul.f32 %v3579, %v1487
        %v3598 = vmul.f32 %v3580, %v1488
        %v3599 = vmul.f32 %v3581, %v1480
        %v3600 = vmul.f32 %v3582, %v1466
        %v3601 = vmul.f32 %v3583, %v1482
        %v3602 = vmul.f32 %v3584, %v1483
        %v3603 = vmul.f32 %v3585, %v1484
        %v3604 = vmul.f32 %v3586, %v1485
        %v3605 = vmul.f32 %v3587, %v1486
        %v3606 = vmul.f32 %v3588, %v1487
        %v3607 = vmul.f32 %v3589, %v1488
        %v3608 = vmul.f32 %v3590, %v1480
        %3627 = vrot.lane.b32.xlu0 %v3591, 32
        %v3628 = vpop.permute.xlu0 %3627
        %3629 = vrot.lane.b32.xlu0 %v3592, 32
        %v3630 = vpop.permute.xlu0 %3629
        %3631 = vrot.lane.b32.xlu0 %v3593, 32
        %v3632 = vpop.permute.xlu0 %3631
        %3633 = vrot.lane.b32.xlu0 %v3594, 32
        %v3634 = vpop.permute.xlu0 %3633
        %3635 = vrot.lane.b32.xlu0 %v3595, 32
        %v3636 = vpop.permute.xlu0 %3635
        %3637 = vrot.lane.b32.xlu0 %v3596, 32
        %v3638 = vpop.permute.xlu0 %3637
        %3639 = vrot.lane.b32.xlu0 %v3597, 32
        %v3640 = vpop.permute.xlu0 %3639
        %3641 = vrot.lane.b32.xlu0 %v3598, 32
        %v3642 = vpop.permute.xlu0 %3641
        %3643 = vrot.lane.b32.xlu0 %v3599, 32
        %v3644 = vpop.permute.xlu0 %3643
        %3645 = vrot.lane.b32.xlu0 %v3600, 32
        %v3646 = vpop.permute.xlu0 %3645
        %3647 = vrot.lane.b32.xlu0 %v3601, 32
        %v3648 = vpop.permute.xlu0 %3647
        %3649 = vrot.lane.b32.xlu0 %v3602, 32
        %v3650 = vpop.permute.xlu0 %3649
        %3651 = vrot.lane.b32.xlu0 %v3603, 32
        %v3652 = vpop.permute.xlu0 %3651
        %3653 = vrot.lane.b32.xlu0 %v3604, 32
        %v3654 = vpop.permute.xlu0 %3653
        %3655 = vrot.lane.b32.xlu0 %v3605, 32
        %v3656 = vpop.permute.xlu0 %3655
        %3657 = vrot.lane.b32.xlu0 %v3606, 32
        %v3658 = vpop.permute.xlu0 %3657
        %3659 = vrot.lane.b32.xlu0 %v3607, 32
        %v3660 = vpop.permute.xlu0 %3659
        %3661 = vrot.lane.b32.xlu0 %v3608, 32
        %v3662 = vpop.permute.xlu0 %3661
        %v3663 = vsel %vm1570, %v3628, %v3630
        %v3664 = vsel %vm1570, %v3630, %v3632
        %v3665 = vsel %vm1570, %v3632, %v3634
        %v3666 = vsel %vm1570, %v3634, %v3636
        %v3667 = vsel %vm1570, %v3636, %v3638
        %v3668 = vsel %vm1570, %v3638, %v3640
        %v3669 = vsel %vm1570, %v3640, %v3642
        %v3670 = vsel %vm1570, %v3642, %v3644
        %v3671 = vsel %vm1570, %v3646, %v3648
        %v3672 = vsel %vm1570, %v3648, %v3650
        %v3673 = vsel %vm1570, %v3650, %v3652
        %v3674 = vsel %vm1570, %v3652, %v3654
        %v3675 = vsel %vm1570, %v3654, %v3656
        %v3676 = vsel %vm1570, %v3656, %v3658
        %v3677 = vsel %vm1570, %v3658, %v3660
        %v3678 = vsel %vm1570, %v3660, %v3662
        %3695 = vst [vmem:[#allocation3 + $0x80] sm:$0xff] %v3663
        %3696 = vst [vmem:[#allocation3 + $0x88] sm:$0xff] %v3664
        %3697 = vst [vmem:[#allocation3 + $0x90] sm:$0xff] %v3665
        %3698 = vst [vmem:[#allocation3 + $0x98] sm:$0xff] %v3666
        %3699 = vst [vmem:[#allocation3 + $0xa0] sm:$0xff] %v3667
        %3700 = vst [vmem:[#allocation3 + $0xa8] sm:$0xff] %v3668
        %3701 = vst [vmem:[#allocation3 + $0xb0] sm:$0xff] %v3669
        %3702 = vst [vmem:[#allocation3 + $0xb8] sm:$0xff] %v3670
        %3703 = vst [vmem:[#allocation3 + $0xc0] sm:$0xff] %v3671
        %3704 = vst [vmem:[#allocation3 + $0xc8] sm:$0xff] %v3672
        %3705 = vst [vmem:[#allocation3 + $0xd0] sm:$0xff] %v3673
        %3706 = vst [vmem:[#allocation3 + $0xd8] sm:$0xff] %v3674
        %3707 = vst [vmem:[#allocation3 + $0xe0] sm:$0xff] %v3675
        %3708 = vst [vmem:[#allocation3 + $0xe8] sm:$0xff] %v3676
        %3709 = vst [vmem:[#allocation3 + $0xf0] sm:$0xff] %v3677
        %3710 = vst [vmem:[#allocation3 + $0xf8] sm:$0xff] %v3678
        %v3711 = vld [vmem:[#allocation2] sm:$0xff]
        %v3712 = vld [vmem:[#allocation2 + $0x8] sm:$0xff]
        %v3713 = vld [vmem:[#allocation2 + $0x10] sm:$0xff]
        %v3714 = vld [vmem:[#allocation2 + $0x18] sm:$0xff]
        %v3715 = vld [vmem:[#allocation2 + $0x20] sm:$0xff]
        %v3716 = vld [vmem:[#allocation2 + $0x28] sm:$0xff]
        %v3717 = vld [vmem:[#allocation2 + $0x30] sm:$0xff]
        %v3718 = vld [vmem:[#allocation2 + $0x38] sm:$0xff]
        %v3719 = vld [vmem:[#allocation2 + $0x40] sm:$0xff]
        %v3720 = vld [vmem:[#allocation2 + $0x50] sm:$0xff]
        %v3721 = vld [vmem:[#allocation2 + $0x58] sm:$0xff]
        %v3722 = vld [vmem:[#allocation2 + $0x60] sm:$0xff]
        %v3723 = vld [vmem:[#allocation2 + $0x68] sm:$0xff]
        %v3724 = vld [vmem:[#allocation2 + $0x70] sm:$0xff]
        %v3725 = vld [vmem:[#allocation2 + $0x78] sm:$0xff]
        %v3726 = vld [vmem:[#allocation2 + $0x80] sm:$0xff]
        %v3727 = vld [vmem:[#allocation2 + $0x88] sm:$0xff]
        %v3728 = vld [vmem:[#allocation2 + $0x90] sm:$0xff]
        %v3729 = vmul.f32 %v3711, %v1678
        %v3730 = vmul.f32 %v3712, %v1694
        %v3731 = vmul.f32 %v3713, %v1695
        %v3732 = vmul.f32 %v3714, %v1696
        %v3733 = vmul.f32 %v3715, %v1697
        %v3734 = vmul.f32 %v3716, %v1698
        %v3735 = vmul.f32 %v3717, %v1699
        %v3736 = vmul.f32 %v3718, %v1700
        %v3737 = vmul.f32 %v3719, %v1692
        %v3738 = vmul.f32 %v3720, %v1678
        %v3739 = vmul.f32 %v3721, %v1694
        %v3740 = vmul.f32 %v3722, %v1695
        %v3741 = vmul.f32 %v3723, %v1696
        %v3742 = vmul.f32 %v3724, %v1697
        %v3743 = vmul.f32 %v3725, %v1698
        %v3744 = vmul.f32 %v3726, %v1699
        %v3745 = vmul.f32 %v3727, %v1700
        %v3746 = vmul.f32 %v3728, %v1692
        %3765 = vrot.lane.b32.xlu0 %v3729, 31
        %v3766 = vpop.permute.xlu0 %3765
        %3767 = vrot.lane.b32.xlu0 %v3730, 31
        %v3768 = vpop.permute.xlu0 %3767
        %3769 = vrot.lane.b32.xlu0 %v3731, 31
        %v3770 = vpop.permute.xlu0 %3769
        %3771 = vrot.lane.b32.xlu0 %v3732, 31
        %v3772 = vpop.permute.xlu0 %3771
        %3773 = vrot.lane.b32.xlu0 %v3733, 31
        %v3774 = vpop.permute.xlu0 %3773
        %3775 = vrot.lane.b32.xlu0 %v3734, 31
        %v3776 = vpop.permute.xlu0 %3775
        %3777 = vrot.lane.b32.xlu0 %v3735, 31
        %v3778 = vpop.permute.xlu0 %3777
        %3779 = vrot.lane.b32.xlu0 %v3736, 31
        %v3780 = vpop.permute.xlu0 %3779
        %3781 = vrot.lane.b32.xlu0 %v3737, 31
        %v3782 = vpop.permute.xlu0 %3781
        %3783 = vrot.lane.b32.xlu0 %v3738, 31
        %v3784 = vpop.permute.xlu0 %3783
        %3785 = vrot.lane.b32.xlu0 %v3739, 31
        %v3786 = vpop.permute.xlu0 %3785
        %3787 = vrot.lane.b32.xlu0 %v3740, 31
        %v3788 = vpop.permute.xlu0 %3787
        %3789 = vrot.lane.b32.xlu0 %v3741, 31
        %v3790 = vpop.permute.xlu0 %3789
        %3791 = vrot.lane.b32.xlu0 %v3742, 31
        %v3792 = vpop.permute.xlu0 %3791
        %3793 = vrot.lane.b32.xlu0 %v3743, 31
        %v3794 = vpop.permute.xlu0 %3793
        %3795 = vrot.lane.b32.xlu0 %v3744, 31
        %v3796 = vpop.permute.xlu0 %3795
        %3797 = vrot.lane.b32.xlu0 %v3745, 31
        %v3798 = vpop.permute.xlu0 %3797
        %3799 = vrot.lane.b32.xlu0 %v3746, 31
        %v3800 = vpop.permute.xlu0 %3799
        %v3801 = vsel %vm1782, %v3766, %v3768
        %v3802 = vsel %vm1782, %v3768, %v3770
        %v3803 = vsel %vm1782, %v3770, %v3772
        %v3804 = vsel %vm1782, %v3772, %v3774
        %v3805 = vsel %vm1782, %v3774, %v3776
        %v3806 = vsel %vm1782, %v3776, %v3778
        %v3807 = vsel %vm1782, %v3778, %v3780
        %v3808 = vsel %vm1782, %v3780, %v3782
        %v3809 = vsel %vm1782, %v3784, %v3786
        %v3810 = vsel %vm1782, %v3786, %v3788
        %v3811 = vsel %vm1782, %v3788, %v3790
        %v3812 = vsel %vm1782, %v3790, %v3792
        %v3813 = vsel %vm1782, %v3792, %v3794
        %v3814 = vsel %vm1782, %v3794, %v3796
        %v3815 = vsel %vm1782, %v3796, %v3798
        %v3816 = vsel %vm1782, %v3798, %v3800
        %3833 = vst [vmem:[#allocation3 + $0x100] sm:$0xff] %v3801
        %3834 = vst [vmem:[#allocation3 + $0x108] sm:$0xff] %v3802
        %3835 = vst [vmem:[#allocation3 + $0x110] sm:$0xff] %v3803
        %3836 = vst [vmem:[#allocation3 + $0x118] sm:$0xff] %v3804
        %3837 = vst [vmem:[#allocation3 + $0x120] sm:$0xff] %v3805
        %3838 = vst [vmem:[#allocation3 + $0x128] sm:$0xff] %v3806
        %3839 = vst [vmem:[#allocation3 + $0x130] sm:$0xff] %v3807
        %3840 = vst [vmem:[#allocation3 + $0x138] sm:$0xff] %v3808
        %3841 = vst [vmem:[#allocation3 + $0x140] sm:$0xff] %v3809
        %3842 = vst [vmem:[#allocation3 + $0x148] sm:$0xff] %v3810
        %3843 = vst [vmem:[#allocation3 + $0x150] sm:$0xff] %v3811
        %3844 = vst [vmem:[#allocation3 + $0x158] sm:$0xff] %v3812
        %3845 = vst [vmem:[#allocation3 + $0x160] sm:$0xff] %v3813
        %3846 = vst [vmem:[#allocation3 + $0x168] sm:$0xff] %v3814
        %3847 = vst [vmem:[#allocation3 + $0x170] sm:$0xff] %v3815
        %3848 = vst [vmem:[#allocation3 + $0x178] sm:$0xff] %v3816
        %v3849 = vld [vmem:[#allocation2] sm:$0xff]
        %v3850 = vld [vmem:[#allocation2 + $0x8] sm:$0xff]
        %v3851 = vld [vmem:[#allocation2 + $0x10] sm:$0xff]
        %v3852 = vld [vmem:[#allocation2 + $0x18] sm:$0xff]
        %v3853 = vld [vmem:[#allocation2 + $0x20] sm:$0xff]
        %v3854 = vld [vmem:[#allocation2 + $0x28] sm:$0xff]
        %v3855 = vld [vmem:[#allocation2 + $0x30] sm:$0xff]
        %v3856 = vld [vmem:[#allocation2 + $0x38] sm:$0xff]
        %v3857 = vld [vmem:[#allocation2 + $0x40] sm:$0xff]
        %v3858 = vld [vmem:[#allocation2 + $0x50] sm:$0xff]
        %v3859 = vld [vmem:[#allocation2 + $0x58] sm:$0xff]
        %v3860 = vld [vmem:[#allocation2 + $0x60] sm:$0xff]
        %v3861 = vld [vmem:[#allocation2 + $0x68] sm:$0xff]
        %v3862 = vld [vmem:[#allocation2 + $0x70] sm:$0xff]
        %v3863 = vld [vmem:[#allocation2 + $0x78] sm:$0xff]
        %v3864 = vld [vmem:[#allocation2 + $0x80] sm:$0xff]
        %v3865 = vld [vmem:[#allocation2 + $0x88] sm:$0xff]
        %v3866 = vld [vmem:[#allocation2 + $0x90] sm:$0xff]
        %v3867 = vmul.f32 %v3849, %v1890
        %v3868 = vmul.f32 %v3850, %v1906
        %v3869 = vmul.f32 %v3851, %v1907
        %v3870 = vmul.f32 %v3852, %v1908
        %v3871 = vmul.f32 %v3853, %v1909
        %v3872 = vmul.f32 %v3854, %v1910
        %v3873 = vmul.f32 %v3855, %v1911
        %v3874 = vmul.f32 %v3856, %v1912
        %v3875 = vmul.f32 %v3857, %v1904
        %v3876 = vmul.f32 %v3858, %v1890
        %v3877 = vmul.f32 %v3859, %v1906
        %v3878 = vmul.f32 %v3860, %v1907
        %v3879 = vmul.f32 %v3861, %v1908
        %v3880 = vmul.f32 %v3862, %v1909
        %v3881 = vmul.f32 %v3863, %v1910
        %v3882 = vmul.f32 %v3864, %v1911
        %v3883 = vmul.f32 %v3865, %v1912
        %v3884 = vmul.f32 %v3866, %v1904
        %3903 = vrot.lane.b32.xlu0 %v3867, 1
        %v3904 = vpop.permute.xlu0 %3903
        %3905 = vrot.lane.b32.xlu0 %v3868, 1
        %v3906 = vpop.permute.xlu0 %3905
        %3907 = vrot.lane.b32.xlu0 %v3869, 1
        %v3908 = vpop.permute.xlu0 %3907
        %3909 = vrot.lane.b32.xlu0 %v3870, 1
        %v3910 = vpop.permute.xlu0 %3909
        %3911 = vrot.lane.b32.xlu0 %v3871, 1
        %v3912 = vpop.permute.xlu0 %3911
        %3913 = vrot.lane.b32.xlu0 %v3872, 1
        %v3914 = vpop.permute.xlu0 %3913
        %3915 = vrot.lane.b32.xlu0 %v3873, 1
        %v3916 = vpop.permute.xlu0 %3915
        %3917 = vrot.lane.b32.xlu0 %v3874, 1
        %v3918 = vpop.permute.xlu0 %3917
        %3919 = vrot.lane.b32.xlu0 %v3875, 1
        %v3920 = vpop.permute.xlu0 %3919
        %3921 = vrot.lane.b32.xlu0 %v3876, 1
        %v3922 = vpop.permute.xlu0 %3921
        %3923 = vrot.lane.b32.xlu0 %v3877, 1
        %v3924 = vpop.permute.xlu0 %3923
        %3925 = vrot.lane.b32.xlu0 %v3878, 1
        %v3926 = vpop.permute.xlu0 %3925
        %3927 = vrot.lane.b32.xlu0 %v3879, 1
        %v3928 = vpop.permute.xlu0 %3927
        %3929 = vrot.lane.b32.xlu0 %v3880, 1
        %v3930 = vpop.permute.xlu0 %3929
        %3931 = vrot.lane.b32.xlu0 %v3881, 1
        %v3932 = vpop.permute.xlu0 %3931
        %3933 = vrot.lane.b32.xlu0 %v3882, 1
        %v3934 = vpop.permute.xlu0 %3933
        %3935 = vrot.lane.b32.xlu0 %v3883, 1
        %v3936 = vpop.permute.xlu0 %3935
        %3937 = vrot.lane.b32.xlu0 %v3884, 1
        %v3938 = vpop.permute.xlu0 %3937
        %v3939 = vsel %vm1994, %v3904, %v3906
        %v3940 = vsel %vm1994, %v3906, %v3908
        %v3941 = vsel %vm1994, %v3908, %v3910
        %v3942 = vsel %vm1994, %v3910, %v3912
        %v3943 = vsel %vm1994, %v3912, %v3914
        %v3944 = vsel %vm1994, %v3914, %v3916
        %v3945 = vsel %vm1994, %v3916, %v3918
        %v3946 = vsel %vm1994, %v3918, %v3920
        %v3947 = vsel %vm1994, %v3922, %v3924
        %v3948 = vsel %vm1994, %v3924, %v3926
        %v3949 = vsel %vm1994, %v3926, %v3928
        %v3950 = vsel %vm1994, %v3928, %v3930
        %v3951 = vsel %vm1994, %v3930, %v3932
        %v3952 = vsel %vm1994, %v3932, %v3934
        %v3953 = vsel %vm1994, %v3934, %v3936
        %v3954 = vsel %vm1994, %v3936, %v3938
        %3971 = vst [vmem:[#allocation3 + $0x180] sm:$0xff] %v3939
        %3972 = vst [vmem:[#allocation3 + $0x188] sm:$0xff] %v3940
        %3973 = vst [vmem:[#allocation3 + $0x190] sm:$0xff] %v3941
        %3974 = vst [vmem:[#allocation3 + $0x198] sm:$0xff] %v3942
        %3975 = vst [vmem:[#allocation3 + $0x1a0] sm:$0xff] %v3943
        %3976 = vst [vmem:[#allocation3 + $0x1a8] sm:$0xff] %v3944
        %3977 = vst [vmem:[#allocation3 + $0x1b0] sm:$0xff] %v3945
        %3978 = vst [vmem:[#allocation3 + $0x1b8] sm:$0xff] %v3946
        %3979 = vst [vmem:[#allocation3 + $0x1c0] sm:$0xff] %v3947
        %3980 = vst [vmem:[#allocation3 + $0x1c8] sm:$0xff] %v3948
        %3981 = vst [vmem:[#allocation3 + $0x1d0] sm:$0xff] %v3949
        %3982 = vst [vmem:[#allocation3 + $0x1d8] sm:$0xff] %v3950
        %3983 = vst [vmem:[#allocation3 + $0x1e0] sm:$0xff] %v3951
        %3984 = vst [vmem:[#allocation3 + $0x1e8] sm:$0xff] %v3952
        %3985 = vst [vmem:[#allocation3 + $0x1f0] sm:$0xff] %v3953
        %3986 = vst [vmem:[#allocation3 + $0x1f8] sm:$0xff] %v3954
        %v3987 = vld [vmem:[#allocation2 + $0x8] sm:$0xff]
        %v3988 = vld [vmem:[#allocation2 + $0x10] sm:$0xff]
        %v3989 = vld [vmem:[#allocation2 + $0x18] sm:$0xff]
        %v3990 = vld [vmem:[#allocation2 + $0x20] sm:$0xff]
        %v3991 = vld [vmem:[#allocation2 + $0x28] sm:$0xff]
        %v3992 = vld [vmem:[#allocation2 + $0x30] sm:$0xff]
        %v3993 = vld [vmem:[#allocation2 + $0x38] sm:$0xff]
        %v3994 = vld [vmem:[#allocation2 + $0x40] sm:$0xff]
        %v3995 = vld [vmem:[#allocation2 + $0x58] sm:$0xff]
        %v3996 = vld [vmem:[#allocation2 + $0x60] sm:$0xff]
        %v3997 = vld [vmem:[#allocation2 + $0x68] sm:$0xff]
        %v3998 = vld [vmem:[#allocation2 + $0x70] sm:$0xff]
        %v3999 = vld [vmem:[#allocation2 + $0x78] sm:$0xff]
        %v4000 = vld [vmem:[#allocation2 + $0x80] sm:$0xff]
        %v4001 = vld [vmem:[#allocation2 + $0x88] sm:$0xff]
        %v4002 = vld [vmem:[#allocation2 + $0x90] sm:$0xff]
        %v4003 = vmul.f32 %v3987, %v2062
        %v4004 = vmul.f32 %v3988, %v2066
        %v4005 = vmul.f32 %v3989, %v2070
        %v4006 = vmul.f32 %v3990, %v2074
        %v4007 = vmul.f32 %v3991, %v2078
        %v4008 = vmul.f32 %v3992, %v2082
        %v4009 = vmul.f32 %v3993, %v2086
        %v4010 = vmul.f32 %v3994, %v2090
        %v4011 = vmul.f32 %v3995, %v2062
        %v4012 = vmul.f32 %v3996, %v2066
        %v4013 = vmul.f32 %v3997, %v2070
        %v4014 = vmul.f32 %v3998, %v2074
        %v4015 = vmul.f32 %v3999, %v2078
        %v4016 = vmul.f32 %v4000, %v2082
        %v4017 = vmul.f32 %v4001, %v2086
        %v4018 = vmul.f32 %v4002, %v2090
        %4019 = vst [vmem:[#allocation3 + $0x200] sm:$0xff] %v4003
        %4020 = vst [vmem:[#allocation3 + $0x208] sm:$0xff] %v4004
        %4021 = vst [vmem:[#allocation3 + $0x210] sm:$0xff] %v4005
        %4022 = vst [vmem:[#allocation3 + $0x218] sm:$0xff] %v4006
        %4023 = vst [vmem:[#allocation3 + $0x220] sm:$0xff] %v4007
        %4024 = vst [vmem:[#allocation3 + $0x228] sm:$0xff] %v4008
        %4025 = vst [vmem:[#allocation3 + $0x230] sm:$0xff] %v4009
        %4026 = vst [vmem:[#allocation3 + $0x238] sm:$0xff] %v4010
        %4027 = vst [vmem:[#allocation3 + $0x240] sm:$0xff] %v4011
        %4028 = vst [vmem:[#allocation3 + $0x248] sm:$0xff] %v4012
        %4029 = vst [vmem:[#allocation3 + $0x250] sm:$0xff] %v4013
        %4030 = vst [vmem:[#allocation3 + $0x258] sm:$0xff] %v4014
        %4031 = vst [vmem:[#allocation3 + $0x260] sm:$0xff] %v4015
        %4032 = vst [vmem:[#allocation3 + $0x268] sm:$0xff] %v4016
        %4033 = vst [vmem:[#allocation3 + $0x270] sm:$0xff] %v4017
        %4034 = vst [vmem:[#allocation3 + $0x278] sm:$0xff] %v4018
        %v4035 = vld [vmem:[#allocation2 + $0x8] sm:$0xff]
        %v4036 = vld [vmem:[#allocation2 + $0x10] sm:$0xff]
        %v4037 = vld [vmem:[#allocation2 + $0x18] sm:$0xff]
        %v4038 = vld [vmem:[#allocation2 + $0x20] sm:$0xff]
        %v4039 = vld [vmem:[#allocation2 + $0x28] sm:$0xff]
        %v4040 = vld [vmem:[#allocation2 + $0x30] sm:$0xff]
        %v4041 = vld [vmem:[#allocation2 + $0x38] sm:$0xff]
        %v4042 = vld [vmem:[#allocation2 + $0x40] sm:$0xff]
        %v4043 = vld [vmem:[#allocation2 + $0x48] sm:$0xff]
        %v4044 = vld [vmem:[#allocation2 + $0x58] sm:$0xff]
        %v4045 = vld [vmem:[#allocation2 + $0x60] sm:$0xff]
        %v4046 = vld [vmem:[#allocation2 + $0x68] sm:$0xff]
        %v4047 = vld [vmem:[#allocation2 + $0x70] sm:$0xff]
        %v4048 = vld [vmem:[#allocation2 + $0x78] sm:$0xff]
        %v4049 = vld [vmem:[#allocation2 + $0x80] sm:$0xff]
        %v4050 = vld [vmem:[#allocation2 + $0x88] sm:$0xff]
        %v4051 = vld [vmem:[#allocation2 + $0x90] sm:$0xff]
        %v4052 = vld [vmem:[#allocation2 + $0x98] sm:$0xff]
        %v4053 = vmul.f32 %v4035, %v2182
        %v4054 = vmul.f32 %v4036, %v2197
        %v4055 = vmul.f32 %v4037, %v2198
        %v4056 = vmul.f32 %v4038, %v2199
        %v4057 = vmul.f32 %v4039, %v2200
        %v4058 = vmul.f32 %v4040, %v2201
        %v4059 = vmul.f32 %v4041, %v2202
        %v4060 = vmul.f32 %v4042, %v2203
        %v4061 = vmul.f32 %v4043, %v2196
        %v4062 = vmul.f32 %v4044, %v2182
        %v4063 = vmul.f32 %v4045, %v2197
        %v4064 = vmul.f32 %v4046, %v2198
        %v4065 = vmul.f32 %v4047, %v2199
        %v4066 = vmul.f32 %v4048, %v2200
        %v4067 = vmul.f32 %v4049, %v2201
        %v4068 = vmul.f32 %v4050, %v2202
        %v4069 = vmul.f32 %v4051, %v2203
        %v4070 = vmul.f32 %v4052, %v2196
        %4089 = vrot.lane.b32.xlu0 %v4053, 127
        %v4090 = vpop.permute.xlu0 %4089
        %4091 = vrot.lane.b32.xlu0 %v4054, 127
        %v4092 = vpop.permute.xlu0 %4091
        %4093 = vrot.lane.b32.xlu0 %v4055, 127
        %v4094 = vpop.permute.xlu0 %4093
        %4095 = vrot.lane.b32.xlu0 %v4056, 127
        %v4096 = vpop.permute.xlu0 %4095
        %4097 = vrot.lane.b32.xlu0 %v4057, 127
        %v4098 = vpop.permute.xlu0 %4097
        %4099 = vrot.lane.b32.xlu0 %v4058, 127
        %v4100 = vpop.permute.xlu0 %4099
        %4101 = vrot.lane.b32.xlu0 %v4059, 127
        %v4102 = vpop.permute.xlu0 %4101
        %4103 = vrot.lane.b32.xlu0 %v4060, 127
        %v4104 = vpop.permute.xlu0 %4103
        %4105 = vrot.lane.b32.xlu0 %v4061, 127
        %v4106 = vpop.permute.xlu0 %4105
        %4107 = vrot.lane.b32.xlu0 %v4062, 127
        %v4108 = vpop.permute.xlu0 %4107
        %4109 = vrot.lane.b32.xlu0 %v4063, 127
        %v4110 = vpop.permute.xlu0 %4109
        %4111 = vrot.lane.b32.xlu0 %v4064, 127
        %v4112 = vpop.permute.xlu0 %4111
        %4113 = vrot.lane.b32.xlu0 %v4065, 127
        %v4114 = vpop.permute.xlu0 %4113
        %4115 = vrot.lane.b32.xlu0 %v4066, 127
        %v4116 = vpop.permute.xlu0 %4115
        %4117 = vrot.lane.b32.xlu0 %v4067, 127
        %v4118 = vpop.permute.xlu0 %4117
        %4119 = vrot.lane.b32.xlu0 %v4068, 127
        %v4120 = vpop.permute.xlu0 %4119
        %4121 = vrot.lane.b32.xlu0 %v4069, 127
        %v4122 = vpop.permute.xlu0 %4121
        %4123 = vrot.lane.b32.xlu0 %v4070, 127
        %v4124 = vpop.permute.xlu0 %4123
        %v4125 = vsel %vm1905, %v4090, %v4092
        %v4126 = vsel %vm1905, %v4092, %v4094
        %v4127 = vsel %vm1905, %v4094, %v4096
        %v4128 = vsel %vm1905, %v4096, %v4098
        %v4129 = vsel %vm1905, %v4098, %v4100
        %v4130 = vsel %vm1905, %v4100, %v4102
        %v4131 = vsel %vm1905, %v4102, %v4104
        %v4132 = vsel %vm1905, %v4104, %v4106
        %v4133 = vsel %vm1905, %v4108, %v4110
        %v4134 = vsel %vm1905, %v4110, %v4112
        %v4135 = vsel %vm1905, %v4112, %v4114
        %v4136 = vsel %vm1905, %v4114, %v4116
        %v4137 = vsel %vm1905, %v4116, %v4118
        %v4138 = vsel %vm1905, %v4118, %v4120
        %v4139 = vsel %vm1905, %v4120, %v4122
        %v4140 = vsel %vm1905, %v4122, %v4124
        %4157 = vst [vmem:[#allocation3 + $0x280] sm:$0xff] %v4125
        %4158 = vst [vmem:[#allocation3 + $0x288] sm:$0xff] %v4126
        %4159 = vst [vmem:[#allocation3 + $0x290] sm:$0xff] %v4127
        %4160 = vst [vmem:[#allocation3 + $0x298] sm:$0xff] %v4128
        %4161 = vst [vmem:[#allocation3 + $0x2a0] sm:$0xff] %v4129
        %4162 = vst [vmem:[#allocation3 + $0x2a8] sm:$0xff] %v4130
        %4163 = vst [vmem:[#allocation3 + $0x2b0] sm:$0xff] %v4131
        %4164 = vst [vmem:[#allocation3 + $0x2b8] sm:$0xff] %v4132
        %4165 = vst [vmem:[#allocation3 + $0x2c0] sm:$0xff] %v4133
        %4166 = vst [vmem:[#allocation3 + $0x2c8] sm:$0xff] %v4134
        %4167 = vst [vmem:[#allocation3 + $0x2d0] sm:$0xff] %v4135
        %4168 = vst [vmem:[#allocation3 + $0x2d8] sm:$0xff] %v4136
        %4169 = vst [vmem:[#allocation3 + $0x2e0] sm:$0xff] %v4137
        %4170 = vst [vmem:[#allocation3 + $0x2e8] sm:$0xff] %v4138
        %4171 = vst [vmem:[#allocation3 + $0x2f0] sm:$0xff] %v4139
        %4172 = vst [vmem:[#allocation3 + $0x2f8] sm:$0xff] %v4140
        %v4173 = vld [vmem:[#allocation2 + $0x8] sm:$0xff]
        %v4174 = vld [vmem:[#allocation2 + $0x10] sm:$0xff]
        %v4175 = vld [vmem:[#allocation2 + $0x18] sm:$0xff]
        %v4176 = vld [vmem:[#allocation2 + $0x20] sm:$0xff]
        %v4177 = vld [vmem:[#allocation2 + $0x28] sm:$0xff]
        %v4178 = vld [vmem:[#allocation2 + $0x30] sm:$0xff]
        %v4179 = vld [vmem:[#allocation2 + $0x38] sm:$0xff]
        %v4180 = vld [vmem:[#allocation2 + $0x40] sm:$0xff]
        %v4181 = vld [vmem:[#allocation2 + $0x48] sm:$0xff]
        %v4182 = vld [vmem:[#allocation2 + $0x58] sm:$0xff]
        %v4183 = vld [vmem:[#allocation2 + $0x60] sm:$0xff]
        %v4184 = vld [vmem:[#allocation2 + $0x68] sm:$0xff]
        %v4185 = vld [vmem:[#allocation2 + $0x70] sm:$0xff]
        %v4186 = vld [vmem:[#allocation2 + $0x78] sm:$0xff]
        %v4187 = vld [vmem:[#allocation2 + $0x80] sm:$0xff]
        %v4188 = vld [vmem:[#allocation2 + $0x88] sm:$0xff]
        %v4189 = vld [vmem:[#allocation2 + $0x90] sm:$0xff]
        %v4190 = vld [vmem:[#allocation2 + $0x98] sm:$0xff]
        %v4191 = vmul.f32 %v4173, %v2392
        %v4192 = vmul.f32 %v4174, %v2407
        %v4193 = vmul.f32 %v4175, %v2408
        %v4194 = vmul.f32 %v4176, %v2409
        %v4195 = vmul.f32 %v4177, %v2410
        %v4196 = vmul.f32 %v4178, %v2411
        %v4197 = vmul.f32 %v4179, %v2412
        %v4198 = vmul.f32 %v4180, %v2413
        %v4199 = vmul.f32 %v4181, %v2406
        %v4200 = vmul.f32 %v4182, %v2392
        %v4201 = vmul.f32 %v4183, %v2407
        %v4202 = vmul.f32 %v4184, %v2408
        %v4203 = vmul.f32 %v4185, %v2409
        %v4204 = vmul.f32 %v4186, %v2410
        %v4205 = vmul.f32 %v4187, %v2411
        %v4206 = vmul.f32 %v4188, %v2412
        %v4207 = vmul.f32 %v4189, %v2413
        %v4208 = vmul.f32 %v4190, %v2406
        %4227 = vrot.lane.b32.xlu0 %v4191, 97
        %v4228 = vpop.permute.xlu0 %4227
        %4229 = vrot.lane.b32.xlu0 %v4192, 97
        %v4230 = vpop.permute.xlu0 %4229
        %4231 = vrot.lane.b32.xlu0 %v4193, 97
        %v4232 = vpop.permute.xlu0 %4231
        %4233 = vrot.lane.b32.xlu0 %v4194, 97
        %v4234 = vpop.permute.xlu0 %4233
        %4235 = vrot.lane.b32.xlu0 %v4195, 97
        %v4236 = vpop.permute.xlu0 %4235
        %4237 = vrot.lane.b32.xlu0 %v4196, 97
        %v4238 = vpop.permute.xlu0 %4237
        %4239 = vrot.lane.b32.xlu0 %v4197, 97
        %v4240 = vpop.permute.xlu0 %4239
        %4241 = vrot.lane.b32.xlu0 %v4198, 97
        %v4242 = vpop.permute.xlu0 %4241
        %4243 = vrot.lane.b32.xlu0 %v4199, 97
        %v4244 = vpop.permute.xlu0 %4243
        %4245 = vrot.lane.b32.xlu0 %v4200, 97
        %v4246 = vpop.permute.xlu0 %4245
        %4247 = vrot.lane.b32.xlu0 %v4201, 97
        %v4248 = vpop.permute.xlu0 %4247
        %4249 = vrot.lane.b32.xlu0 %v4202, 97
        %v4250 = vpop.permute.xlu0 %4249
        %4251 = vrot.lane.b32.xlu0 %v4203, 97
        %v4252 = vpop.permute.xlu0 %4251
        %4253 = vrot.lane.b32.xlu0 %v4204, 97
        %v4254 = vpop.permute.xlu0 %4253
        %4255 = vrot.lane.b32.xlu0 %v4205, 97
        %v4256 = vpop.permute.xlu0 %4255
        %4257 = vrot.lane.b32.xlu0 %v4206, 97
        %v4258 = vpop.permute.xlu0 %4257
        %4259 = vrot.lane.b32.xlu0 %v4207, 97
        %v4260 = vpop.permute.xlu0 %4259
        %4261 = vrot.lane.b32.xlu0 %v4208, 97
        %v4262 = vpop.permute.xlu0 %4261
        %v4263 = vsel %vm1693, %v4228, %v4230
        %v4264 = vsel %vm1693, %v4230, %v4232
        %v4265 = vsel %vm1693, %v4232, %v4234
        %v4266 = vsel %vm1693, %v4234, %v4236
        %v4267 = vsel %vm1693, %v4236, %v4238
        %v4268 = vsel %vm1693, %v4238, %v4240
        %v4269 = vsel %vm1693, %v4240, %v4242
        %v4270 = vsel %vm1693, %v4242, %v4244
        %v4271 = vsel %vm1693, %v4246, %v4248
        %v4272 = vsel %vm1693, %v4248, %v4250
        %v4273 = vsel %vm1693, %v4250, %v4252
        %v4274 = vsel %vm1693, %v4252, %v4254
        %v4275 = vsel %vm1693, %v4254, %v4256
        %v4276 = vsel %vm1693, %v4256, %v4258
        %v4277 = vsel %vm1693, %v4258, %v4260
        %v4278 = vsel %vm1693, %v4260, %v4262
        %4295 = vst [vmem:[#allocation3 + $0x300] sm:$0xff] %v4263
        %4296 = vst [vmem:[#allocation3 + $0x308] sm:$0xff] %v4264
        %4297 = vst [vmem:[#allocation3 + $0x310] sm:$0xff] %v4265
        %4298 = vst [vmem:[#allocation3 + $0x318] sm:$0xff] %v4266
        %4299 = vst [vmem:[#allocation3 + $0x320] sm:$0xff] %v4267
        %4300 = vst [vmem:[#allocation3 + $0x328] sm:$0xff] %v4268
        %4301 = vst [vmem:[#allocation3 + $0x330] sm:$0xff] %v4269
        %4302 = vst [vmem:[#allocation3 + $0x338] sm:$0xff] %v4270
        %4303 = vst [vmem:[#allocation3 + $0x340] sm:$0xff] %v4271
        %4304 = vst [vmem:[#allocation3 + $0x348] sm:$0xff] %v4272
        %4305 = vst [vmem:[#allocation3 + $0x350] sm:$0xff] %v4273
        %4306 = vst [vmem:[#allocation3 + $0x358] sm:$0xff] %v4274
        %4307 = vst [vmem:[#allocation3 + $0x360] sm:$0xff] %v4275
        %4308 = vst [vmem:[#allocation3 + $0x368] sm:$0xff] %v4276
        %4309 = vst [vmem:[#allocation3 + $0x370] sm:$0xff] %v4277
        %4310 = vst [vmem:[#allocation3 + $0x378] sm:$0xff] %v4278
        %v4311 = vld [vmem:[#allocation2 + $0x8] sm:$0xff]
        %v4312 = vld [vmem:[#allocation2 + $0x10] sm:$0xff]
        %v4313 = vld [vmem:[#allocation2 + $0x18] sm:$0xff]
        %v4314 = vld [vmem:[#allocation2 + $0x20] sm:$0xff]
        %v4315 = vld [vmem:[#allocation2 + $0x28] sm:$0xff]
        %v4316 = vld [vmem:[#allocation2 + $0x30] sm:$0xff]
        %v4317 = vld [vmem:[#allocation2 + $0x38] sm:$0xff]
        %v4318 = vld [vmem:[#allocation2 + $0x40] sm:$0xff]
        %v4319 = vld [vmem:[#allocation2 + $0x48] sm:$0xff]
        %v4320 = vld [vmem:[#allocation2 + $0x58] sm:$0xff]
        %v4321 = vld [vmem:[#allocation2 + $0x60] sm:$0xff]
        %v4322 = vld [vmem:[#allocation2 + $0x68] sm:$0xff]
        %v4323 = vld [vmem:[#allocation2 + $0x70] sm:$0xff]
        %v4324 = vld [vmem:[#allocation2 + $0x78] sm:$0xff]
        %v4325 = vld [vmem:[#allocation2 + $0x80] sm:$0xff]
        %v4326 = vld [vmem:[#allocation2 + $0x88] sm:$0xff]
        %v4327 = vld [vmem:[#allocation2 + $0x90] sm:$0xff]
        %v4328 = vld [vmem:[#allocation2 + $0x98] sm:$0xff]
        %v4329 = vmul.f32 %v4311, %v2602
        %v4330 = vmul.f32 %v4312, %v2617
        %v4331 = vmul.f32 %v4313, %v2618
        %v4332 = vmul.f32 %v4314, %v2619
        %v4333 = vmul.f32 %v4315, %v2620
        %v4334 = vmul.f32 %v4316, %v2621
        %v4335 = vmul.f32 %v4317, %v2622
        %v4336 = vmul.f32 %v4318, %v2623
        %v4337 = vmul.f32 %v4319, %v2616
        %v4338 = vmul.f32 %v4320, %v2602
        %v4339 = vmul.f32 %v4321, %v2617
        %v4340 = vmul.f32 %v4322, %v2618
        %v4341 = vmul.f32 %v4323, %v2619
        %v4342 = vmul.f32 %v4324, %v2620
        %v4343 = vmul.f32 %v4325, %v2621
        %v4344 = vmul.f32 %v4326, %v2622
        %v4345 = vmul.f32 %v4327, %v2623
        %v4346 = vmul.f32 %v4328, %v2616
        %4365 = vrot.lane.b32.xlu0 %v4329, 96
        %v4366 = vpop.permute.xlu0 %4365
        %4367 = vrot.lane.b32.xlu0 %v4330, 96
        %v4368 = vpop.permute.xlu0 %4367
        %4369 = vrot.lane.b32.xlu0 %v4331, 96
        %v4370 = vpop.permute.xlu0 %4369
        %4371 = vrot.lane.b32.xlu0 %v4332, 96
        %v4372 = vpop.permute.xlu0 %4371
        %4373 = vrot.lane.b32.xlu0 %v4333, 96
        %v4374 = vpop.permute.xlu0 %4373
        %4375 = vrot.lane.b32.xlu0 %v4334, 96
        %v4376 = vpop.permute.xlu0 %4375
        %4377 = vrot.lane.b32.xlu0 %v4335, 96
        %v4378 = vpop.permute.xlu0 %4377
        %4379 = vrot.lane.b32.xlu0 %v4336, 96
        %v4380 = vpop.permute.xlu0 %4379
        %4381 = vrot.lane.b32.xlu0 %v4337, 96
        %v4382 = vpop.permute.xlu0 %4381
        %4383 = vrot.lane.b32.xlu0 %v4338, 96
        %v4384 = vpop.permute.xlu0 %4383
        %4385 = vrot.lane.b32.xlu0 %v4339, 96
        %v4386 = vpop.permute.xlu0 %4385
        %4387 = vrot.lane.b32.xlu0 %v4340, 96
        %v4388 = vpop.permute.xlu0 %4387
        %4389 = vrot.lane.b32.xlu0 %v4341, 96
        %v4390 = vpop.permute.xlu0 %4389
        %4391 = vrot.lane.b32.xlu0 %v4342, 96
        %v4392 = vpop.permute.xlu0 %4391
        %4393 = vrot.lane.b32.xlu0 %v4343, 96
        %v4394 = vpop.permute.xlu0 %4393
        %4395 = vrot.lane.b32.xlu0 %v4344, 96
        %v4396 = vpop.permute.xlu0 %4395
        %4397 = vrot.lane.b32.xlu0 %v4345, 96
        %v4398 = vpop.permute.xlu0 %4397
        %4399 = vrot.lane.b32.xlu0 %v4346, 96
        %v4400 = vpop.permute.xlu0 %4399
        %v4401 = vsel %vm1481, %v4366, %v4368
        %v4402 = vsel %vm1481, %v4368, %v4370
        %v4403 = vsel %vm1481, %v4370, %v4372
        %v4404 = vsel %vm1481, %v4372, %v4374
        %v4405 = vsel %vm1481, %v4374, %v4376
        %v4406 = vsel %vm1481, %v4376, %v4378
        %v4407 = vsel %vm1481, %v4378, %v4380
        %v4408 = vsel %vm1481, %v4380, %v4382
        %v4409 = vsel %vm1481, %v4384, %v4386
        %v4410 = vsel %vm1481, %v4386, %v4388
        %v4411 = vsel %vm1481, %v4388, %v4390
        %v4412 = vsel %vm1481, %v4390, %v4392
        %v4413 = vsel %vm1481, %v4392, %v4394
        %v4414 = vsel %vm1481, %v4394, %v4396
        %v4415 = vsel %vm1481, %v4396, %v4398
        %v4416 = vsel %vm1481, %v4398, %v4400
        %4433 = vst [vmem:[#allocation3 + $0x380] sm:$0xff] %v4401
        %4434 = vst [vmem:[#allocation3 + $0x388] sm:$0xff] %v4402
        %4435 = vst [vmem:[#allocation3 + $0x390] sm:$0xff] %v4403
        %4436 = vst [vmem:[#allocation3 + $0x398] sm:$0xff] %v4404
        %4437 = vst [vmem:[#allocation3 + $0x3a0] sm:$0xff] %v4405
        %4438 = vst [vmem:[#allocation3 + $0x3a8] sm:$0xff] %v4406
        %4439 = vst [vmem:[#allocation3 + $0x3b0] sm:$0xff] %v4407
        %4440 = vst [vmem:[#allocation3 + $0x3b8] sm:$0xff] %v4408
        %4441 = vst [vmem:[#allocation3 + $0x3c0] sm:$0xff] %v4409
        %4442 = vst [vmem:[#allocation3 + $0x3c8] sm:$0xff] %v4410
        %4443 = vst [vmem:[#allocation3 + $0x3d0] sm:$0xff] %v4411
        %4444 = vst [vmem:[#allocation3 + $0x3d8] sm:$0xff] %v4412
        %4445 = vst [vmem:[#allocation3 + $0x3e0] sm:$0xff] %v4413
        %4446 = vst [vmem:[#allocation3 + $0x3e8] sm:$0xff] %v4414
        %4447 = vst [vmem:[#allocation3 + $0x3f0] sm:$0xff] %v4415
        %4448 = vst [vmem:[#allocation3 + $0x3f8] sm:$0xff] %v4416
        %v4449 = vld [vmem:[#allocation2 + $0x8] sm:$0xff]
        %v4450 = vld [vmem:[#allocation2 + $0x10] sm:$0xff]
        %v4451 = vld [vmem:[#allocation2 + $0x18] sm:$0xff]
        %v4452 = vld [vmem:[#allocation2 + $0x20] sm:$0xff]
        %v4453 = vld [vmem:[#allocation2 + $0x28] sm:$0xff]
        %v4454 = vld [vmem:[#allocation2 + $0x30] sm:$0xff]
        %v4455 = vld [vmem:[#allocation2 + $0x38] sm:$0xff]
        %v4456 = vld [vmem:[#allocation2 + $0x40] sm:$0xff]
        %v4457 = vld [vmem:[#allocation2 + $0x48] sm:$0xff]
        %v4458 = vld [vmem:[#allocation2 + $0x58] sm:$0xff]
        %v4459 = vld [vmem:[#allocation2 + $0x60] sm:$0xff]
        %v4460 = vld [vmem:[#allocation2 + $0x68] sm:$0xff]
        %v4461 = vld [vmem:[#allocation2 + $0x70] sm:$0xff]
        %v4462 = vld [vmem:[#allocation2 + $0x78] sm:$0xff]
        %v4463 = vld [vmem:[#allocation2 + $0x80] sm:$0xff]
        %v4464 = vld [vmem:[#allocation2 + $0x88] sm:$0xff]
        %v4465 = vld [vmem:[#allocation2 + $0x90] sm:$0xff]
        %v4466 = vld [vmem:[#allocation2 + $0x98] sm:$0xff]
        %v4467 = vmul.f32 %v4449, %v2812
        %v4468 = vmul.f32 %v4450, %v2827
        %v4469 = vmul.f32 %v4451, %v2828
        %v4470 = vmul.f32 %v4452, %v2829
        %v4471 = vmul.f32 %v4453, %v2830
        %v4472 = vmul.f32 %v4454, %v2831
        %v4473 = vmul.f32 %v4455, %v2832
        %v4474 = vmul.f32 %v4456, %v2833
        %v4475 = vmul.f32 %v4457, %v2826
        %v4476 = vmul.f32 %v4458, %v2812
        %v4477 = vmul.f32 %v4459, %v2827
        %v4478 = vmul.f32 %v4460, %v2828
        %v4479 = vmul.f32 %v4461, %v2829
        %v4480 = vmul.f32 %v4462, %v2830
        %v4481 = vmul.f32 %v4463, %v2831
        %v4482 = vmul.f32 %v4464, %v2832
        %v4483 = vmul.f32 %v4465, %v2833
        %v4484 = vmul.f32 %v4466, %v2826
        %4503 = vrot.lane.b32.xlu0 %v4467, 95
        %v4504 = vpop.permute.xlu0 %4503
        %4505 = vrot.lane.b32.xlu0 %v4468, 95
        %v4506 = vpop.permute.xlu0 %4505
        %4507 = vrot.lane.b32.xlu0 %v4469, 95
        %v4508 = vpop.permute.xlu0 %4507
        %4509 = vrot.lane.b32.xlu0 %v4470, 95
        %v4510 = vpop.permute.xlu0 %4509
        %4511 = vrot.lane.b32.xlu0 %v4471, 95
        %v4512 = vpop.permute.xlu0 %4511
        %4513 = vrot.lane.b32.xlu0 %v4472, 95
        %v4514 = vpop.permute.xlu0 %4513
        %4515 = vrot.lane.b32.xlu0 %v4473, 95
        %v4516 = vpop.permute.xlu0 %4515
        %4517 = vrot.lane.b32.xlu0 %v4474, 95
        %v4518 = vpop.permute.xlu0 %4517
        %4519 = vrot.lane.b32.xlu0 %v4475, 95
        %v4520 = vpop.permute.xlu0 %4519
        %4521 = vrot.lane.b32.xlu0 %v4476, 95
        %v4522 = vpop.permute.xlu0 %4521
        %4523 = vrot.lane.b32.xlu0 %v4477, 95
        %v4524 = vpop.permute.xlu0 %4523
        %4525 = vrot.lane.b32.xlu0 %v4478, 95
        %v4526 = vpop.permute.xlu0 %4525
        %4527 = vrot.lane.b32.xlu0 %v4479, 95
        %v4528 = vpop.permute.xlu0 %4527
        %4529 = vrot.lane.b32.xlu0 %v4480, 95
        %v4530 = vpop.permute.xlu0 %4529
        %4531 = vrot.lane.b32.xlu0 %v4481, 95
        %v4532 = vpop.permute.xlu0 %4531
        %4533 = vrot.lane.b32.xlu0 %v4482, 95
        %v4534 = vpop.permute.xlu0 %4533
        %4535 = vrot.lane.b32.xlu0 %v4483, 95
        %v4536 = vpop.permute.xlu0 %4535
        %4537 = vrot.lane.b32.xlu0 %v4484, 95
        %v4538 = vpop.permute.xlu0 %4537
        %v4539 = vsel %vm1269, %v4504, %v4506
        %v4540 = vsel %vm1269, %v4506, %v4508
        %v4541 = vsel %vm1269, %v4508, %v4510
        %v4542 = vsel %vm1269, %v4510, %v4512
        %v4543 = vsel %vm1269, %v4512, %v4514
        %v4544 = vsel %vm1269, %v4514, %v4516
        %v4545 = vsel %vm1269, %v4516, %v4518
        %v4546 = vsel %vm1269, %v4518, %v4520
        %v4547 = vsel %vm1269, %v4522, %v4524
        %v4548 = vsel %vm1269, %v4524, %v4526
        %v4549 = vsel %vm1269, %v4526, %v4528
        %v4550 = vsel %vm1269, %v4528, %v4530
        %v4551 = vsel %vm1269, %v4530, %v4532
        %v4552 = vsel %vm1269, %v4532, %v4534
        %v4553 = vsel %vm1269, %v4534, %v4536
        %v4554 = vsel %vm1269, %v4536, %v4538
        %4571 = vst [vmem:[#allocation3 + $0x400] sm:$0xff] %v4539
        %4572 = vst [vmem:[#allocation3 + $0x408] sm:$0xff] %v4540
        %4573 = vst [vmem:[#allocation3 + $0x410] sm:$0xff] %v4541
        %4574 = vst [vmem:[#allocation3 + $0x418] sm:$0xff] %v4542
        %4575 = vst [vmem:[#allocation3 + $0x420] sm:$0xff] %v4543
        %4576 = vst [vmem:[#allocation3 + $0x428] sm:$0xff] %v4544
        %4577 = vst [vmem:[#allocation3 + $0x430] sm:$0xff] %v4545
        %4578 = vst [vmem:[#allocation3 + $0x438] sm:$0xff] %v4546
        %4579 = vst [vmem:[#allocation3 + $0x440] sm:$0xff] %v4547
        %4580 = vst [vmem:[#allocation3 + $0x448] sm:$0xff] %v4548
        %4581 = vst [vmem:[#allocation3 + $0x450] sm:$0xff] %v4549
        %4582 = vst [vmem:[#allocation3 + $0x458] sm:$0xff] %v4550
        %4583 = vst [vmem:[#allocation3 + $0x460] sm:$0xff] %v4551
        %4584 = vst [vmem:[#allocation3 + $0x468] sm:$0xff] %v4552
        %4585 = vst [vmem:[#allocation3 + $0x470] sm:$0xff] %v4553
        %4586 = vst [vmem:[#allocation3 + $0x478] sm:$0xff] %v4554
        %v4587 = vld [vmem:[%s8] sm:$0xff]
        %v4588 = vld [vmem:[#allocation3] sm:$0xff]
        %v4589 = vld [vmem:[#allocation3 + $0x8] sm:$0xff]
        %v4590 = vld [vmem:[#allocation3 + $0x10] sm:$0xff]
        %v4591 = vld [vmem:[#allocation3 + $0x18] sm:$0xff]
        %v4592 = vld [vmem:[#allocation3 + $0x20] sm:$0xff]
        %v4593 = vld [vmem:[#allocation3 + $0x28] sm:$0xff]
        %v4594 = vld [vmem:[#allocation3 + $0x30] sm:$0xff]
        %v4595 = vld [vmem:[#allocation3 + $0x38] sm:$0xff]
        %v4596 = vld [vmem:[#allocation3 + $0x40] sm:$0xff]
        %v4597 = vld [vmem:[#allocation3 + $0x48] sm:$0xff]
        %v4598 = vld [vmem:[#allocation3 + $0x50] sm:$0xff]
        %v4599 = vld [vmem:[#allocation3 + $0x58] sm:$0xff]
        %v4600 = vld [vmem:[#allocation3 + $0x60] sm:$0xff]
        %v4601 = vld [vmem:[#allocation3 + $0x68] sm:$0xff]
        %v4602 = vld [vmem:[#allocation3 + $0x70] sm:$0xff]
        %v4603 = vld [vmem:[#allocation3 + $0x78] sm:$0xff]
        %v4604 = vld [vmem:[#allocation3 + $0x80] sm:$0xff]
        %v4605 = vld [vmem:[#allocation3 + $0x88] sm:$0xff]
        %v4606 = vld [vmem:[#allocation3 + $0x90] sm:$0xff]
        %v4607 = vld [vmem:[#allocation3 + $0x98] sm:$0xff]
        %v4608 = vld [vmem:[#allocation3 + $0xa0] sm:$0xff]
        %v4609 = vld [vmem:[#allocation3 + $0xa8] sm:$0xff]
        %v4610 = vld [vmem:[#allocation3 + $0xb0] sm:$0xff]
        %v4611 = vld [vmem:[#allocation3 + $0xb8] sm:$0xff]
        %v4612 = vld [vmem:[#allocation3 + $0xc0] sm:$0xff]
        %v4613 = vld [vmem:[#allocation3 + $0xc8] sm:$0xff]
        %v4614 = vld [vmem:[#allocation3 + $0xd0] sm:$0xff]
        %v4615 = vld [vmem:[#allocation3 + $0xd8] sm:$0xff]
        %v4616 = vld [vmem:[#allocation3 + $0xe0] sm:$0xff]
        %v4617 = vld [vmem:[#allocation3 + $0xe8] sm:$0xff]
        %v4618 = vld [vmem:[#allocation3 + $0xf0] sm:$0xff]
        %v4619 = vld [vmem:[#allocation3 + $0xf8] sm:$0xff]
        %v4620 = vld [vmem:[#allocation3 + $0x100] sm:$0xff]
        %v4621 = vld [vmem:[#allocation3 + $0x108] sm:$0xff]
        %v4622 = vld [vmem:[#allocation3 + $0x110] sm:$0xff]
        %v4623 = vld [vmem:[#allocation3 + $0x118] sm:$0xff]
        %v4624 = vld [vmem:[#allocation3 + $0x120] sm:$0xff]
        %v4625 = vld [vmem:[#allocation3 + $0x128] sm:$0xff]
        %v4626 = vld [vmem:[#allocation3 + $0x130] sm:$0xff]
        %v4627 = vld [vmem:[#allocation3 + $0x138] sm:$0xff]
        %v4628 = vld [vmem:[#allocation3 + $0x140] sm:$0xff]
        %v4629 = vld [vmem:[#allocation3 + $0x148] sm:$0xff]
        %v4630 = vld [vmem:[#allocation3 + $0x150] sm:$0xff]
        %v4631 = vld [vmem:[#allocation3 + $0x158] sm:$0xff]
        %v4632 = vld [vmem:[#allocation3 + $0x160] sm:$0xff]
        %v4633 = vld [vmem:[#allocation3 + $0x168] sm:$0xff]
        %v4634 = vld [vmem:[#allocation3 + $0x170] sm:$0xff]
        %v4635 = vld [vmem:[#allocation3 + $0x178] sm:$0xff]
        %v4636 = vld [vmem:[#allocation3 + $0x180] sm:$0xff]
        %v4637 = vld [vmem:[#allocation3 + $0x188] sm:$0xff]
        %v4638 = vld [vmem:[#allocation3 + $0x190] sm:$0xff]
        %v4639 = vld [vmem:[#allocation3 + $0x198] sm:$0xff]
        %v4640 = vld [vmem:[#allocation3 + $0x1a0] sm:$0xff]
        %v4641 = vld [vmem:[#allocation3 + $0x1a8] sm:$0xff]
        %v4642 = vld [vmem:[#allocation3 + $0x1b0] sm:$0xff]
        %v4643 = vld [vmem:[#allocation3 + $0x1b8] sm:$0xff]
        %v4644 = vld [vmem:[#allocation3 + $0x1c0] sm:$0xff]
        %v4645 = vld [vmem:[#allocation3 + $0x1c8] sm:$0xff]
        %v4646 = vld [vmem:[#allocation3 + $0x1d0] sm:$0xff]
        %v4647 = vld [vmem:[#allocation3 + $0x1d8] sm:$0xff]
        %v4648 = vld [vmem:[#allocation3 + $0x1e0] sm:$0xff]
        %v4649 = vld [vmem:[#allocation3 + $0x1e8] sm:$0xff]
        %v4650 = vld [vmem:[#allocation3 + $0x1f0] sm:$0xff]
        %v4651 = vld [vmem:[#allocation3 + $0x1f8] sm:$0xff]
        %v4652 = vld [vmem:[#allocation3 + $0x200] sm:$0xff]
        %v4653 = vld [vmem:[#allocation3 + $0x208] sm:$0xff]
        %v4654 = vld [vmem:[#allocation3 + $0x210] sm:$0xff]
        %v4655 = vld [vmem:[#allocation3 + $0x218] sm:$0xff]
        %v4656 = vld [vmem:[#allocation3 + $0x220] sm:$0xff]
        %v4657 = vld [vmem:[#allocation3 + $0x228] sm:$0xff]
        %v4658 = vld [vmem:[#allocation3 + $0x230] sm:$0xff]
        %v4659 = vld [vmem:[#allocation3 + $0x238] sm:$0xff]
        %v4660 = vld [vmem:[#allocation3 + $0x240] sm:$0xff]
        %v4661 = vld [vmem:[#allocation3 + $0x248] sm:$0xff]
        %v4662 = vld [vmem:[#allocation3 + $0x250] sm:$0xff]
        %v4663 = vld [vmem:[#allocation3 + $0x258] sm:$0xff]
        %v4664 = vld [vmem:[#allocation3 + $0x260] sm:$0xff]
        %v4665 = vld [vmem:[#allocation3 + $0x268] sm:$0xff]
        %v4666 = vld [vmem:[#allocation3 + $0x270] sm:$0xff]
        %v4667 = vld [vmem:[#allocation3 + $0x278] sm:$0xff]
        %v4668 = vld [vmem:[#allocation3 + $0x280] sm:$0xff]
        %v4669 = vld [vmem:[#allocation3 + $0x288] sm:$0xff]
        %v4670 = vld [vmem:[#allocation3 + $0x290] sm:$0xff]
        %v4671 = vld [vmem:[#allocation3 + $0x298] sm:$0xff]
        %v4672 = vld [vmem:[#allocation3 + $0x2a0] sm:$0xff]
        %v4673 = vld [vmem:[#allocation3 + $0x2a8] sm:$0xff]
        %v4674 = vld [vmem:[#allocation3 + $0x2b0] sm:$0xff]
        %v4675 = vld [vmem:[#allocation3 + $0x2b8] sm:$0xff]
        %v4676 = vld [vmem:[#allocation3 + $0x2c0] sm:$0xff]
        %v4677 = vld [vmem:[#allocation3 + $0x2c8] sm:$0xff]
        %v4678 = vld [vmem:[#allocation3 + $0x2d0] sm:$0xff]
        %v4679 = vld [vmem:[#allocation3 + $0x2d8] sm:$0xff]
        %v4680 = vld [vmem:[#allocation3 + $0x2e0] sm:$0xff]
        %v4681 = vld [vmem:[#allocation3 + $0x2e8] sm:$0xff]
        %v4682 = vld [vmem:[#allocation3 + $0x2f0] sm:$0xff]
        %v4683 = vld [vmem:[#allocation3 + $0x2f8] sm:$0xff]
        %v4684 = vld [vmem:[#allocation3 + $0x300] sm:$0xff]
        %v4685 = vld [vmem:[#allocation3 + $0x308] sm:$0xff]
        %v4686 = vld [vmem:[#allocation3 + $0x310] sm:$0xff]
        %v4687 = vld [vmem:[#allocation3 + $0x318] sm:$0xff]
        %v4688 = vld [vmem:[#allocation3 + $0x320] sm:$0xff]
        %v4689 = vld [vmem:[#allocation3 + $0x328] sm:$0xff]
        %v4690 = vld [vmem:[#allocation3 + $0x330] sm:$0xff]
        %v4691 = vld [vmem:[#allocation3 + $0x338] sm:$0xff]
        %v4692 = vld [vmem:[#allocation3 + $0x340] sm:$0xff]
        %v4693 = vld [vmem:[#allocation3 + $0x348] sm:$0xff]
        %v4694 = vld [vmem:[#allocation3 + $0x350] sm:$0xff]
        %v4695 = vld [vmem:[#allocation3 + $0x358] sm:$0xff]
        %v4696 = vld [vmem:[#allocation3 + $0x360] sm:$0xff]
        %v4697 = vld [vmem:[#allocation3 + $0x368] sm:$0xff]
        %v4698 = vld [vmem:[#allocation3 + $0x370] sm:$0xff]
        %v4699 = vld [vmem:[#allocation3 + $0x378] sm:$0xff]
        %v4700 = vld [vmem:[#allocation3 + $0x380] sm:$0xff]
        %v4701 = vld [vmem:[#allocation3 + $0x388] sm:$0xff]
        %v4702 = vld [vmem:[#allocation3 + $0x390] sm:$0xff]
        %v4703 = vld [vmem:[#allocation3 + $0x398] sm:$0xff]
        %v4704 = vld [vmem:[#allocation3 + $0x3a0] sm:$0xff]
        %v4705 = vld [vmem:[#allocation3 + $0x3a8] sm:$0xff]
        %v4706 = vld [vmem:[#allocation3 + $0x3b0] sm:$0xff]
        %v4707 = vld [vmem:[#allocation3 + $0x3b8] sm:$0xff]
        %v4708 = vld [vmem:[#allocation3 + $0x3c0] sm:$0xff]
        %v4709 = vld [vmem:[#allocation3 + $0x3c8] sm:$0xff]
        %v4710 = vld [vmem:[#allocation3 + $0x3d0] sm:$0xff]
        %v4711 = vld [vmem:[#allocation3 + $0x3d8] sm:$0xff]
        %v4712 = vld [vmem:[#allocation3 + $0x3e0] sm:$0xff]
        %v4713 = vld [vmem:[#allocation3 + $0x3e8] sm:$0xff]
        %v4714 = vld [vmem:[#allocation3 + $0x3f0] sm:$0xff]
        %v4715 = vld [vmem:[#allocation3 + $0x3f8] sm:$0xff]
        %v4716 = vld [vmem:[#allocation3 + $0x400] sm:$0xff]
        %v4717 = vld [vmem:[#allocation3 + $0x408] sm:$0xff]
        %v4718 = vld [vmem:[#allocation3 + $0x410] sm:$0xff]
        %v4719 = vld [vmem:[#allocation3 + $0x418] sm:$0xff]
        %v4720 = vld [vmem:[#allocation3 + $0x420] sm:$0xff]
        %v4721 = vld [vmem:[#allocation3 + $0x428] sm:$0xff]
        %v4722 = vld [vmem:[#allocation3 + $0x430] sm:$0xff]
        %v4723 = vld [vmem:[#allocation3 + $0x438] sm:$0xff]
        %v4724 = vld [vmem:[#allocation3 + $0x440] sm:$0xff]
        %v4725 = vld [vmem:[#allocation3 + $0x448] sm:$0xff]
        %v4726 = vld [vmem:[#allocation3 + $0x450] sm:$0xff]
        %v4727 = vld [vmem:[#allocation3 + $0x458] sm:$0xff]
        %v4728 = vld [vmem:[#allocation3 + $0x460] sm:$0xff]
        %v4729 = vld [vmem:[#allocation3 + $0x468] sm:$0xff]
        %v4730 = vld [vmem:[#allocation3 + $0x470] sm:$0xff]
        %v4731 = vld [vmem:[#allocation3 + $0x478] sm:$0xff]
        %v4732 = vld [vmem:[%s9] sm:$0xf]
        %4734 = vset.pattern.permute.xlu0 0
        %4735 = vperm.xlu0 %4734, %v4732
        %v4736 = vpop.permute.xlu0 %4735
        %v4739 = vcombine.high %v4587, %v4587
        %v4740 = vsel %vm3116, %v4739, 0
        %4742 = vmatprep.subr.mxu0 %v4589
        %4743 = vmatpush1.msra.mxu0 %v4588
        %4744 = vmatprep.subr.mxu0 %v4597
        %4745 = vmatpush1.msra.mxu0 %v4596
        %4746 = vmatprep.subr.mxu0 %v4605
        %4747 = vmatpush1.msra.mxu0 %v4604
        %4748 = vmatprep.subr.mxu0 %v4613
        %4749 = vmatpush1.msra.mxu0 %v4612
        %4750 = vmatprep.subr.mxu0 %v4621
        %4751 = vmatpush1.msra.mxu0 %v4620
        %4752 = vmatprep.subr.mxu0 %v4629
        %4753 = vmatpush1.msra.mxu0 %v4628
        %4754 = vmatprep.subr.mxu0 %v4637
        %4755 = vmatpush1.msra.mxu0 %v4636
        %4756 = vmatprep.subr.mxu0 %v4645
        %4757 = vmatpush1.msra.mxu0 %v4644
        %4758 = vmatprep.subr.mxu0 %v4653
        %4759 = vmatpush1.msra.mxu0 %v4652
        %4760 = vmatprep.subr.mxu0 %v4661
        %4761 = vmatpush1.msra.mxu0 %v4660
        %4762 = vmatprep.subr.mxu0 %v4669
        %4763 = vmatpush1.msra.mxu0 %v4668
        %4764 = vmatprep.subr.mxu0 %v4677
        %4765 = vmatpush1.msra.mxu0 %v4676
        %4766 = vmatprep.subr.mxu0 %v4685
        %4767 = vmatpush1.msra.mxu0 %v4684
        %4768 = vmatprep.subr.mxu0 %v4693
        %4769 = vmatpush1.msra.mxu0 %v4692
        %4770 = vmatprep.subr.mxu0 %v4701
        %4771 = vmatpush1.msra.mxu0 %v4700
        %4772 = vmatprep.subr.mxu0 %v4709
        %4773 = vmatpush1.msra.mxu0 %v4708
        %4774 = vmatprep.subr.mxu0 %v4717
        %4775 = vmatpush1.msra.mxu0 %v4716
        %4776 = vmatprep.subr.mxu0 %v4725
        %4777 = vmatpush1.msra.mxu0 %v4724
        %4778 = vmatprep.subr.mxu0 0.0
        %4779 = vmatpush1.msra.mxu0 0.0
        %4780 = vmatprep.subr.mxu0 0.0
        %4781 = vmatpush1.msra.mxu0 0.0
        %4782 = vmatprep.subr.mxu0 0.0
        %4783 = vmatpush1.msra.mxu0 0.0
        %4784 = vmatprep.subr.mxu0 0.0
        %4785 = vmatpush1.msra.mxu0 0.0
        %4786 = vmatprep.subr.mxu0 0.0
        %4787 = vmatpush1.msra.mxu0 0.0
        %4788 = vmatprep.subr.mxu0 0.0
        %4789 = vmatpush1.msra.mxu0 0.0
        %4790 = vmatprep.subr.mxu0 0.0
        %4791 = vmatpush1.msra.mxu0 0.0
        %4792 = vmatprep.subr.mxu0 0.0
        %4793 = vmatpush1.msra.mxu0 0.0
        %4794 = vmatprep.subr.mxu0 0.0
        %4795 = vmatpush1.msra.mxu0 0.0
        %4796 = vmatprep.subr.mxu0 0.0
        %4797 = vmatpush1.msra.mxu0 0.0
        %4798 = vmatprep.subr.mxu0 0.0
        %4799 = vmatpush1.msra.mxu0 0.0
        %4800 = vmatprep.subr.mxu0 0.0
        %4801 = vmatpush1.msra.mxu0 0.0
        %4802 = vmatprep.subr.mxu0 0.0
        %4803 = vmatpush1.msra.mxu0 0.0
        %4804 = vmatprep.subr.mxu0 0.0
        %4805 = vmatpush1.msra.mxu0 0.0
        %4806 = vmatprep.mubr.f32.mxu0 %v4740
        %4807 = vmatmul.mubr.f32.gmra.mrb[0].mxu0 %v4587
        %v4808 = vpop.f32.mrb[0].mxu0
        %v4809 = vadd.f32 %v4736, %v4808
        %v4810 = vpop.f32.mrb[0].mxu0
        %v4811 = vadd.f32 %v4736, %v4810
        %4812 = vdwg.mxu0
        %4813 = vmatprep.subr.mxu0 %v4591
        %4814 = vmatpush1.msra.mxu0 %v4590
        %4815 = vmatprep.subr.mxu0 %v4599
        %4816 = vmatpush1.msra.mxu0 %v4598
        %4817 = vmatprep.subr.mxu0 %v4607
        %4818 = vmatpush1.msra.mxu0 %v4606
        %4819 = vmatprep.subr.mxu0 %v4615
        %4820 = vmatpush1.msra.mxu0 %v4614
        %4821 = vmatprep.subr.mxu0 %v4623
        %4822 = vmatpush1.msra.mxu0 %v4622
        %4823 = vmatprep.subr.mxu0 %v4631
        %4824 = vmatpush1.msra.mxu0 %v4630
        %4825 = vmatprep.subr.mxu0 %v4639
        %4826 = vmatpush1.msra.mxu0 %v4638
        %4827 = vmatprep.subr.mxu0 %v4647
        %4828 = vmatpush1.msra.mxu0 %v4646
        %4829 = vmatprep.subr.mxu0 %v4655
        %4830 = vmatpush1.msra.mxu0 %v4654
        %4831 = vmatprep.subr.mxu0 %v4663
        %4832 = vmatpush1.msra.mxu0 %v4662
        %4833 = vmatprep.subr.mxu0 %v4671
        %4834 = vmatpush1.msra.mxu0 %v4670
        %4835 = vmatprep.subr.mxu0 %v4679
        %4836 = vmatpush1.msra.mxu0 %v4678
        %4837 = vmatprep.subr.mxu0 %v4687
        %4838 = vmatpush1.msra.mxu0 %v4686
        %4839 = vmatprep.subr.mxu0 %v4695
        %4840 = vmatpush1.msra.mxu0 %v4694
        %4841 = vmatprep.subr.mxu0 %v4703
        %4842 = vmatpush1.msra.mxu0 %v4702
        %4843 = vmatprep.subr.mxu0 %v4711
        %4844 = vmatpush1.msra.mxu0 %v4710
        %4845 = vmatprep.subr.mxu0 %v4719
        %4846 = vmatpush1.msra.mxu0 %v4718
        %4847 = vmatprep.subr.mxu0 %v4727
        %4848 = vmatpush1.msra.mxu0 %v4726
        %4849 = vmatprep.subr.mxu0 0.0
        %4850 = vmatpush1.msra.mxu0 0.0
        %4851 = vmatprep.subr.mxu0 0.0
        %4852 = vmatpush1.msra.mxu0 0.0
        %4853 = vmatprep.subr.mxu0 0.0
        %4854 = vmatpush1.msra.mxu0 0.0
        %4855 = vmatprep.subr.mxu0 0.0
        %4856 = vmatpush1.msra.mxu0 0.0
        %4857 = vmatprep.subr.mxu0 0.0
        %4858 = vmatpush1.msra.mxu0 0.0
        %4859 = vmatprep.subr.mxu0 0.0
        %4860 = vmatpush1.msra.mxu0 0.0
        %4861 = vmatprep.subr.mxu0 0.0
        %4862 = vmatpush1.msra.mxu0 0.0
        %4863 = vmatprep.subr.mxu0 0.0
        %4864 = vmatpush1.msra.mxu0 0.0
        %4865 = vmatprep.subr.mxu0 0.0
        %4866 = vmatpush1.msra.mxu0 0.0
        %4867 = vmatprep.subr.mxu0 0.0
        %4868 = vmatpush1.msra.mxu0 0.0
        %4869 = vmatprep.subr.mxu0 0.0
        %4870 = vmatpush1.msra.mxu0 0.0
        %4871 = vmatprep.subr.mxu0 0.0
        %4872 = vmatpush1.msra.mxu0 0.0
        %4873 = vmatprep.subr.mxu0 0.0
        %4874 = vmatpush1.msra.mxu0 0.0
        %4875 = vmatprep.subr.mxu0 0.0
        %4876 = vmatpush1.msra.mxu0 0.0
        %4877 = vmatprep.mubr.f32.mxu0 %v4740
        %4878 = vmatmul.mubr.f32.gmra.mrb[0].mxu0 %v4587
        %v4879 = vpop.f32.mrb[0].mxu0
        %v4880 = vadd.f32 %v4736, %v4879
        %v4881 = vpop.f32.mrb[0].mxu0
        %v4882 = vadd.f32 %v4736, %v4881
        %4883 = vdwg.mxu0
        %4884 = vmatprep.subr.mxu0 %v4593
        %4885 = vmatpush1.msra.mxu0 %v4592
        %4886 = vmatprep.subr.mxu0 %v4601
        %4887 = vmatpush1.msra.mxu0 %v4600
        %4888 = vmatprep.subr.mxu0 %v4609
        %4889 = vmatpush1.msra.mxu0 %v4608
        %4890 = vmatprep.subr.mxu0 %v4617
        %4891 = vmatpush1.msra.mxu0 %v4616
        %4892 = vmatprep.subr.mxu0 %v4625
        %4893 = vmatpush1.msra.mxu0 %v4624
        %4894 = vmatprep.subr.mxu0 %v4633
        %4895 = vmatpush1.msra.mxu0 %v4632
        %4896 = vmatprep.subr.mxu0 %v4641
        %4897 = vmatpush1.msra.mxu0 %v4640
        %4898 = vmatprep.subr.mxu0 %v4649
        %4899 = vmatpush1.msra.mxu0 %v4648
        %4900 = vmatprep.subr.mxu0 %v4657
        %4901 = vmatpush1.msra.mxu0 %v4656
        %4902 = vmatprep.subr.mxu0 %v4665
        %4903 = vmatpush1.msra.mxu0 %v4664
        %4904 = vmatprep.subr.mxu0 %v4673
        %4905 = vmatpush1.msra.mxu0 %v4672
        %4906 = vmatprep.subr.mxu0 %v4681
        %4907 = vmatpush1.msra.mxu0 %v4680
        %4908 = vmatprep.subr.mxu0 %v4689
        %4909 = vmatpush1.msra.mxu0 %v4688
        %4910 = vmatprep.subr.mxu0 %v4697
        %4911 = vmatpush1.msra.mxu0 %v4696
        %4912 = vmatprep.subr.mxu0 %v4705
        %4913 = vmatpush1.msra.mxu0 %v4704
        %4914 = vmatprep.subr.mxu0 %v4713
        %4915 = vmatpush1.msra.mxu0 %v4712
        %4916 = vmatprep.subr.mxu0 %v4721
        %4917 = vmatpush1.msra.mxu0 %v4720
        %4918 = vmatprep.subr.mxu0 %v4729
        %4919 = vmatpush1.msra.mxu0 %v4728
        %4920 = vmatprep.subr.mxu0 0.0
        %4921 = vmatpush1.msra.mxu0 0.0
        %4922 = vmatprep.subr.mxu0 0.0
        %4923 = vmatpush1.msra.mxu0 0.0
        %4924 = vmatprep.subr.mxu0 0.0
        %4925 = vmatpush1.msra.mxu0 0.0
        %4926 = vmatprep.subr.mxu0 0.0
        %4927 = vmatpush1.msra.mxu0 0.0
        %4928 = vmatprep.subr.mxu0 0.0
        %4929 = vmatpush1.msra.mxu0 0.0
        %4930 = vmatprep.subr.mxu0 0.0
        %4931 = vmatpush1.msra.mxu0 0.0
        %4932 = vmatprep.subr.mxu0 0.0
        %4933 = vmatpush1.msra.mxu0 0.0
        %4934 = vmatprep.subr.mxu0 0.0
        %4935 = vmatpush1.msra.mxu0 0.0
        %4936 = vmatprep.subr.mxu0 0.0
        %4937 = vmatpush1.msra.mxu0 0.0
        %4938 = vmatprep.subr.mxu0 0.0
        %4939 = vmatpush1.msra.mxu0 0.0
        %4940 = vmatprep.subr.mxu0 0.0
        %4941 = vmatpush1.msra.mxu0 0.0
        %4942 = vmatprep.subr.mxu0 0.0
        %4943 = vmatpush1.msra.mxu0 0.0
        %4944 = vmatprep.subr.mxu0 0.0
        %4945 = vmatpush1.msra.mxu0 0.0
        %4946 = vmatprep.subr.mxu0 0.0
        %4947 = vmatpush1.msra.mxu0 0.0
        %4948 = vmatprep.mubr.f32.mxu0 %v4740
        %4949 = vmatmul.mubr.f32.gmra.mrb[0].mxu0 %v4587
        %v4950 = vpop.f32.mrb[0].mxu0
        %v4951 = vadd.f32 %v4736, %v4950
        %v4952 = vpop.f32.mrb[0].mxu0
        %v4953 = vadd.f32 %v4736, %v4952
        %4954 = vdwg.mxu0
        %4955 = vmatprep.subr.mxu0 %v4595
        %4956 = vmatpush1.msra.mxu0 %v4594
        %4957 = vmatprep.subr.mxu0 %v4603
        %4958 = vmatpush1.msra.mxu0 %v4602
        %4959 = vmatprep.subr.mxu0 %v4611
        %4960 = vmatpush1.msra.mxu0 %v4610
        %4961 = vmatprep.subr.mxu0 %v4619
        %4962 = vmatpush1.msra.mxu0 %v4618
        %4963 = vmatprep.subr.mxu0 %v4627
        %4964 = vmatpush1.msra.mxu0 %v4626
        %4965 = vmatprep.subr.mxu0 %v4635
        %4966 = vmatpush1.msra.mxu0 %v4634
        %4967 = vmatprep.subr.mxu0 %v4643
        %4968 = vmatpush1.msra.mxu0 %v4642
        %4969 = vmatprep.subr.mxu0 %v4651
        %4970 = vmatpush1.msra.mxu0 %v4650
        %4971 = vmatprep.subr.mxu0 %v4659
        %4972 = vmatpush1.msra.mxu0 %v4658
        %4973 = vmatprep.subr.mxu0 %v4667
        %4974 = vmatpush1.msra.mxu0 %v4666
        %4975 = vmatprep.subr.mxu0 %v4675
        %4976 = vmatpush1.msra.mxu0 %v4674
        %4977 = vmatprep.subr.mxu0 %v4683
        %4978 = vmatpush1.msra.mxu0 %v4682
        %4979 = vmatprep.subr.mxu0 %v4691
        %4980 = vmatpush1.msra.mxu0 %v4690
        %4981 = vmatprep.subr.mxu0 %v4699
        %4982 = vmatpush1.msra.mxu0 %v4698
        %4983 = vmatprep.subr.mxu0 %v4707
        %4984 = vmatpush1.msra.mxu0 %v4706
        %4985 = vmatprep.subr.mxu0 %v4715
        %4986 = vmatpush1.msra.mxu0 %v4714
        %4987 = vmatprep.subr.mxu0 %v4723
        %4988 = vmatpush1.msra.mxu0 %v4722
        %4989 = vmatprep.subr.mxu0 %v4731
        %4990 = vmatpush1.msra.mxu0 %v4730
        %4991 = vmatprep.subr.mxu0 0.0
        %4992 = vmatpush1.msra.mxu0 0.0
        %4993 = vmatprep.subr.mxu0 0.0
        %4994 = vmatpush1.msra.mxu0 0.0
        %4995 = vmatprep.subr.mxu0 0.0
        %4996 = vmatpush1.msra.mxu0 0.0
        %4997 = vmatprep.subr.mxu0 0.0
        %4998 = vmatpush1.msra.mxu0 0.0
        %4999 = vmatprep.subr.mxu0 0.0
        %5000 = vmatpush1.msra.mxu0 0.0
        %5001 = vmatprep.subr.mxu0 0.0
        %5002 = vmatpush1.msra.mxu0 0.0
        %5003 = vmatprep.subr.mxu0 0.0
        %5004 = vmatpush1.msra.mxu0 0.0
        %5005 = vmatprep.subr.mxu0 0.0
        %5006 = vmatpush1.msra.mxu0 0.0
        %5007 = vmatprep.subr.mxu0 0.0
        %5008 = vmatpush1.msra.mxu0 0.0
        %5009 = vmatprep.subr.mxu0 0.0
        %5010 = vmatpush1.msra.mxu0 0.0
        %5011 = vmatprep.subr.mxu0 0.0
        %5012 = vmatpush1.msra.mxu0 0.0
        %5013 = vmatprep.subr.mxu0 0.0
        %5014 = vmatpush1.msra.mxu0 0.0
        %5015 = vmatprep.subr.mxu0 0.0
        %5016 = vmatpush1.msra.mxu0 0.0
        %5017 = vmatprep.subr.mxu0 0.0
        %5018 = vmatpush1.msra.mxu0 0.0
        %5019 = vmatprep.mubr.f32.mxu0 %v4740
        %5020 = vmatmul.mubr.f32.gmra.mrb[0].mxu0 %v4587
        %v5021 = vpop.f32.mrb[0].mxu0
        %v5022 = vadd.f32 %v4736, %v5021
        %v5023 = vpop.f32.mrb[0].mxu0
        %v5024 = vadd.f32 %v4736, %v5023
        %5025 = vdwg.mxu0
        %vm5026 = vcmp.ge.f32.partialorder %v4809, 0.0
        %vm5027 = vcmp.ge.f32.partialorder %v4811, 0.0
        %vm5028 = vcmp.ge.f32.partialorder %v4880, 0.0
        %vm5029 = vcmp.ge.f32.partialorder %v4882, 0.0
        %vm5030 = vcmp.ge.f32.partialorder %v4951, 0.0
        %vm5031 = vcmp.ge.f32.partialorder %v4953, 0.0
        %vm5032 = vcmp.ge.f32.partialorder %v5022, 0.0
        %vm5033 = vcmp.ge.f32.partialorder %v5024, 0.0
        %v5034 = vmul.f32 %v4809, 0.1
        %v5035 = vmul.f32 %v4811, 0.1
        %v5036 = vmul.f32 %v4880, 0.1
        %v5037 = vmul.f32 %v4882, 0.1
        %v5038 = vmul.f32 %v4951, 0.1
        %v5039 = vmul.f32 %v4953, 0.1
        %v5040 = vmul.f32 %v5022, 0.1
        %v5041 = vmul.f32 %v5024, 0.1
        %v5042 = vsel %vm5026, %v4809, %v5034
        %v5043 = vsel %vm5027, %v4811, %v5035
        %v5044 = vsel %vm5028, %v4880, %v5036
        %v5045 = vsel %vm5029, %v4882, %v5037
        %v5046 = vsel %vm5030, %v4951, %v5038
        %v5047 = vsel %vm5031, %v4953, %v5039
        %v5048 = vsel %vm5032, %v5022, %v5040
        %v5049 = vsel %vm5033, %v5024, %v5041
        %v5058 = vcombine.low %v5042, %v5043
        %v5059 = vcombine.low %v5044, %v5045
        %v5060 = vcombine.low %v5046, %v5047
        %v5061 = vcombine.low %v5048, %v5049
        %5066 = vst [vmem:[%s442] sm:$0xff] %v5058
        %5067 = vst [vmem:[%s442 + $0x8] sm:$0xff] %v5059
        %5068 = vst [vmem:[%s442 + $0x10] sm:$0xff] %v5060
        %5069 = vst [vmem:[%s442 + $0x18] sm:$0xff] %v5061
        %s5070 = sand.u32 %s259, 1
        %s5071 = scalar_lea.sflag [#allocation6], %s5070
        %s5072 = sand.u32 %s259, 1
        %s5073 = smul.addr %s5072, 32
        %s5074 = scalar_lea.vmem [#allocation12], %s5073
        // Predicated region
        $region77: #{tpu_custom_call.1} parent=59 // pred_check
          %p5075 = pneg %p269
        $region78: #{tpu_custom_call.1} parent=59 // pred_check_branch
          %5077 = sbr.rel (%p5075) target = $region80
        $region79: #{tpu_custom_call.1} parent=59 // pred_region
          %s5079 = ssub.s32 512, 512
          %5080 = vsyncadd %s5071, %s5079
          %s5081 = smul.addr %s31, 8
          %s5082 = smul.addr %s5081, 64
          %s5083 = scalar_lea.hbm %s10, %s5082
          %s5085 = sshll.u32 %s5074, 4
          %s5086 = int_to_ptr.vmem [resolvable:$true] %s5085
          %5088 = dma.vmem_to_hbm [thread:$0]  %s5086, 512, %s5083, %s5071
        $region80: #{tpu_custom_call.1} parent=59 // pred_fallthru
          _
      $region60: #{tpu_custom_call.1} parent=5 // pred_fallthru
        _
      %p5089 = scmp.le.s32.totalorder 2, %s26
      // Predicated region
      $region81: #{tpu_custom_call.1} parent=5 // pred_check
        %p5090 = pneg %p5089
      $region82: #{tpu_custom_call.1} parent=5 // pred_check_branch
        %5092 = sbr.rel (%p5090) target = $region84
      $region83: #{tpu_custom_call.1} parent=5 // pred_region
        %s5093 = ssub.s32 %s26, 2
        // Predicated region
        $region85: #{tpu_custom_call.1} parent=83 // pred_check
          %p5094 = pneg %p275
        $region86: #{tpu_custom_call.1} parent=83 // pred_check_branch
          %5096 = sbr.rel (%p5094) target = $region88
        $region87: #{tpu_custom_call.1} parent=83 // pred_region
          %s5097 = sand.u32 %s260, 1
          %s5098 = scalar_lea.sflag [#allocation6], %s5097
          %s5099 = sand.u32 %s260, 1
          %s5100 = smul.addr %s5099, 32
          %s5101 = scalar_lea.vmem [#allocation12], %s5100
          %5102 = dma.done %s5098, 512
        $region88: #{tpu_custom_call.1} parent=83 // pred_fallthru
          _
      $region84: #{tpu_custom_call.1} parent=5 // pred_fallthru
        _
    $region6: #{tpu_custom_call.1} parent=1 // loop_footer
      %s30 = sadd.s32 1, %s26
    $region7: #{tpu_custom_call.1} parent=1 // loop_footer_branch
      %25 = sbr.rel target = $region3
    $region8: #{tpu_custom_call.1} parent=1 // loop_exit
      _
    %5103 = vsyncpa [#allocation5], 1
    %s5104 = scalar_lea.sflag [#allocation5], 1
    %5105 = vsyncpa %s5104, 1
    %5106 = vsyncpa [#allocation8], 1
    %s5107 = scalar_lea.sflag [#allocation8], 1
    %5108 = vsyncpa %s5107, 1
    %5109 = vsyncpa [#allocation11], 1
    %5110 = vsyncpa [#allocation6], 1
    %s5111 = scalar_lea.sflag [#allocation6], 1
    %5112 = vsyncpa %s5111, 1

</llo_original>
